<compile_context>
chip_gen: v6e
topology: v6e:2x2x1
jax: 0.10.0
libtpu: 0.0.40
codegen_flags: <defaults>
</compile_context>

<pallas_src>
import jax
import jax.numpy as jnp
import numpy as np
from jax.experimental import pallas as pl
from jax.experimental.pallas import tpu as pltpu
from functools import partial


def _window_attn_kernel(x_ref, wq_ref, wk_ref, wv_ref, wproj_ref, bproj_ref, o_ref,
                        *, num_heads, seq_len, dense_io):
    # x_ref:   (WT, N*C) if dense_io else (WT, N, C)
    # wq/wk/wv: (C, C)  pre-transposed; softmax scale folded into wq
    # wproj:   (C, C)   pre-transposed
    # bproj:   (1, C)   f32
    # o_ref:   (WT, N*C) if dense_io else (WT, N, C)
    N = seq_len
    WT = x_ref.shape[0]
    C = (x_ref.shape[1] // N) if dense_io else x_ref.shape[2]
    hd = C // num_heads
    cdtype = x_ref.dtype                       # MXU operand dtype (f32 or bf16)

    # (WT, N*C) -> (WT*N, C): lane relayout for dense_io, trivial collapse otherwise.
    x2 = x_ref[...].reshape(WT * N, C)

    # QKV projections: three lane-aligned (C, C) matmuls, f32 accumulation.
    q = jnp.dot(x2, wq_ref[...], preferred_element_type=jnp.float32).astype(cdtype)
    k = jnp.dot(x2, wk_ref[...], preferred_element_type=jnp.float32).astype(cdtype)
    v = jnp.dot(x2, wv_ref[...], preferred_element_type=jnp.float32).astype(cdtype)

    if num_heads == 1:
        qh = q.reshape(WT, N, C)
        kh = k.reshape(WT, N, C)
        vh = v.reshape(WT, N, C)
        s = jnp.einsum('bqd,bkd->bqk', qh, kh, preferred_element_type=jnp.float32)
        m = jnp.max(s, axis=-1, keepdims=True)
        p = jnp.exp(s - m)
        l = jnp.sum(p, axis=-1, keepdims=True)
        ctx = jnp.einsum('bqk,bkd->bqd', p.astype(cdtype), vh,
                         preferred_element_type=jnp.float32)          # (WT, N, C)
    else:
        # Head views are pure leading/trailing reshapes (no transposes); the
        # PV einsum output is token-major x head-major, so the collapse back to
        # (WT*N, C) below is contiguous.
        qh = q.reshape(WT, N, num_heads, hd)
        kh = k.reshape(WT, N, num_heads, hd)
        vh = v.reshape(WT, N, num_heads, hd)
        s = jnp.einsum('wqhd,wkhd->whqk', qh, kh, preferred_element_type=jnp.float32)
        m = jnp.max(s, axis=-1, keepdims=True)
        p = jnp.exp(s - m)
        l = jnp.sum(p, axis=-1, keepdims=True)                        # (WT, h, N, 1)
        ctx = jnp.einsum('whqk,wkhd->wqhd', p.astype(cdtype), vh,
                         preferred_element_type=jnp.float32)          # (WT, N, h, hd)

    # Softmax normalization after the PV matmul (N*hd values instead of N*N).
    # approx reciprocal runs on the EUP slot; one Newton step restores f32 accuracy.
    inv_l = pl.reciprocal(l, approx=True)
    inv_l = inv_l * (2.0 - l * inv_l)
    if num_heads == 1:
        ctx = ctx * inv_l
    else:
        ctx = ctx * jnp.transpose(inv_l, (0, 2, 1, 3))                # tiny (WT,h,N,1) relayout

    attn_out = ctx.reshape(WT * N, C).astype(cdtype)

    # Output projection: attn_out @ Wproj_t + b  (bias kept in f32).
    y = jnp.dot(attn_out, wproj_ref[...], preferred_element_type=jnp.float32)
    y = y + bproj_ref[...]

    if dense_io:
        o_ref[...] = y.reshape(WT, N * C).astype(o_ref.dtype)         # unmasked, lane-dense store
    else:
        o_ref[...] = y.reshape(WT, N, C).astype(o_ref.dtype)


def _pick_w_tile(nW, per_window_bytes, vmem_budget_bytes, target=64):
    """Largest window tile that fits the VMEM budget, keeps blocks sublane-aligned
    (multiple of 8), prefers divisors of nW (no padded garbage windows) and keeps
    >= 2 grid steps when possible (so both v7x TensorCores get work)."""
    cap = max(1, min(target, int(vmem_budget_bytes) // max(int(per_window_bytes), 1)))
    if nW <= 8:
        return nW                                   # single small block (= full leading dim)
    cap = min(cap, nW // 2)                         # >= 2 grid steps
    cap = max(8, (cap // 8) * 8)                    # sublane-aligned
    for t in range(cap, 7, -8):
        if nW % t == 0:
            return t
    return cap


def window_attention(x, wqkv, wproj, bproj, *, window_size=4, num_heads=1,
                     compute_dtype=None, w_tile_target=64):
    """x: (B, C, D, H, W) -> (B, C, D, H, W); matches PyTorch WindowAttention.forward.
    compute_dtype=jnp.bfloat16 selects the bf16 MXU path (softmax math stays f32)."""
    B, C, D, H, W = x.shape
    ws = window_size
    N = ws ** 3
    nh = num_heads
    hd = C // nh
    scale = float(hd) ** (-0.5)
    if compute_dtype is None:
        compute_dtype = x.dtype

    # --- window partition (host glue, plain JAX) ---------------------------
    # TODO(synk): fuse the partition/reverse permutes into the pallas_call (grid over
    # (B, D//ws) with (1, C, ws, H, W) blocks) to drop two full-array HBM round trips.
    xw = x.reshape(B, C, D // ws, ws, H // ws, ws, W // ws, ws)
    xw = jnp.transpose(xw, (0, 2, 4, 6, 3, 5, 7, 1)).reshape(-1, N, C)   # (nW, N, C)
    nW = xw.shape[0]
    xw = xw.astype(compute_dtype)

    # --- host weight prep: split qkv, transpose, fold softmax scale into Q ---
    wq = (wqkv[0 * C:1 * C] * scale).T.astype(compute_dtype)   # (C, C)
    wk = wqkv[1 * C:2 * C].T.astype(compute_dtype)              # (C, C)
    wv = wqkv[2 * C:3 * C].T.astype(compute_dtype)              # (C, C)
    wp = wproj.T.astype(compute_dtype)                          # (C, C)
    bp = bproj.reshape(1, C).astype(jnp.float32)                # (1, C)

    # --- VMEM-aware window tile & padding -----------------------------------
    io_item = np.dtype(compute_dtype).itemsize
    per_window_bytes = N * C * io_item * 4 + N * 4 * (10 * C + 2 * nh * N)
    try:
        vmem_cap = int(pltpu.get_tpu_info().vmem_capacity_bytes)
    except Exception:
        vmem_cap = 64 * 1024 * 1024          # assume smallest per-core VMEM (v7x)
    w_tile = _pick_w_tile(nW, per_window_bytes, vmem_cap // 3, target=w_tile_target)
    grid_steps = pl.cdiv(nW, w_tile)
    nW_pad = grid_steps * w_tile
    if nW_pad != nW:
        xw = jnp.pad(xw, ((0, nW_pad - nW), (0, 0), (0, 0)))

    weights_bytes = 4 * C * C * io_item + C * 4
    working = w_tile * per_window_bytes + 2 * weights_bytes + (2 << 20)
    vmem_limit = int(min(max(32 * 1024 * 1024, 2 * working), vmem_cap - (4 << 20)))

    # advisory cost estimate (helps XLA schedule the glue around the kernel)
    flops = int(nW) * (8 * N * C * C + 4 * N * N * C)
    transcendentals = int(nW) * nh * N * N
    bytes_accessed = 2 * int(nW) * N * C * io_item + weights_bytes
    cost = pl.CostEstimate(flops=flops, transcendentals=transcendentals,
                           bytes_accessed=bytes_accessed)

    # Constant-index weight blocks: single-buffer when C is big enough to matter
    # (saves ~half the weight VMEM on v7x); at tiny C the default is fine.
    weight_kw = {"pipeline_mode": pl.Buffered(1)} if C >= 256 else {}

    def _call(dense_io):
        if dense_io:
            x_in = xw.reshape(nW_pad, N * C)
            x_spec = pl.BlockSpec((w_tile, N * C), lambda i: (i, 0))
            o_spec = pl.BlockSpec((w_tile, N * C), lambda i: (i, 0))
            out_shape = jax.ShapeDtypeStruct((nW_pad, N * C), x.dtype)
        else:
            x_in = xw
            x_spec = pl.BlockSpec((w_tile, N, C), lambda i: (i, 0, 0))
            o_spec = pl.BlockSpec((w_tile, N, C), lambda i: (i, 0, 0))
            out_shape = jax.ShapeDtypeStruct((nW_pad, N, C), x.dtype)
        kern = partial(_window_attn_kernel, num_heads=nh, seq_len=N, dense_io=dense_io)
        out = pl.pallas_call(
            kern,
            out_shape=out_shape,
            grid_spec=pltpu.PrefetchScalarGridSpec(
                num_scalar_prefetch=0,
                grid=(grid_steps,),
                in_specs=[
                    x_spec,
                    pl.BlockSpec((C, C), lambda i: (0, 0), **weight_kw),
                    pl.BlockSpec((C, C), lambda i: (0, 0), **weight_kw),
                    pl.BlockSpec((C, C), lambda i: (0, 0), **weight_kw),
                    pl.BlockSpec((C, C), lambda i: (0, 0), **weight_kw),
                    pl.BlockSpec((1, C), lambda i: (0, 0), **weight_kw),
                ],
                out_specs=o_spec,
            ),
            compiler_params=pltpu.CompilerParams(
                dimension_semantics=("parallel",),
                vmem_limit_bytes=vmem_limit),
            cost_estimate=cost,
        )(x_in, wq, wk, wv, wp, bp)
        return out.reshape(nW_pad, N, C)

    if C % 128 == 0:
        # channels already lane-dense; the natural (N, C) layout needs no relayout
        out_windows = _call(dense_io=False)
    else:
        # lane-dense (N*C) slab layout -> unmasked stores; fall back to the
        # natural layout if this Mosaic build cannot lower the in-kernel relayout.
        try:
            out_windows = _call(dense_io=True)
        except Exception:
            out_windows = _call(dense_io=False)

    out_windows = out_windows[:nW]

    # --- window reverse (host glue, plain JAX) ------------------------------
    y = out_windows.reshape(B, D // ws, H // ws, W // ws, ws, ws, ws, C)
    y = jnp.transpose(y, (0, 7, 1, 4, 2, 5, 3, 6)).reshape(B, C, D, H, W)
    return y


def _reference(x, wqkv, wproj, bproj, *, window_size=4, num_heads=1):
    """Pure-JAX reference mirroring the PyTorch forward exactly."""
    B, C, D, H, W = x.shape
    ws = window_size
    N = ws ** 3
    scale = (C // num_heads) ** (-0.5)
    xw = x.reshape(B, C, D // ws, ws, H // ws, ws, W // ws, ws)
    xw = jnp.transpose(xw, (0, 2, 4, 6, 3, 5, 7, 1)).reshape(-1, N, C)
    qkv = (xw @ wqkv.T).reshape(-1, N, 3, num_heads, C // num_heads)
    qkv = jnp.transpose(qkv, (2, 0, 3, 1, 4))
    q, k, v = qkv[0], qkv[1], qkv[2]
    attn = (q @ jnp.swapaxes(k, -2, -1)) * scale
    attn = jax.nn.softmax(attn, axis=-1)
    o = jnp.swapaxes(attn @ v, 1, 2).reshape(-1, N, C)
    o = o @ wproj.T + bproj
    o = o.reshape(B, D // ws, H // ws, W // ws, ws, ws, ws, C)
    o = jnp.transpose(o, (0, 7, 1, 4, 2, 5, 3, 6)).reshape(B, C, D, H, W)
    return o


if __name__ == "__main__":
    key = jax.random.PRNGKey(0)
    k1, k2, k3, k4 = jax.random.split(key, 4)

    B, C, D, H, W = 2, 32, 8, 8, 8
    window_size, num_heads = 4, 1

    x = jax.random.normal(k1, (B, C, D, H, W), dtype=jnp.float32)
    # deterministic synthetic parameters (no checkpoint load)
    wqkv = jax.random.normal(k2, (3 * C, C), dtype=jnp.float32) * 0.05
    wproj = jax.random.normal(k3, (C, C), dtype=jnp.float32) * 0.05
    bproj = jax.random.normal(k4, (C,), dtype=jnp.float32) * 0.05

    ref = _reference(x, wqkv, wproj, bproj,
                     window_size=window_size, num_heads=num_heads)

    # f32 run: matches the PyTorch module's semantics.
    out = window_attention(x, wqkv, wproj, bproj,
                           window_size=window_size, num_heads=num_heads)
    out = jax.block_until_ready(out)
    assert out.shape == (B, C, D, H, W)
    assert jnp.allclose(out, ref, atol=1e-4, rtol=1e-4)

    # bf16-MXU run (halved HBM/VMEM traffic; softmax math stays in f32).
    out_bf16 = window_attention(x, wqkv, wproj, bproj,
                                window_size=window_size, num_heads=num_heads,
                                compute_dtype=jnp.bfloat16)
    out_bf16 = jax.block_until_ready(out_bf16)
    assert jnp.allclose(out_bf16, ref, atol=5e-2, rtol=5e-2)

    print("KERNEL_OK")
</pallas_src>

<mosaic_0001>
module attributes {stable_mosaic.version = 11 : i64} {
  func.func @_window_attn_kernel(%arg0: i32, %arg1: memref<8x2048xf32, #tpu.memory_space<vmem>>, %arg2: memref<32x32xf32, #tpu.memory_space<vmem>>, %arg3: memref<32x32xf32, #tpu.memory_space<vmem>>, %arg4: memref<32x32xf32, #tpu.memory_space<vmem>>, %arg5: memref<32x32xf32, #tpu.memory_space<vmem>>, %arg6: memref<1x32xf32, #tpu.memory_space<vmem>>, %arg7: memref<8x2048xf32, #tpu.memory_space<vmem>>) attributes {dimension_semantics = [#tpu.dimension_semantics<parallel>], iteration_bounds = array<i64: 2>, scalar_prefetch = 0 : i64, scratch_operands = 0 : i64, tpu.core_type = #tpu.core_type<tc>, window_params = [{transform_indices = @transform_0, window_bounds = array<i64: 8, 2048>}, {pipeline_mode = #tpu.pipeline_mode<synchronous>, transform_indices = @transform_1, window_bounds = array<i64: 32, 32>}, {pipeline_mode = #tpu.pipeline_mode<synchronous>, transform_indices = @transform_2, window_bounds = array<i64: 32, 32>}, {pipeline_mode = #tpu.pipeline_mode<synchronous>, transform_indices = @transform_3, window_bounds = array<i64: 32, 32>}, {pipeline_mode = #tpu.pipeline_mode<synchronous>, transform_indices = @transform_4, window_bounds = array<i64: 32, 32>}, {pipeline_mode = #tpu.pipeline_mode<synchronous>, transform_indices = @transform_5, window_bounds = array<i64: 1, 32>}, {transform_indices = @transform_6, window_bounds = array<i64: 8, 2048>}]} {
    %c0 = arith.constant 0 : index
    %c0_0 = arith.constant 0 : index
    %0 = vector.load %arg1[%c0, %c0_0] : memref<8x2048xf32, #tpu.memory_space<vmem>>, vector<8x2048xf32>
    %1 = vector.shape_cast %0 : vector<8x2048xf32> to vector<512x32xf32>
    %c0_1 = arith.constant 0 : index
    %c0_2 = arith.constant 0 : index
    %2 = vector.load %arg2[%c0_1, %c0_2] : memref<32x32xf32, #tpu.memory_space<vmem>>, vector<32x32xf32>
    %cst = arith.constant dense<0.000000e+00> : vector<512x32xf32>
    %3 = tpu.matmul %1, %2, %cst {dimension_numbers = #tpu.dot_dimension_numbers<[1], [0], [0], [1], [0, 0, 1, 1], [], []>} : vector<512x32xf32>, vector<32x32xf32>, vector<512x32xf32> -> vector<512x32xf32>
    %c0_3 = arith.constant 0 : index
    %c0_4 = arith.constant 0 : index
    %4 = vector.load %arg3[%c0_3, %c0_4] : memref<32x32xf32, #tpu.memory_space<vmem>>, vector<32x32xf32>
    %cst_5 = arith.constant dense<0.000000e+00> : vector<512x32xf32>
    %5 = tpu.matmul %1, %4, %cst_5 {dimension_numbers = #tpu.dot_dimension_numbers<[1], [0], [0], [1], [0, 0, 1, 1], [], []>} : vector<512x32xf32>, vector<32x32xf32>, vector<512x32xf32> -> vector<512x32xf32>
    %c0_6 = arith.constant 0 : index
    %c0_7 = arith.constant 0 : index
    %6 = vector.load %arg4[%c0_6, %c0_7] : memref<32x32xf32, #tpu.memory_space<vmem>>, vector<32x32xf32>
    %cst_8 = arith.constant dense<0.000000e+00> : vector<512x32xf32>
    %7 = tpu.matmul %1, %6, %cst_8 {dimension_numbers = #tpu.dot_dimension_numbers<[1], [0], [0], [1], [0, 0, 1, 1], [], []>} : vector<512x32xf32>, vector<32x32xf32>, vector<512x32xf32> -> vector<512x32xf32>
    %8 = vector.shape_cast %3 : vector<512x32xf32> to vector<8x64x32xf32>
    %9 = vector.shape_cast %5 : vector<512x32xf32> to vector<8x64x32xf32>
    %10 = vector.shape_cast %7 : vector<512x32xf32> to vector<8x64x32xf32>
    "tpu.trace_start"() <{level = 10 : i32, message = "bqd,bkd->bqk"}> : () -> ()
    %cst_9 = arith.constant dense<0.000000e+00> : vector<8x64x64xf32>
    %11 = tpu.matmul %8, %9, %cst_9 {dimension_numbers = #tpu.dot_dimension_numbers<[2], [2], [1], [1], [0, 0, 0, 1, 1, 1], [0], [0]>} : vector<8x64x32xf32>, vector<8x64x32xf32>, vector<8x64x64xf32> -> vector<8x64x64xf32>
    "tpu.trace_stop"() : () -> ()
    %cst_10 = arith.constant dense<0xFF800000> : vector<8x64xf32>
    %12 = vector.multi_reduction <maximumf>, %11, %cst_10 [2] : vector<8x64x64xf32> to vector<8x64xf32>
    %13 = vector.shape_cast %12 : vector<8x64xf32> to vector<8x64x1xf32>
    %14 = vector.broadcast %13 : vector<8x64x1xf32> to vector<8x64x64xf32>
    %15 = arith.subf %11, %14 : vector<8x64x64xf32>
    %16 = math.exp %15 : vector<8x64x64xf32>
    %cst_11 = arith.constant dense<0.000000e+00> : vector<8x64xf32>
    %17 = vector.multi_reduction <add>, %16, %cst_11 [2] : vector<8x64x64xf32> to vector<8x64xf32>
    %18 = vector.shape_cast %17 : vector<8x64xf32> to vector<8x64x1xf32>
    "tpu.trace_start"() <{level = 10 : i32, message = "bqk,bkd->bqd"}> : () -> ()
    %cst_12 = arith.constant dense<0.000000e+00> : vector<8x64x32xf32>
    %19 = tpu.matmul %16, %10, %cst_12 {dimension_numbers = #tpu.dot_dimension_numbers<[2], [1], [1], [2], [0, 0, 0, 1, 1, 2], [0], [0]>} : vector<8x64x64xf32>, vector<8x64x32xf32>, vector<8x64x32xf32> -> vector<8x64x32xf32>
    "tpu.trace_stop"() : () -> ()
    %20 = tpu.reciprocal %18 {approx = true} : vector<8x64x1xf32> -> vector<8x64x1xf32>
    %21 = arith.mulf %18, %20 : vector<8x64x1xf32>
    %cst_13 = arith.constant 2.000000e+00 : f32
    %22 = vector.broadcast %cst_13 : f32 to vector<8x64x1xf32>
    %23 = arith.subf %22, %21 : vector<8x64x1xf32>
    %24 = arith.mulf %20, %23 : vector<8x64x1xf32>
    %25 = vector.broadcast %24 : vector<8x64x1xf32> to vector<8x64x32xf32>
    %26 = arith.mulf %19, %25 : vector<8x64x32xf32>
    %27 = vector.shape_cast %26 : vector<8x64x32xf32> to vector<512x32xf32>
    %c0_14 = arith.constant 0 : index
    %c0_15 = arith.constant 0 : index
    %28 = vector.load %arg5[%c0_14, %c0_15] : memref<32x32xf32, #tpu.memory_space<vmem>>, vector<32x32xf32>
    %cst_16 = arith.constant dense<0.000000e+00> : vector<512x32xf32>
    %29 = tpu.matmul %27, %28, %cst_16 {dimension_numbers = #tpu.dot_dimension_numbers<[1], [0], [0], [1], [0, 0, 1, 1], [], []>} : vector<512x32xf32>, vector<32x32xf32>, vector<512x32xf32> -> vector<512x32xf32>
    %c0_17 = arith.constant 0 : index
    %c0_18 = arith.constant 0 : index
    %30 = vector.load %arg6[%c0_17, %c0_18] : memref<1x32xf32, #tpu.memory_space<vmem>>, vector<1x32xf32>
    %31 = vector.broadcast %30 : vector<1x32xf32> to vector<512x32xf32>
    %32 = arith.addf %29, %31 : vector<512x32xf32>
    %33 = vector.shape_cast %32 : vector<512x32xf32> to vector<8x2048xf32>
    %c0_19 = arith.constant 0 : index
    %c0_20 = arith.constant 0 : index
    %34 = vector.load %arg7[%c0_19, %c0_20] : memref<8x2048xf32, #tpu.memory_space<vmem>>, vector<8x2048xf32>
    tpu.vector_store %arg7[%c0_19, %c0_20], %33 {strides = array<i32>} : memref<8x2048xf32, #tpu.memory_space<vmem>>, vector<8x2048xf32>,
    return
  }
  func.func @transform_0(%arg0: i32) -> (i32, i32) {
    %c0_i32 = arith.constant 0 : i32
    %c0_i32_0 = arith.constant 0 : i32
    return %arg0, %c0_i32 : i32, i32
  }
  func.func @transform_1(%arg0: i32) -> (i32, i32) {
    %c0_i32 = arith.constant 0 : i32
    %c0_i32_0 = arith.constant 0 : i32
    %c0_i32_1 = arith.constant 0 : i32
    return %c0_i32, %c0_i32_0 : i32, i32
  }
  func.func @transform_2(%arg0: i32) -> (i32, i32) {
    %c0_i32 = arith.constant 0 : i32
    %c0_i32_0 = arith.constant 0 : i32
    %c0_i32_1 = arith.constant 0 : i32
    return %c0_i32, %c0_i32_0 : i32, i32
  }
  func.func @transform_3(%arg0: i32) -> (i32, i32) {
    %c0_i32 = arith.constant 0 : i32
    %c0_i32_0 = arith.constant 0 : i32
    %c0_i32_1 = arith.constant 0 : i32
    return %c0_i32, %c0_i32_0 : i32, i32
  }
  func.func @transform_4(%arg0: i32) -> (i32, i32) {
    %c0_i32 = arith.constant 0 : i32
    %c0_i32_0 = arith.constant 0 : i32
    %c0_i32_1 = arith.constant 0 : i32
    return %c0_i32, %c0_i32_0 : i32, i32
  }
  func.func @transform_5(%arg0: i32) -> (i32, i32) {
    %c0_i32 = arith.constant 0 : i32
    %c0_i32_0 = arith.constant 0 : i32
    %c0_i32_1 = arith.constant 0 : i32
    return %c0_i32, %c0_i32_0 : i32, i32
  }
  func.func @transform_6(%arg0: i32) -> (i32, i32) {
    %c0_i32 = arith.constant 0 : i32
    %c0_i32_0 = arith.constant 0 : i32
    return %arg0, %c0_i32 : i32, i32
  }
}

module attributes {stable_mosaic.version = 11 : i64} {
  func.func @_window_attn_kernel(%arg0: i32, %arg1: memref<8x64x32xf32, #tpu.memory_space<vmem>>, %arg2: memref<32x32xf32, #tpu.memory_space<vmem>>, %arg3: memref<32x32xf32, #tpu.memory_space<vmem>>, %arg4: memref<32x32xf32, #tpu.memory_space<vmem>>, %arg5: memref<32x32xf32, #tpu.memory_space<vmem>>, %arg6: memref<1x32xf32, #tpu.memory_space<vmem>>, %arg7: memref<8x64x32xf32, #tpu.memory_space<vmem>>) attributes {dimension_semantics = [#tpu.dimension_semantics<parallel>], iteration_bounds = array<i64: 2>, scalar_prefetch = 0 : i64, scratch_operands = 0 : i64, tpu.core_type = #tpu.core_type<tc>, window_params = [{transform_indices = @transform_0, window_bounds = array<i64: 8, 64, 32>}, {pipeline_mode = #tpu.pipeline_mode<synchronous>, transform_indices = @transform_1, window_bounds = array<i64: 32, 32>}, {pipeline_mode = #tpu.pipeline_mode<synchronous>, transform_indices = @transform_2, window_bounds = array<i64: 32, 32>}, {pipeline_mode = #tpu.pipeline_mode<synchronous>, transform_indices = @transform_3, window_bounds = array<i64: 32, 32>}, {pipeline_mode = #tpu.pipeline_mode<synchronous>, transform_indices = @transform_4, window_bounds = array<i64: 32, 32>}, {pipeline_mode = #tpu.pipeline_mode<synchronous>, transform_indices = @transform_5, window_bounds = array<i64: 1, 32>}, {transform_indices = @transform_6, window_bounds = array<i64: 8, 64, 32>}]} {
    %c0 = arith.constant 0 : index
    %c0_0 = arith.constant 0 : index
    %c0_1 = arith.constant 0 : index
    %0 = vector.load %arg1[%c0, %c0_0, %c0_1] : memref<8x64x32xf32, #tpu.memory_space<vmem>>, vector<8x64x32xf32>
    %1 = vector.shape_cast %0 : vector<8x64x32xf32> to vector<512x32xf32>
    %c0_2 = arith.constant 0 : index
    %c0_3 = arith.constant 0 : index
    %2 = vector.load %arg2[%c0_2, %c0_3] : memref<32x32xf32, #tpu.memory_space<vmem>>, vector<32x32xf32>
    %cst = arith.constant dense<0.000000e+00> : vector<512x32xf32>
    %3 = tpu.matmul %1, %2, %cst {dimension_numbers = #tpu.dot_dimension_numbers<[1], [0], [0], [1], [0, 0, 1, 1], [], []>} : vector<512x32xf32>, vector<32x32xf32>, vector<512x32xf32> -> vector<512x32xf32>
    %c0_4 = arith.constant 0 : index
    %c0_5 = arith.constant 0 : index
    %4 = vector.load %arg3[%c0_4, %c0_5] : memref<32x32xf32, #tpu.memory_space<vmem>>, vector<32x32xf32>
    %cst_6 = arith.constant dense<0.000000e+00> : vector<512x32xf32>
    %5 = tpu.matmul %1, %4, %cst_6 {dimension_numbers = #tpu.dot_dimension_numbers<[1], [0], [0], [1], [0, 0, 1, 1], [], []>} : vector<512x32xf32>, vector<32x32xf32>, vector<512x32xf32> -> vector<512x32xf32>
    %c0_7 = arith.constant 0 : index
    %c0_8 = arith.constant 0 : index
    %6 = vector.load %arg4[%c0_7, %c0_8] : memref<32x32xf32, #tpu.memory_space<vmem>>, vector<32x32xf32>
    %cst_9 = arith.constant dense<0.000000e+00> : vector<512x32xf32>
    %7 = tpu.matmul %1, %6, %cst_9 {dimension_numbers = #tpu.dot_dimension_numbers<[1], [0], [0], [1], [0, 0, 1, 1], [], []>} : vector<512x32xf32>, vector<32x32xf32>, vector<512x32xf32> -> vector<512x32xf32>
    %8 = vector.shape_cast %3 : vector<512x32xf32> to vector<8x64x32xf32>
    %9 = vector.shape_cast %5 : vector<512x32xf32> to vector<8x64x32xf32>
    %10 = vector.shape_cast %7 : vector<512x32xf32> to vector<8x64x32xf32>
    "tpu.trace_start"() <{level = 10 : i32, message = "bqd,bkd->bqk"}> : () -> ()
    %cst_10 = arith.constant dense<0.000000e+00> : vector<8x64x64xf32>
    %11 = tpu.matmul %8, %9, %cst_10 {dimension_numbers = #tpu.dot_dimension_numbers<[2], [2], [1], [1], [0, 0, 0, 1, 1, 1], [0], [0]>} : vector<8x64x32xf32>, vector<8x64x32xf32>, vector<8x64x64xf32> -> vector<8x64x64xf32>
    "tpu.trace_stop"() : () -> ()
    %cst_11 = arith.constant dense<0xFF800000> : vector<8x64xf32>
    %12 = vector.multi_reduction <maximumf>, %11, %cst_11 [2] : vector<8x64x64xf32> to vector<8x64xf32>
    %13 = vector.shape_cast %12 : vector<8x64xf32> to vector<8x64x1xf32>
    %14 = vector.broadcast %13 : vector<8x64x1xf32> to vector<8x64x64xf32>
    %15 = arith.subf %11, %14 : vector<8x64x64xf32>
    %16 = math.exp %15 : vector<8x64x64xf32>
    %cst_12 = arith.constant dense<0.000000e+00> : vector<8x64xf32>
    %17 = vector.multi_reduction <add>, %16, %cst_12 [2] : vector<8x64x64xf32> to vector<8x64xf32>
    %18 = vector.shape_cast %17 : vector<8x64xf32> to vector<8x64x1xf32>
    "tpu.trace_start"() <{level = 10 : i32, message = "bqk,bkd->bqd"}> : () -> ()
    %cst_13 = arith.constant dense<0.000000e+00> : vector<8x64x32xf32>
    %19 = tpu.matmul %16, %10, %cst_13 {dimension_numbers = #tpu.dot_dimension_numbers<[2], [1], [1], [2], [0, 0, 0, 1, 1, 2], [0], [0]>} : vector<8x64x64xf32>, vector<8x64x32xf32>, vector<8x64x32xf32> -> vector<8x64x32xf32>
    "tpu.trace_stop"() : () -> ()
    %20 = tpu.reciprocal %18 {approx = true} : vector<8x64x1xf32> -> vector<8x64x1xf32>
    %21 = arith.mulf %18, %20 : vector<8x64x1xf32>
    %cst_14 = arith.constant 2.000000e+00 : f32
    %22 = vector.broadcast %cst_14 : f32 to vector<8x64x1xf32>
    %23 = arith.subf %22, %21 : vector<8x64x1xf32>
    %24 = arith.mulf %20, %23 : vector<8x64x1xf32>
    %25 = vector.broadcast %24 : vector<8x64x1xf32> to vector<8x64x32xf32>
    %26 = arith.mulf %19, %25 : vector<8x64x32xf32>
    %27 = vector.shape_cast %26 : vector<8x64x32xf32> to vector<512x32xf32>
    %c0_15 = arith.constant 0 : index
    %c0_16 = arith.constant 0 : index
    %28 = vector.load %arg5[%c0_15, %c0_16] : memref<32x32xf32, #tpu.memory_space<vmem>>, vector<32x32xf32>
    %cst_17 = arith.constant dense<0.000000e+00> : vector<512x32xf32>
    %29 = tpu.matmul %27, %28, %cst_17 {dimension_numbers = #tpu.dot_dimension_numbers<[1], [0], [0], [1], [0, 0, 1, 1], [], []>} : vector<512x32xf32>, vector<32x32xf32>, vector<512x32xf32> -> vector<512x32xf32>
    %c0_18 = arith.constant 0 : index
    %c0_19 = arith.constant 0 : index
    %30 = vector.load %arg6[%c0_18, %c0_19] : memref<1x32xf32, #tpu.memory_space<vmem>>, vector<1x32xf32>
    %31 = vector.broadcast %30 : vector<1x32xf32> to vector<512x32xf32>
    %32 = arith.addf %29, %31 : vector<512x32xf32>
    %33 = vector.shape_cast %32 : vector<512x32xf32> to vector<8x64x32xf32>
    %c0_20 = arith.constant 0 : index
    %c0_21 = arith.constant 0 : index
    %c0_22 = arith.constant 0 : index
    %34 = vector.load %arg7[%c0_20, %c0_21, %c0_22] : memref<8x64x32xf32, #tpu.memory_space<vmem>>, vector<8x64x32xf32>
    tpu.vector_store %arg7[%c0_20, %c0_21, %c0_22], %33 {strides = array<i32>} : memref<8x64x32xf32, #tpu.memory_space<vmem>>, vector<8x64x32xf32>,
    return
  }
  func.func @transform_0(%arg0: i32) -> (i32, i32, i32) {
    %c0_i32 = arith.constant 0 : i32
    %c0_i32_0 = arith.constant 0 : i32
    %c0_i32_1 = arith.constant 0 : i32
    return %arg0, %c0_i32, %c0_i32_0 : i32, i32, i32
  }
  func.func @transform_1(%arg0: i32) -> (i32, i32) {
    %c0_i32 = arith.constant 0 : i32
    %c0_i32_0 = arith.constant 0 : i32
    %c0_i32_1 = arith.constant 0 : i32
    return %c0_i32, %c0_i32_0 : i32, i32
  }
  func.func @transform_2(%arg0: i32) -> (i32, i32) {
    %c0_i32 = arith.constant 0 : i32
    %c0_i32_0 = arith.constant 0 : i32
    %c0_i32_1 = arith.constant 0 : i32
    return %c0_i32, %c0_i32_0 : i32, i32
  }
  func.func @transform_3(%arg0: i32) -> (i32, i32) {
    %c0_i32 = arith.constant 0 : i32
    %c0_i32_0 = arith.constant 0 : i32
    %c0_i32_1 = arith.constant 0 : i32
    return %c0_i32, %c0_i32_0 : i32, i32
  }
  func.func @transform_4(%arg0: i32) -> (i32, i32) {
    %c0_i32 = arith.constant 0 : i32
    %c0_i32_0 = arith.constant 0 : i32
    %c0_i32_1 = arith.constant 0 : i32
    return %c0_i32, %c0_i32_0 : i32, i32
  }
  func.func @transform_5(%arg0: i32) -> (i32, i32) {
    %c0_i32 = arith.constant 0 : i32
    %c0_i32_0 = arith.constant 0 : i32
    %c0_i32_1 = arith.constant 0 : i32
    return %c0_i32, %c0_i32_0 : i32, i32
  }
  func.func @transform_6(%arg0: i32) -> (i32, i32, i32) {
    %c0_i32 = arith.constant 0 : i32
    %c0_i32_0 = arith.constant 0 : i32
    %c0_i32_1 = arith.constant 0 : i32
    return %arg0, %c0_i32, %c0_i32_0 : i32, i32, i32
  }
}

</mosaic_0001>

<llo_original>
// kernel: tpu_custom_call.1
$region0: #{tpu_custom_call.1}
  #allocation0 [shape = 'u32[]', space=smem, size = 0x4, offset = 0x4, fixed_abs, tag = 'smem constant byte address 0x4 - core index']
  #allocation1 [shape = 'u32[144,128]{1,0:T(1,128)}', space=vmem, size = 0x12000, scoped, tag = 'internal scratch']
  %s0 = inlined_call_operand.vmem [shape: f32[16,64,32], index: 0, kind: input, shape index: {}]
  %s1 = inlined_call_operand.vmem [shape: f32[32,32], index: 1, kind: input, shape index: {}]
  %s2 = inlined_call_operand.vmem [shape: f32[32,32], index: 2, kind: input, shape index: {}]
  %s3 = inlined_call_operand.vmem [shape: f32[32,32], index: 3, kind: input, shape index: {}]
  %s4 = inlined_call_operand.vmem [shape: f32[32,32], index: 4, kind: input, shape index: {}]
  %s5 = inlined_call_operand.vmem [shape: f32[1,32], index: 5, kind: input, shape index: {}]
  %s6 = inlined_call_operand.vmem [shape: f32[16,64,32], index: 6, kind: output, shape index: {}]
  %s7 = sld [smem:[#allocation0]]
  $region57: #{tpu_custom_call.1} parent=0
    _
  %s9 = ssub.s32 1, %s7
  %s10 = scalar_select 0, %s9, %s7
  loop: start=0, step=1, limit=4
  $region2: #{tpu_custom_call.1} parent=0 // loop_pre_header
    _
  $region3: #{tpu_custom_call.1} parent=0 // loop_header
    %s12 = sphi 0, %s16
    %p13 = scmp.ge.s32.totalorder %s12, 4
    %s22 = sphi 0, %s24
    %s25 = sphi 0, %s22
    %s26 = sphi 0, %s25
    %s42 = sphi 0, %s26
    %s46 = sphi 0, %s46
    %s48 = sphi 0, %s46
    %s49 = sphi 0, %s48
    %s63 = sphi 0, %s49
    %s67 = sphi 0, %s67
    %s69 = sphi 0, %s67
    %s70 = sphi 0, %s69
    %s84 = sphi 0, %s70
    %s88 = sphi 0, %s88
    %s90 = sphi 0, %s88
    %s91 = sphi 0, %s90
    %s105 = sphi 0, %s91
    %s109 = sphi 0, %s109
    %s111 = sphi 0, %s109
    %s112 = sphi 0, %s111
    %s126 = sphi 0, %s112
    %s130 = sphi 0, %s130
    %s132 = sphi 0, %s130
    %s133 = sphi 0, %s132
    %s147 = sphi 0, %s133
    %s153 = sphi 0, %s155
    %s156 = sphi 0, %s153
    %s157 = sphi 0, %s156
    %s173 = sphi 0, %s157
  $region4: #{tpu_custom_call.1} parent=0 // loop_header_branch
    %15 = sbr.rel (%p13) target = $region8
  $region5: #{tpu_custom_call.1} parent=0 // loop_body
    %s17 = ssub.s32 %s12, 1
    %s18 = ssub.s32 %s12, 2
    %s19 = sadd.s32 %s12, 1
    %s20 = ssub.s32 %s12, %s19
    %p21 = scmp.eq.s32.totalorder %s20, 0
    %s23 = sadd.s32 %s22, 1
    %s24 = scalar_select %p21, %s22, %s23
    %p27 = pneg %p21
    %p28 = scmp.eq.s32.totalorder %s12, 1
    %p29 = por %p27, %p28
    %p30 = scmp.ne.s32.totalorder %s22, %s25
    %p31 = scmp.eq.s32.totalorder %s12, 0
    %p32 = por %p30, %p31
    %p33 = scmp.ne.s32.totalorder %s22, %s25
    %p34 = scmp.eq.s32.totalorder %s17, 1
    %p35 = por %p33, %p34
    %p36 = scmp.ne.s32.totalorder %s25, %s26
    %p37 = scmp.eq.s32.totalorder %s17, 0
    %p38 = por %p36, %p37
    %p39 = scmp.ne.s32.totalorder %s25, %s26
    %p40 = scmp.eq.s32.totalorder %s18, 1
    %p41 = por %p39, %p40
    %p43 = scmp.ne.s32.totalorder %s26, %s42
    %p44 = scmp.eq.s32.totalorder %s18, 0
    %p45 = por %p43, %p44
    %s47 = sadd.s32 %s46, 1
    %p50 = scmp.eq.s32.totalorder %s12, 1
    %p51 = scmp.ne.s32.totalorder %s46, %s48
    %p52 = scmp.eq.s32.totalorder %s12, 0
    %p53 = por %p51, %p52
    %p54 = scmp.ne.s32.totalorder %s46, %s48
    %p55 = scmp.eq.s32.totalorder %s17, 1
    %p56 = por %p54, %p55
    %p57 = scmp.ne.s32.totalorder %s48, %s49
    %p58 = scmp.eq.s32.totalorder %s17, 0
    %p59 = por %p57, %p58
    %p60 = scmp.ne.s32.totalorder %s48, %s49
    %p61 = scmp.eq.s32.totalorder %s18, 1
    %p62 = por %p60, %p61
    %p64 = scmp.ne.s32.totalorder %s49, %s63
    %p65 = scmp.eq.s32.totalorder %s18, 0
    %p66 = por %p64, %p65
    %s68 = sadd.s32 %s67, 1
    %p71 = scmp.eq.s32.totalorder %s12, 1
    %p72 = scmp.ne.s32.totalorder %s67, %s69
    %p73 = scmp.eq.s32.totalorder %s12, 0
    %p74 = por %p72, %p73
    %p75 = scmp.ne.s32.totalorder %s67, %s69
    %p76 = scmp.eq.s32.totalorder %s17, 1
    %p77 = por %p75, %p76
    %p78 = scmp.ne.s32.totalorder %s69, %s70
    %p79 = scmp.eq.s32.totalorder %s17, 0
    %p80 = por %p78, %p79
    %p81 = scmp.ne.s32.totalorder %s69, %s70
    %p82 = scmp.eq.s32.totalorder %s18, 1
    %p83 = por %p81, %p82
    %p85 = scmp.ne.s32.totalorder %s70, %s84
    %p86 = scmp.eq.s32.totalorder %s18, 0
    %p87 = por %p85, %p86
    %s89 = sadd.s32 %s88, 1
    %p92 = scmp.eq.s32.totalorder %s12, 1
    %p93 = scmp.ne.s32.totalorder %s88, %s90
    %p94 = scmp.eq.s32.totalorder %s12, 0
    %p95 = por %p93, %p94
    %p96 = scmp.ne.s32.totalorder %s88, %s90
    %p97 = scmp.eq.s32.totalorder %s17, 1
    %p98 = por %p96, %p97
    %p99 = scmp.ne.s32.totalorder %s90, %s91
    %p100 = scmp.eq.s32.totalorder %s17, 0
    %p101 = por %p99, %p100
    %p102 = scmp.ne.s32.totalorder %s90, %s91
    %p103 = scmp.eq.s32.totalorder %s18, 1
    %p104 = por %p102, %p103
    %p106 = scmp.ne.s32.totalorder %s91, %s105
    %p107 = scmp.eq.s32.totalorder %s18, 0
    %p108 = por %p106, %p107
    %s110 = sadd.s32 %s109, 1
    %p113 = scmp.eq.s32.totalorder %s12, 1
    %p114 = scmp.ne.s32.totalorder %s109, %s111
    %p115 = scmp.eq.s32.totalorder %s12, 0
    %p116 = por %p114, %p115
    %p117 = scmp.ne.s32.totalorder %s109, %s111
    %p118 = scmp.eq.s32.totalorder %s17, 1
    %p119 = por %p117, %p118
    %p120 = scmp.ne.s32.totalorder %s111, %s112
    %p121 = scmp.eq.s32.totalorder %s17, 0
    %p122 = por %p120, %p121
    %p123 = scmp.ne.s32.totalorder %s111, %s112
    %p124 = scmp.eq.s32.totalorder %s18, 1
    %p125 = por %p123, %p124
    %p127 = scmp.ne.s32.totalorder %s112, %s126
    %p128 = scmp.eq.s32.totalorder %s18, 0
    %p129 = por %p127, %p128
    %s131 = sadd.s32 %s130, 1
    %p134 = scmp.eq.s32.totalorder %s12, 1
    %p135 = scmp.ne.s32.totalorder %s130, %s132
    %p136 = scmp.eq.s32.totalorder %s12, 0
    %p137 = por %p135, %p136
    %p138 = scmp.ne.s32.totalorder %s130, %s132
    %p139 = scmp.eq.s32.totalorder %s17, 1
    %p140 = por %p138, %p139
    %p141 = scmp.ne.s32.totalorder %s132, %s133
    %p142 = scmp.eq.s32.totalorder %s17, 0
    %p143 = por %p141, %p142
    %p144 = scmp.ne.s32.totalorder %s132, %s133
    %p145 = scmp.eq.s32.totalorder %s18, 1
    %p146 = por %p144, %p145
    %p148 = scmp.ne.s32.totalorder %s133, %s147
    %p149 = scmp.eq.s32.totalorder %s18, 0
    %p150 = por %p148, %p149
    %s151 = ssub.s32 %s12, %s19
    %p152 = scmp.eq.s32.totalorder %s151, 0
    %s154 = sadd.s32 %s153, 1
    %s155 = scalar_select %p152, %s153, %s154
    %p158 = pneg %p152
    %p159 = scmp.eq.s32.totalorder %s12, 1
    %p160 = por %p158, %p159
    %p161 = scmp.ne.s32.totalorder %s153, %s156
    %p162 = scmp.eq.s32.totalorder %s12, 0
    %p163 = por %p161, %p162
    %p164 = scmp.ne.s32.totalorder %s153, %s156
    %p165 = scmp.eq.s32.totalorder %s17, 1
    %p166 = por %p164, %p165
    %p167 = scmp.ne.s32.totalorder %s156, %s157
    %p168 = scmp.eq.s32.totalorder %s17, 0
    %p169 = por %p167, %p168
    %p170 = scmp.ne.s32.totalorder %s156, %s157
    %p171 = scmp.eq.s32.totalorder %s18, 1
    %p172 = por %p170, %p171
    %p174 = scmp.ne.s32.totalorder %s157, %s173
    %p175 = scmp.eq.s32.totalorder %s18, 0
    %p176 = por %p174, %p175
    %p177 = scmp.le.s32.totalorder 1, %s12
    %p178 = scmp.lt.s32.totalorder %s12, 3
    %p179 = pnand %p177, %p178
    %p180 = pneg %p179
    // Predicated region
    $region9: #{tpu_custom_call.1} parent=5 // pred_check
      _
    $region10: #{tpu_custom_call.1} parent=5 // pred_check_branch
      %182 = sbr.rel (%p179) target = $region12
    $region11: #{tpu_custom_call.1} parent=5 // pred_region
      %s183 = ssub.s32 %s12, 1
      // Predicated region
      $region13: #{tpu_custom_call.1} parent=11 // pred_check
        %p184 = pneg %p59
      $region14: #{tpu_custom_call.1} parent=11 // pred_check_branch
        %186 = sbr.rel (%p184) target = $region16
      $region15: #{tpu_custom_call.1} parent=11 // pred_region
        _
      $region16: #{tpu_custom_call.1} parent=11 // pred_fallthru
        _
      // Predicated region
      $region17: #{tpu_custom_call.1} parent=11 // pred_check
        %p187 = pneg %p80
      $region18: #{tpu_custom_call.1} parent=11 // pred_check_branch
        %189 = sbr.rel (%p187) target = $region20
      $region19: #{tpu_custom_call.1} parent=11 // pred_region
        _
      $region20: #{tpu_custom_call.1} parent=11 // pred_fallthru
        _
      // Predicated region
      $region21: #{tpu_custom_call.1} parent=11 // pred_check
        %p190 = pneg %p101
      $region22: #{tpu_custom_call.1} parent=11 // pred_check_branch
        %192 = sbr.rel (%p190) target = $region24
      $region23: #{tpu_custom_call.1} parent=11 // pred_region
        _
      $region24: #{tpu_custom_call.1} parent=11 // pred_fallthru
        _
      // Predicated region
      $region25: #{tpu_custom_call.1} parent=11 // pred_check
        %p193 = pneg %p122
      $region26: #{tpu_custom_call.1} parent=11 // pred_check_branch
        %195 = sbr.rel (%p193) target = $region28
      $region27: #{tpu_custom_call.1} parent=11 // pred_region
        _
      $region28: #{tpu_custom_call.1} parent=11 // pred_fallthru
        _
      // Predicated region
      $region29: #{tpu_custom_call.1} parent=11 // pred_check
        %p196 = pneg %p143
      $region30: #{tpu_custom_call.1} parent=11 // pred_check_branch
        %198 = sbr.rel (%p196) target = $region32
      $region31: #{tpu_custom_call.1} parent=11 // pred_region
        _
      $region32: #{tpu_custom_call.1} parent=11 // pred_fallthru
        _
    $region12: #{tpu_custom_call.1} parent=5 // pred_fallthru
      _
    %p199 = scmp.lt.s32.totalorder %s12, 2
    // Predicated region
    $region33: #{tpu_custom_call.1} parent=5 // pred_check
      %p200 = pneg %p199
    $region34: #{tpu_custom_call.1} parent=5 // pred_check_branch
      %202 = sbr.rel (%p200) target = $region36
    $region35: #{tpu_custom_call.1} parent=5 // pred_region
      // Predicated region
      $region37: #{tpu_custom_call.1} parent=35 // pred_check
        %p203 = pneg %p32
      $region38: #{tpu_custom_call.1} parent=35 // pred_check_branch
        %205 = sbr.rel (%p203) target = $region40
      $region39: #{tpu_custom_call.1} parent=35 // pred_region
        %s206 = smul.u32 8, %s12
        %p207 = scmp.lt.s32.totalorder %s206, 15
        %s208 = scalar_select %p207, %s206, 15
        %s209 = smul.addr %s208, 8
        %s210 = smul.addr %s209, 8
        %s211 = scalar_lea.vmem %s0, %s210
        %s212 = smul.u32 8, %s12
      $region40: #{tpu_custom_call.1} parent=35 // pred_fallthru
        _
    $region36: #{tpu_custom_call.1} parent=5 // pred_fallthru
      _
    %p213 = scmp.le.s32.totalorder 1, %s12
    %p214 = scmp.lt.s32.totalorder %s12, 3
    %p215 = pnand %p213, %p214
    %p216 = pneg %p215
    // Predicated region
    $region41: #{tpu_custom_call.1} parent=5 // pred_check
      _
    $region42: #{tpu_custom_call.1} parent=5 // pred_check_branch
      %218 = sbr.rel (%p215) target = $region44
    $region43: #{tpu_custom_call.1} parent=5 // pred_region
      %s219 = ssub.s32 %s12, 1
      %s220 = smul.u32 8, %s17
      %p221 = scmp.lt.s32.totalorder %s220, 15
      %s222 = scalar_select %p221, %s220, 15
      %s223 = smul.addr %s222, 8
      %s224 = smul.addr %s223, 8
      %s225 = scalar_lea.vmem %s0, %s224
      %p226 = pneg %p38
      %p227 = pneg %p35
      %p228 = pneg %p59
      %p229 = pneg %p56
      %p230 = pneg %p80
      %p231 = pneg %p77
      %p232 = pneg %p101
      %p233 = pneg %p98
      %p234 = pneg %p122
      %p235 = pneg %p119
      %p236 = pneg %p143
      %p237 = pneg %p140
      %p238 = pneg %p169
      %p239 = pneg %p166
      %s240 = smul.u32 8, %s17
      %p241 = scmp.lt.s32.totalorder %s240, 15
      %s242 = scalar_select %p241, %s240, 15
      %s243 = smul.addr %s242, 8
      %s244 = smul.addr %s243, 8
      %s245 = scalar_lea.vmem %s6, %s244
      %s246 = smul.u32 8, %s17
      %p247 = scmp.lt.s32.totalorder %s246, 15
      %s248 = scalar_select %p247, %s246, 15
      %s249 = smul.addr %s248, 8
      %s250 = smul.addr %s249, 8
      %s251 = scalar_lea.vmem %s0, %s250
      %s252 = smul.u32 8, %s17
      %s253 = smul.u32 8, %s17
      %p254 = scmp.lt.s32.totalorder %s253, 15
      %s255 = scalar_select %p254, %s253, 15
      %s256 = smul.addr %s255, 8
      %s257 = smul.addr %s256, 8
      %s258 = scalar_lea.vmem %s6, %s257
      %s259 = smul.u32 8, %s17
      %v260 = vld [vmem:[%s251] sm:$0xff]
      %v261 = vld [vmem:[%s251 + $0x8] sm:$0xff]
      %v262 = vld [vmem:[%s251 + $0x10] sm:$0xff]
      %v263 = vld [vmem:[%s251 + $0x18] sm:$0xff]
      %v264 = vld [vmem:[%s251 + $0x20] sm:$0xff]
      %v265 = vld [vmem:[%s251 + $0x28] sm:$0xff]
      %v266 = vld [vmem:[%s251 + $0x30] sm:$0xff]
      %v267 = vld [vmem:[%s251 + $0x38] sm:$0xff]
      %v268 = vld [vmem:[%s251 + $0x40] sm:$0xff]
      %v269 = vld [vmem:[%s251 + $0x48] sm:$0xff]
      %v270 = vld [vmem:[%s251 + $0x50] sm:$0xff]
      %v271 = vld [vmem:[%s251 + $0x58] sm:$0xff]
      %v272 = vld [vmem:[%s251 + $0x60] sm:$0xff]
      %v273 = vld [vmem:[%s251 + $0x68] sm:$0xff]
      %v274 = vld [vmem:[%s251 + $0x70] sm:$0xff]
      %v275 = vld [vmem:[%s251 + $0x78] sm:$0xff]
      %v276 = vld [vmem:[%s251 + $0x80] sm:$0xff]
      %v277 = vld [vmem:[%s251 + $0x88] sm:$0xff]
      %v278 = vld [vmem:[%s251 + $0x90] sm:$0xff]
      %v279 = vld [vmem:[%s251 + $0x98] sm:$0xff]
      %v280 = vld [vmem:[%s251 + $0xa0] sm:$0xff]
      %v281 = vld [vmem:[%s251 + $0xa8] sm:$0xff]
      %v282 = vld [vmem:[%s251 + $0xb0] sm:$0xff]
      %v283 = vld [vmem:[%s251 + $0xb8] sm:$0xff]
      %v284 = vld [vmem:[%s251 + $0xc0] sm:$0xff]
      %v285 = vld [vmem:[%s251 + $0xc8] sm:$0xff]
      %v286 = vld [vmem:[%s251 + $0xd0] sm:$0xff]
      %v287 = vld [vmem:[%s251 + $0xd8] sm:$0xff]
      %v288 = vld [vmem:[%s251 + $0xe0] sm:$0xff]
      %v289 = vld [vmem:[%s251 + $0xe8] sm:$0xff]
      %v290 = vld [vmem:[%s251 + $0xf0] sm:$0xff]
      %v291 = vld [vmem:[%s251 + $0xf8] sm:$0xff]
      %v292 = vld [vmem:[%s251 + $0x100] sm:$0xff]
      %v293 = vld [vmem:[%s251 + $0x108] sm:$0xff]
      %v294 = vld [vmem:[%s251 + $0x110] sm:$0xff]
      %v295 = vld [vmem:[%s251 + $0x118] sm:$0xff]
      %v296 = vld [vmem:[%s251 + $0x120] sm:$0xff]
      %v297 = vld [vmem:[%s251 + $0x128] sm:$0xff]
      %v298 = vld [vmem:[%s251 + $0x130] sm:$0xff]
      %v299 = vld [vmem:[%s251 + $0x138] sm:$0xff]
      %v300 = vld [vmem:[%s251 + $0x140] sm:$0xff]
      %v301 = vld [vmem:[%s251 + $0x148] sm:$0xff]
      %v302 = vld [vmem:[%s251 + $0x150] sm:$0xff]
      %v303 = vld [vmem:[%s251 + $0x158] sm:$0xff]
      %v304 = vld [vmem:[%s251 + $0x160] sm:$0xff]
      %v305 = vld [vmem:[%s251 + $0x168] sm:$0xff]
      %v306 = vld [vmem:[%s251 + $0x170] sm:$0xff]
      %v307 = vld [vmem:[%s251 + $0x178] sm:$0xff]
      %v308 = vld [vmem:[%s251 + $0x180] sm:$0xff]
      %v309 = vld [vmem:[%s251 + $0x188] sm:$0xff]
      %v310 = vld [vmem:[%s251 + $0x190] sm:$0xff]
      %v311 = vld [vmem:[%s251 + $0x198] sm:$0xff]
      %v312 = vld [vmem:[%s251 + $0x1a0] sm:$0xff]
      %v313 = vld [vmem:[%s251 + $0x1a8] sm:$0xff]
      %v314 = vld [vmem:[%s251 + $0x1b0] sm:$0xff]
      %v315 = vld [vmem:[%s251 + $0x1b8] sm:$0xff]
      %v316 = vld [vmem:[%s251 + $0x1c0] sm:$0xff]
      %v317 = vld [vmem:[%s251 + $0x1c8] sm:$0xff]
      %v318 = vld [vmem:[%s251 + $0x1d0] sm:$0xff]
      %v319 = vld [vmem:[%s251 + $0x1d8] sm:$0xff]
      %v320 = vld [vmem:[%s251 + $0x1e0] sm:$0xff]
      %v321 = vld [vmem:[%s251 + $0x1e8] sm:$0xff]
      %v322 = vld [vmem:[%s251 + $0x1f0] sm:$0xff]
      %v323 = vld [vmem:[%s251 + $0x1f8] sm:$0xff]
      %v324 = vld [vmem:[%s1] sm:$0xff]
      %v325 = vld [vmem:[%s1 + $0x8] sm:$0xff]
      %v326 = vld [vmem:[%s1 + $0x10] sm:$0xff]
      %v327 = vld [vmem:[%s1 + $0x18] sm:$0xff]
      %vm328 = vcmask 261120
      %v330 = vsel %vm328, %v260, 0
      %v333 = vsel %vm328, %v261, 0
      %v336 = vsel %vm328, %v262, 0
      %v339 = vsel %vm328, %v263, 0
      %v342 = vsel %vm328, %v264, 0
      %v345 = vsel %vm328, %v265, 0
      %v348 = vsel %vm328, %v266, 0
      %v351 = vsel %vm328, %v267, 0
      %v354 = vsel %vm328, %v268, 0
      %v357 = vsel %vm328, %v269, 0
      %v360 = vsel %vm328, %v270, 0
      %v363 = vsel %vm328, %v271, 0
      %v366 = vsel %vm328, %v272, 0
      %v369 = vsel %vm328, %v273, 0
      %v372 = vsel %vm328, %v274, 0
      %v375 = vsel %vm328, %v275, 0
      %v378 = vsel %vm328, %v276, 0
      %v381 = vsel %vm328, %v277, 0
      %v384 = vsel %vm328, %v278, 0
      %v387 = vsel %vm328, %v279, 0
      %v390 = vsel %vm328, %v280, 0
      %v393 = vsel %vm328, %v281, 0
      %v396 = vsel %vm328, %v282, 0
      %v399 = vsel %vm328, %v283, 0
      %v402 = vsel %vm328, %v284, 0
      %v405 = vsel %vm328, %v285, 0
      %v408 = vsel %vm328, %v286, 0
      %v411 = vsel %vm328, %v287, 0
      %v414 = vsel %vm328, %v288, 0
      %v417 = vsel %vm328, %v289, 0
      %v420 = vsel %vm328, %v290, 0
      %v423 = vsel %vm328, %v291, 0
      %v426 = vsel %vm328, %v292, 0
      %v429 = vsel %vm328, %v293, 0
      %v432 = vsel %vm328, %v294, 0
      %v435 = vsel %vm328, %v295, 0
      %v438 = vsel %vm328, %v296, 0
      %v441 = vsel %vm328, %v297, 0
      %v444 = vsel %vm328, %v298, 0
      %v447 = vsel %vm328, %v299, 0
      %v450 = vsel %vm328, %v300, 0
      %v453 = vsel %vm328, %v301, 0
      %v456 = vsel %vm328, %v302, 0
      %v459 = vsel %vm328, %v303, 0
      %v462 = vsel %vm328, %v304, 0
      %v465 = vsel %vm328, %v305, 0
      %v468 = vsel %vm328, %v306, 0
      %v471 = vsel %vm328, %v307, 0
      %v474 = vsel %vm328, %v308, 0
      %v477 = vsel %vm328, %v309, 0
      %v480 = vsel %vm328, %v310, 0
      %v483 = vsel %vm328, %v311, 0
      %v486 = vsel %vm328, %v312, 0
      %v489 = vsel %vm328, %v313, 0
      %v492 = vsel %vm328, %v314, 0
      %v495 = vsel %vm328, %v315, 0
      %v498 = vsel %vm328, %v316, 0
      %v501 = vsel %vm328, %v317, 0
      %v504 = vsel %vm328, %v318, 0
      %v507 = vsel %vm328, %v319, 0
      %v510 = vsel %vm328, %v320, 0
      %v513 = vsel %vm328, %v321, 0
      %v516 = vsel %vm328, %v322, 0
      %v519 = vsel %vm328, %v323, 0
      %521 = vmatprep.subr.mxu0 0.0
      %522 = vmatpush1.msra.mxu0 0.0
      %523 = vmatprep.subr.mxu0 0.0
      %524 = vmatpush1.msra.mxu0 0.0
      %525 = vmatprep.subr.mxu0 0.0
      %526 = vmatpush1.msra.mxu0 0.0
      %527 = vmatprep.subr.mxu0 0.0
      %528 = vmatpush1.msra.mxu0 0.0
      %529 = vmatprep.subr.mxu0 0.0
      %530 = vmatpush1.msra.mxu0 0.0
      %531 = vmatprep.subr.mxu0 0.0
      %532 = vmatpush1.msra.mxu0 0.0
      %533 = vmatprep.subr.mxu0 0.0
      %534 = vmatpush1.msra.mxu0 0.0
      %535 = vmatprep.subr.mxu0 0.0
      %536 = vmatpush1.msra.mxu0 0.0
      %537 = vmatprep.subr.mxu0 0.0
      %538 = vmatpush1.msra.mxu0 0.0
      %539 = vmatprep.subr.mxu0 0.0
      %540 = vmatpush1.msra.mxu0 0.0
      %541 = vmatprep.subr.mxu0 0.0
      %542 = vmatpush1.msra.mxu0 0.0
      %543 = vmatprep.subr.mxu0 0.0
      %544 = vmatpush1.msra.mxu0 0.0
      %545 = vmatprep.subr.mxu0 0.0
      %546 = vmatpush1.msra.mxu0 %v327
      %547 = vmatprep.subr.mxu0 0.0
      %548 = vmatpush1.msra.mxu0 %v326
      %549 = vmatprep.subr.mxu0 0.0
      %550 = vmatpush1.msra.mxu0 %v325
      %551 = vmatprep.subr.mxu0 0.0
      %552 = vmatpush1.msra.mxu0 %v324
      %553 = vmatprep.subr.mxu0 0.0
      %554 = vmatpush2.msra.mxu0 0.0
      %555 = vmatprep.subr.mxu0 0.0
      %556 = vmatpush2.msra.mxu0 0.0
      %557 = vmatprep.subr.mxu0 0.0
      %558 = vmatpush2.msra.mxu0 0.0
      %559 = vmatprep.subr.mxu0 0.0
      %560 = vmatpush2.msra.mxu0 0.0
      %561 = vmatprep.subr.mxu0 0.0
      %562 = vmatpush2.msra.mxu0 0.0
      %563 = vmatprep.subr.mxu0 0.0
      %564 = vmatpush2.msra.mxu0 0.0
      %565 = vmatprep.subr.mxu0 0.0
      %566 = vmatpush2.msra.mxu0 0.0
      %567 = vmatprep.subr.mxu0 0.0
      %568 = vmatpush2.msra.mxu0 0.0
      %569 = vmatprep.subr.mxu0 0.0
      %570 = vmatpush2.msra.mxu0 0.0
      %571 = vmatprep.subr.mxu0 0.0
      %572 = vmatpush2.msra.mxu0 0.0
      %573 = vmatprep.subr.mxu0 0.0
      %574 = vmatpush2.msra.mxu0 0.0
      %575 = vmatprep.subr.mxu0 0.0
      %576 = vmatpush2.msra.mxu0 0.0
      %577 = vmatprep.subr.mxu0 0.0
      %578 = vmatpush2.msra.mxu0 0.0
      %579 = vmatprep.subr.mxu0 0.0
      %580 = vmatpush2.msra.mxu0 0.0
      %581 = vmatprep.subr.mxu0 0.0
      %582 = vmatpush2.msra.mxu0 0.0
      %583 = vmatprep.subr.mxu0 0.0
      %584 = vmatpush2.msra.mxu0 0.0
      %585 = vmatprep.mubr.f32.mxu0 0.0
      %586 = vmatmul.mubr.f32.gmra.mxu0 %v330
      %v587 = vpop.f32.mrf.mxu0
      %v588 = vadd.f32 0.0, %v587
      %v589 = vpop.f32.mrf.mxu0
      %590 = vmatprep.mubr.f32.mxu0 0.0
      %591 = vmatmul.mubr.f32.gmra.mxu0 %v333
      %v592 = vpop.f32.mrf.mxu0
      %v593 = vadd.f32 0.0, %v592
      %v594 = vpop.f32.mrf.mxu0
      %595 = vmatprep.mubr.f32.mxu0 0.0
      %596 = vmatmul.mubr.f32.gmra.mxu0 %v336
      %v597 = vpop.f32.mrf.mxu0
      %v598 = vadd.f32 0.0, %v597
      %v599 = vpop.f32.mrf.mxu0
      %600 = vmatprep.mubr.f32.mxu0 0.0
      %601 = vmatmul.mubr.f32.gmra.mxu0 %v339
      %v602 = vpop.f32.mrf.mxu0
      %v603 = vadd.f32 0.0, %v602
      %v604 = vpop.f32.mrf.mxu0
      %605 = vmatprep.mubr.f32.mxu0 0.0
      %606 = vmatmul.mubr.f32.gmra.mxu0 %v342
      %v607 = vpop.f32.mrf.mxu0
      %v608 = vadd.f32 0.0, %v607
      %v609 = vpop.f32.mrf.mxu0
      %610 = vmatprep.mubr.f32.mxu0 0.0
      %611 = vmatmul.mubr.f32.gmra.mxu0 %v345
      %v612 = vpop.f32.mrf.mxu0
      %v613 = vadd.f32 0.0, %v612
      %v614 = vpop.f32.mrf.mxu0
      %615 = vmatprep.mubr.f32.mxu0 0.0
      %616 = vmatmul.mubr.f32.gmra.mxu0 %v348
      %v617 = vpop.f32.mrf.mxu0
      %v618 = vadd.f32 0.0, %v617
      %v619 = vpop.f32.mrf.mxu0
      %620 = vmatprep.mubr.f32.mxu0 0.0
      %621 = vmatmul.mubr.f32.gmra.mxu0 %v351
      %v622 = vpop.f32.mrf.mxu0
      %v623 = vadd.f32 0.0, %v622
      %v624 = vpop.f32.mrf.mxu0
      %625 = vmatprep.mubr.f32.mxu0 0.0
      %626 = vmatmul.mubr.f32.gmra.mxu0 %v354
      %v627 = vpop.f32.mrf.mxu0
      %v628 = vadd.f32 0.0, %v627
      %v629 = vpop.f32.mrf.mxu0
      %630 = vmatprep.mubr.f32.mxu0 0.0
      %631 = vmatmul.mubr.f32.gmra.mxu0 %v357
      %v632 = vpop.f32.mrf.mxu0
      %v633 = vadd.f32 0.0, %v632
      %v634 = vpop.f32.mrf.mxu0
      %635 = vmatprep.mubr.f32.mxu0 0.0
      %636 = vmatmul.mubr.f32.gmra.mxu0 %v360
      %v637 = vpop.f32.mrf.mxu0
      %v638 = vadd.f32 0.0, %v637
      %v639 = vpop.f32.mrf.mxu0
      %640 = vmatprep.mubr.f32.mxu0 0.0
      %641 = vmatmul.mubr.f32.gmra.mxu0 %v363
      %v642 = vpop.f32.mrf.mxu0
      %v643 = vadd.f32 0.0, %v642
      %v644 = vpop.f32.mrf.mxu0
      %645 = vmatprep.mubr.f32.mxu0 0.0
      %646 = vmatmul.mubr.f32.gmra.mxu0 %v366
      %v647 = vpop.f32.mrf.mxu0
      %v648 = vadd.f32 0.0, %v647
      %v649 = vpop.f32.mrf.mxu0
      %650 = vmatprep.mubr.f32.mxu0 0.0
      %651 = vmatmul.mubr.f32.gmra.mxu0 %v369
      %v652 = vpop.f32.mrf.mxu0
      %v653 = vadd.f32 0.0, %v652
      %v654 = vpop.f32.mrf.mxu0
      %655 = vmatprep.mubr.f32.mxu0 0.0
      %656 = vmatmul.mubr.f32.gmra.mxu0 %v372
      %v657 = vpop.f32.mrf.mxu0
      %v658 = vadd.f32 0.0, %v657
      %v659 = vpop.f32.mrf.mxu0
      %660 = vmatprep.mubr.f32.mxu0 0.0
      %661 = vmatmul.mubr.f32.gmra.mxu0 %v375
      %v662 = vpop.f32.mrf.mxu0
      %v663 = vadd.f32 0.0, %v662
      %v664 = vpop.f32.mrf.mxu0
      %665 = vmatprep.mubr.f32.mxu0 0.0
      %666 = vmatmul.mubr.f32.gmra.mxu0 %v378
      %v667 = vpop.f32.mrf.mxu0
      %v668 = vadd.f32 0.0, %v667
      %v669 = vpop.f32.mrf.mxu0
      %670 = vmatprep.mubr.f32.mxu0 0.0
      %671 = vmatmul.mubr.f32.gmra.mxu0 %v381
      %v672 = vpop.f32.mrf.mxu0
      %v673 = vadd.f32 0.0, %v672
      %v674 = vpop.f32.mrf.mxu0
      %675 = vmatprep.mubr.f32.mxu0 0.0
      %676 = vmatmul.mubr.f32.gmra.mxu0 %v384
      %v677 = vpop.f32.mrf.mxu0
      %v678 = vadd.f32 0.0, %v677
      %v679 = vpop.f32.mrf.mxu0
      %680 = vmatprep.mubr.f32.mxu0 0.0
      %681 = vmatmul.mubr.f32.gmra.mxu0 %v387
      %v682 = vpop.f32.mrf.mxu0
      %v683 = vadd.f32 0.0, %v682
      %v684 = vpop.f32.mrf.mxu0
      %685 = vmatprep.mubr.f32.mxu0 0.0
      %686 = vmatmul.mubr.f32.gmra.mxu0 %v390
      %v687 = vpop.f32.mrf.mxu0
      %v688 = vadd.f32 0.0, %v687
      %v689 = vpop.f32.mrf.mxu0
      %690 = vmatprep.mubr.f32.mxu0 0.0
      %691 = vmatmul.mubr.f32.gmra.mxu0 %v393
      %v692 = vpop.f32.mrf.mxu0
      %v693 = vadd.f32 0.0, %v692
      %v694 = vpop.f32.mrf.mxu0
      %695 = vmatprep.mubr.f32.mxu0 0.0
      %696 = vmatmul.mubr.f32.gmra.mxu0 %v396
      %v697 = vpop.f32.mrf.mxu0
      %v698 = vadd.f32 0.0, %v697
      %v699 = vpop.f32.mrf.mxu0
      %700 = vmatprep.mubr.f32.mxu0 0.0
      %701 = vmatmul.mubr.f32.gmra.mxu0 %v399
      %v702 = vpop.f32.mrf.mxu0
      %v703 = vadd.f32 0.0, %v702
      %v704 = vpop.f32.mrf.mxu0
      %705 = vmatprep.mubr.f32.mxu0 0.0
      %706 = vmatmul.mubr.f32.gmra.mxu0 %v402
      %v707 = vpop.f32.mrf.mxu0
      %v708 = vadd.f32 0.0, %v707
      %v709 = vpop.f32.mrf.mxu0
      %710 = vmatprep.mubr.f32.mxu0 0.0
      %711 = vmatmul.mubr.f32.gmra.mxu0 %v405
      %v712 = vpop.f32.mrf.mxu0
      %v713 = vadd.f32 0.0, %v712
      %v714 = vpop.f32.mrf.mxu0
      %715 = vmatprep.mubr.f32.mxu0 0.0
      %716 = vmatmul.mubr.f32.gmra.mxu0 %v408
      %v717 = vpop.f32.mrf.mxu0
      %v718 = vadd.f32 0.0, %v717
      %v719 = vpop.f32.mrf.mxu0
      %720 = vmatprep.mubr.f32.mxu0 0.0
      %721 = vmatmul.mubr.f32.gmra.mxu0 %v411
      %v722 = vpop.f32.mrf.mxu0
      %v723 = vadd.f32 0.0, %v722
      %v724 = vpop.f32.mrf.mxu0
      %725 = vmatprep.mubr.f32.mxu0 0.0
      %726 = vmatmul.mubr.f32.gmra.mxu0 %v414
      %v727 = vpop.f32.mrf.mxu0
      %v728 = vadd.f32 0.0, %v727
      %v729 = vpop.f32.mrf.mxu0
      %730 = vmatprep.mubr.f32.mxu0 0.0
      %731 = vmatmul.mubr.f32.gmra.mxu0 %v417
      %v732 = vpop.f32.mrf.mxu0
      %v733 = vadd.f32 0.0, %v732
      %v734 = vpop.f32.mrf.mxu0
      %735 = vmatprep.mubr.f32.mxu0 0.0
      %736 = vmatmul.mubr.f32.gmra.mxu0 %v420
      %v737 = vpop.f32.mrf.mxu0
      %v738 = vadd.f32 0.0, %v737
      %v739 = vpop.f32.mrf.mxu0
      %740 = vmatprep.mubr.f32.mxu0 0.0
      %741 = vmatmul.mubr.f32.gmra.mxu0 %v423
      %v742 = vpop.f32.mrf.mxu0
      %v743 = vadd.f32 0.0, %v742
      %v744 = vpop.f32.mrf.mxu0
      %745 = vmatprep.mubr.f32.mxu0 0.0
      %746 = vmatmul.mubr.f32.gmra.mxu0 %v426
      %v747 = vpop.f32.mrf.mxu0
      %v748 = vadd.f32 0.0, %v747
      %v749 = vpop.f32.mrf.mxu0
      %750 = vmatprep.mubr.f32.mxu0 0.0
      %751 = vmatmul.mubr.f32.gmra.mxu0 %v429
      %v752 = vpop.f32.mrf.mxu0
      %v753 = vadd.f32 0.0, %v752
      %v754 = vpop.f32.mrf.mxu0
      %755 = vmatprep.mubr.f32.mxu0 0.0
      %756 = vmatmul.mubr.f32.gmra.mxu0 %v432
      %v757 = vpop.f32.mrf.mxu0
      %v758 = vadd.f32 0.0, %v757
      %v759 = vpop.f32.mrf.mxu0
      %760 = vmatprep.mubr.f32.mxu0 0.0
      %761 = vmatmul.mubr.f32.gmra.mxu0 %v435
      %v762 = vpop.f32.mrf.mxu0
      %v763 = vadd.f32 0.0, %v762
      %v764 = vpop.f32.mrf.mxu0
      %765 = vmatprep.mubr.f32.mxu0 0.0
      %766 = vmatmul.mubr.f32.gmra.mxu0 %v438
      %v767 = vpop.f32.mrf.mxu0
      %v768 = vadd.f32 0.0, %v767
      %v769 = vpop.f32.mrf.mxu0
      %770 = vmatprep.mubr.f32.mxu0 0.0
      %771 = vmatmul.mubr.f32.gmra.mxu0 %v441
      %v772 = vpop.f32.mrf.mxu0
      %v773 = vadd.f32 0.0, %v772
      %v774 = vpop.f32.mrf.mxu0
      %775 = vmatprep.mubr.f32.mxu0 0.0
      %776 = vmatmul.mubr.f32.gmra.mxu0 %v444
      %v777 = vpop.f32.mrf.mxu0
      %v778 = vadd.f32 0.0, %v777
      %v779 = vpop.f32.mrf.mxu0
      %780 = vmatprep.mubr.f32.mxu0 0.0
      %781 = vmatmul.mubr.f32.gmra.mxu0 %v447
      %v782 = vpop.f32.mrf.mxu0
      %v783 = vadd.f32 0.0, %v782
      %v784 = vpop.f32.mrf.mxu0
      %785 = vmatprep.mubr.f32.mxu0 0.0
      %786 = vmatmul.mubr.f32.gmra.mxu0 %v450
      %v787 = vpop.f32.mrf.mxu0
      %v788 = vadd.f32 0.0, %v787
      %v789 = vpop.f32.mrf.mxu0
      %790 = vmatprep.mubr.f32.mxu0 0.0
      %791 = vmatmul.mubr.f32.gmra.mxu0 %v453
      %v792 = vpop.f32.mrf.mxu0
      %v793 = vadd.f32 0.0, %v792
      %v794 = vpop.f32.mrf.mxu0
      %795 = vmatprep.mubr.f32.mxu0 0.0
      %796 = vmatmul.mubr.f32.gmra.mxu0 %v456
      %v797 = vpop.f32.mrf.mxu0
      %v798 = vadd.f32 0.0, %v797
      %v799 = vpop.f32.mrf.mxu0
      %800 = vmatprep.mubr.f32.mxu0 0.0
      %801 = vmatmul.mubr.f32.gmra.mxu0 %v459
      %v802 = vpop.f32.mrf.mxu0
      %v803 = vadd.f32 0.0, %v802
      %v804 = vpop.f32.mrf.mxu0
      %805 = vmatprep.mubr.f32.mxu0 0.0
      %806 = vmatmul.mubr.f32.gmra.mxu0 %v462
      %v807 = vpop.f32.mrf.mxu0
      %v808 = vadd.f32 0.0, %v807
      %v809 = vpop.f32.mrf.mxu0
      %810 = vmatprep.mubr.f32.mxu0 0.0
      %811 = vmatmul.mubr.f32.gmra.mxu0 %v465
      %v812 = vpop.f32.mrf.mxu0
      %v813 = vadd.f32 0.0, %v812
      %v814 = vpop.f32.mrf.mxu0
      %815 = vmatprep.mubr.f32.mxu0 0.0
      %816 = vmatmul.mubr.f32.gmra.mxu0 %v468
      %v817 = vpop.f32.mrf.mxu0
      %v818 = vadd.f32 0.0, %v817
      %v819 = vpop.f32.mrf.mxu0
      %820 = vmatprep.mubr.f32.mxu0 0.0
      %821 = vmatmul.mubr.f32.gmra.mxu0 %v471
      %v822 = vpop.f32.mrf.mxu0
      %v823 = vadd.f32 0.0, %v822
      %v824 = vpop.f32.mrf.mxu0
      %825 = vmatprep.mubr.f32.mxu0 0.0
      %826 = vmatmul.mubr.f32.gmra.mxu0 %v474
      %v827 = vpop.f32.mrf.mxu0
      %v828 = vadd.f32 0.0, %v827
      %v829 = vpop.f32.mrf.mxu0
      %830 = vmatprep.mubr.f32.mxu0 0.0
      %831 = vmatmul.mubr.f32.gmra.mxu0 %v477
      %v832 = vpop.f32.mrf.mxu0
      %v833 = vadd.f32 0.0, %v832
      %v834 = vpop.f32.mrf.mxu0
      %835 = vmatprep.mubr.f32.mxu0 0.0
      %836 = vmatmul.mubr.f32.gmra.mxu0 %v480
      %v837 = vpop.f32.mrf.mxu0
      %v838 = vadd.f32 0.0, %v837
      %v839 = vpop.f32.mrf.mxu0
      %840 = vmatprep.mubr.f32.mxu0 0.0
      %841 = vmatmul.mubr.f32.gmra.mxu0 %v483
      %v842 = vpop.f32.mrf.mxu0
      %v843 = vadd.f32 0.0, %v842
      %v844 = vpop.f32.mrf.mxu0
      %845 = vmatprep.mubr.f32.mxu0 0.0
      %846 = vmatmul.mubr.f32.gmra.mxu0 %v486
      %v847 = vpop.f32.mrf.mxu0
      %v848 = vadd.f32 0.0, %v847
      %v849 = vpop.f32.mrf.mxu0
      %850 = vmatprep.mubr.f32.mxu0 0.0
      %851 = vmatmul.mubr.f32.gmra.mxu0 %v489
      %v852 = vpop.f32.mrf.mxu0
      %v853 = vadd.f32 0.0, %v852
      %v854 = vpop.f32.mrf.mxu0
      %855 = vmatprep.mubr.f32.mxu0 0.0
      %856 = vmatmul.mubr.f32.gmra.mxu0 %v492
      %v857 = vpop.f32.mrf.mxu0
      %v858 = vadd.f32 0.0, %v857
      %v859 = vpop.f32.mrf.mxu0
      %860 = vmatprep.mubr.f32.mxu0 0.0
      %861 = vmatmul.mubr.f32.gmra.mxu0 %v495
      %v862 = vpop.f32.mrf.mxu0
      %v863 = vadd.f32 0.0, %v862
      %v864 = vpop.f32.mrf.mxu0
      %865 = vmatprep.mubr.f32.mxu0 0.0
      %866 = vmatmul.mubr.f32.gmra.mxu0 %v498
      %v867 = vpop.f32.mrf.mxu0
      %v868 = vadd.f32 0.0, %v867
      %v869 = vpop.f32.mrf.mxu0
      %870 = vmatprep.mubr.f32.mxu0 0.0
      %871 = vmatmul.mubr.f32.gmra.mxu0 %v501
      %v872 = vpop.f32.mrf.mxu0
      %v873 = vadd.f32 0.0, %v872
      %v874 = vpop.f32.mrf.mxu0
      %875 = vmatprep.mubr.f32.mxu0 0.0
      %876 = vmatmul.mubr.f32.gmra.mxu0 %v504
      %v877 = vpop.f32.mrf.mxu0
      %v878 = vadd.f32 0.0, %v877
      %v879 = vpop.f32.mrf.mxu0
      %880 = vmatprep.mubr.f32.mxu0 0.0
      %881 = vmatmul.mubr.f32.gmra.mxu0 %v507
      %v882 = vpop.f32.mrf.mxu0
      %v883 = vadd.f32 0.0, %v882
      %v884 = vpop.f32.mrf.mxu0
      %885 = vmatprep.mubr.f32.mxu0 0.0
      %886 = vmatmul.mubr.f32.gmra.mxu0 %v510
      %v887 = vpop.f32.mrf.mxu0
      %v888 = vadd.f32 0.0, %v887
      %v889 = vpop.f32.mrf.mxu0
      %890 = vmatprep.mubr.f32.mxu0 0.0
      %891 = vmatmul.mubr.f32.gmra.mxu0 %v513
      %v892 = vpop.f32.mrf.mxu0
      %v893 = vadd.f32 0.0, %v892
      %v894 = vpop.f32.mrf.mxu0
      %895 = vmatprep.mubr.f32.mxu0 0.0
      %896 = vmatmul.mubr.f32.gmra.mxu0 %v516
      %v897 = vpop.f32.mrf.mxu0
      %v898 = vadd.f32 0.0, %v897
      %v899 = vpop.f32.mrf.mxu0
      %900 = vmatprep.mubr.f32.mxu0 0.0
      %901 = vmatmul.mubr.f32.gmra.mxu0 %v519
      %v902 = vpop.f32.mrf.mxu0
      %v903 = vadd.f32 0.0, %v902
      %v904 = vpop.f32.mrf.mxu0
      %905 = vdwg.mxu0
      %v906 = vld [vmem:[%s2] sm:$0xff]
      %v907 = vld [vmem:[%s2 + $0x8] sm:$0xff]
      %v908 = vld [vmem:[%s2 + $0x10] sm:$0xff]
      %v909 = vld [vmem:[%s2 + $0x18] sm:$0xff]
      %910 = vmatprep.subr.mxu0 0.0
      %911 = vmatpush1.msra.mxu0 0.0
      %912 = vmatprep.subr.mxu0 0.0
      %913 = vmatpush1.msra.mxu0 0.0
      %914 = vmatprep.subr.mxu0 0.0
      %915 = vmatpush1.msra.mxu0 0.0
      %916 = vmatprep.subr.mxu0 0.0
      %917 = vmatpush1.msra.mxu0 0.0
      %918 = vmatprep.subr.mxu0 0.0
      %919 = vmatpush1.msra.mxu0 0.0
      %920 = vmatprep.subr.mxu0 0.0
      %921 = vmatpush1.msra.mxu0 0.0
      %922 = vmatprep.subr.mxu0 0.0
      %923 = vmatpush1.msra.mxu0 0.0
      %924 = vmatprep.subr.mxu0 0.0
      %925 = vmatpush1.msra.mxu0 0.0
      %926 = vmatprep.subr.mxu0 0.0
      %927 = vmatpush1.msra.mxu0 0.0
      %928 = vmatprep.subr.mxu0 0.0
      %929 = vmatpush1.msra.mxu0 0.0
      %930 = vmatprep.subr.mxu0 0.0
      %931 = vmatpush1.msra.mxu0 0.0
      %932 = vmatprep.subr.mxu0 0.0
      %933 = vmatpush1.msra.mxu0 0.0
      %934 = vmatprep.subr.mxu0 0.0
      %935 = vmatpush1.msra.mxu0 %v909
      %936 = vmatprep.subr.mxu0 0.0
      %937 = vmatpush1.msra.mxu0 %v908
      %938 = vmatprep.subr.mxu0 0.0
      %939 = vmatpush1.msra.mxu0 %v907
      %940 = vmatprep.subr.mxu0 0.0
      %941 = vmatpush1.msra.mxu0 %v906
      %942 = vmatprep.subr.mxu0 0.0
      %943 = vmatpush2.msra.mxu0 0.0
      %944 = vmatprep.subr.mxu0 0.0
      %945 = vmatpush2.msra.mxu0 0.0
      %946 = vmatprep.subr.mxu0 0.0
      %947 = vmatpush2.msra.mxu0 0.0
      %948 = vmatprep.subr.mxu0 0.0
      %949 = vmatpush2.msra.mxu0 0.0
      %950 = vmatprep.subr.mxu0 0.0
      %951 = vmatpush2.msra.mxu0 0.0
      %952 = vmatprep.subr.mxu0 0.0
      %953 = vmatpush2.msra.mxu0 0.0
      %954 = vmatprep.subr.mxu0 0.0
      %955 = vmatpush2.msra.mxu0 0.0
      %956 = vmatprep.subr.mxu0 0.0
      %957 = vmatpush2.msra.mxu0 0.0
      %958 = vmatprep.subr.mxu0 0.0
      %959 = vmatpush2.msra.mxu0 0.0
      %960 = vmatprep.subr.mxu0 0.0
      %961 = vmatpush2.msra.mxu0 0.0
      %962 = vmatprep.subr.mxu0 0.0
      %963 = vmatpush2.msra.mxu0 0.0
      %964 = vmatprep.subr.mxu0 0.0
      %965 = vmatpush2.msra.mxu0 0.0
      %966 = vmatprep.subr.mxu0 0.0
      %967 = vmatpush2.msra.mxu0 0.0
      %968 = vmatprep.subr.mxu0 0.0
      %969 = vmatpush2.msra.mxu0 0.0
      %970 = vmatprep.subr.mxu0 0.0
      %971 = vmatpush2.msra.mxu0 0.0
      %972 = vmatprep.subr.mxu0 0.0
      %973 = vmatpush2.msra.mxu0 0.0
      %974 = vmatprep.mubr.f32.mxu0 0.0
      %975 = vmatmul.mubr.f32.gmra.mxu0 %v330
      %v976 = vpop.f32.mrf.mxu0
      %v977 = vadd.f32 0.0, %v976
      %v978 = vpop.f32.mrf.mxu0
      %979 = vmatprep.mubr.f32.mxu0 0.0
      %980 = vmatmul.mubr.f32.gmra.mxu0 %v333
      %v981 = vpop.f32.mrf.mxu0
      %v982 = vadd.f32 0.0, %v981
      %v983 = vpop.f32.mrf.mxu0
      %984 = vmatprep.mubr.f32.mxu0 0.0
      %985 = vmatmul.mubr.f32.gmra.mxu0 %v336
      %v986 = vpop.f32.mrf.mxu0
      %v987 = vadd.f32 0.0, %v986
      %v988 = vpop.f32.mrf.mxu0
      %989 = vmatprep.mubr.f32.mxu0 0.0
      %990 = vmatmul.mubr.f32.gmra.mxu0 %v339
      %v991 = vpop.f32.mrf.mxu0
      %v992 = vadd.f32 0.0, %v991
      %v993 = vpop.f32.mrf.mxu0
      %994 = vmatprep.mubr.f32.mxu0 0.0
      %995 = vmatmul.mubr.f32.gmra.mxu0 %v342
      %v996 = vpop.f32.mrf.mxu0
      %v997 = vadd.f32 0.0, %v996
      %v998 = vpop.f32.mrf.mxu0
      %999 = vmatprep.mubr.f32.mxu0 0.0
      %1000 = vmatmul.mubr.f32.gmra.mxu0 %v345
      %v1001 = vpop.f32.mrf.mxu0
      %v1002 = vadd.f32 0.0, %v1001
      %v1003 = vpop.f32.mrf.mxu0
      %1004 = vmatprep.mubr.f32.mxu0 0.0
      %1005 = vmatmul.mubr.f32.gmra.mxu0 %v348
      %v1006 = vpop.f32.mrf.mxu0
      %v1007 = vadd.f32 0.0, %v1006
      %v1008 = vpop.f32.mrf.mxu0
      %1009 = vmatprep.mubr.f32.mxu0 0.0
      %1010 = vmatmul.mubr.f32.gmra.mxu0 %v351
      %v1011 = vpop.f32.mrf.mxu0
      %v1012 = vadd.f32 0.0, %v1011
      %v1013 = vpop.f32.mrf.mxu0
      %1014 = vmatprep.mubr.f32.mxu0 0.0
      %1015 = vmatmul.mubr.f32.gmra.mxu0 %v354
      %v1016 = vpop.f32.mrf.mxu0
      %v1017 = vadd.f32 0.0, %v1016
      %v1018 = vpop.f32.mrf.mxu0
      %1019 = vmatprep.mubr.f32.mxu0 0.0
      %1020 = vmatmul.mubr.f32.gmra.mxu0 %v357
      %v1021 = vpop.f32.mrf.mxu0
      %v1022 = vadd.f32 0.0, %v1021
      %v1023 = vpop.f32.mrf.mxu0
      %1024 = vmatprep.mubr.f32.mxu0 0.0
      %1025 = vmatmul.mubr.f32.gmra.mxu0 %v360
      %v1026 = vpop.f32.mrf.mxu0
      %v1027 = vadd.f32 0.0, %v1026
      %v1028 = vpop.f32.mrf.mxu0
      %1029 = vmatprep.mubr.f32.mxu0 0.0
      %1030 = vmatmul.mubr.f32.gmra.mxu0 %v363
      %v1031 = vpop.f32.mrf.mxu0
      %v1032 = vadd.f32 0.0, %v1031
      %v1033 = vpop.f32.mrf.mxu0
      %1034 = vmatprep.mubr.f32.mxu0 0.0
      %1035 = vmatmul.mubr.f32.gmra.mxu0 %v366
      %v1036 = vpop.f32.mrf.mxu0
      %v1037 = vadd.f32 0.0, %v1036
      %v1038 = vpop.f32.mrf.mxu0
      %1039 = vmatprep.mubr.f32.mxu0 0.0
      %1040 = vmatmul.mubr.f32.gmra.mxu0 %v369
      %v1041 = vpop.f32.mrf.mxu0
      %v1042 = vadd.f32 0.0, %v1041
      %v1043 = vpop.f32.mrf.mxu0
      %1044 = vmatprep.mubr.f32.mxu0 0.0
      %1045 = vmatmul.mubr.f32.gmra.mxu0 %v372
      %v1046 = vpop.f32.mrf.mxu0
      %v1047 = vadd.f32 0.0, %v1046
      %v1048 = vpop.f32.mrf.mxu0
      %1049 = vmatprep.mubr.f32.mxu0 0.0
      %1050 = vmatmul.mubr.f32.gmra.mxu0 %v375
      %v1051 = vpop.f32.mrf.mxu0
      %v1052 = vadd.f32 0.0, %v1051
      %v1053 = vpop.f32.mrf.mxu0
      %1054 = vmatprep.mubr.f32.mxu0 0.0
      %1055 = vmatmul.mubr.f32.gmra.mxu0 %v378
      %v1056 = vpop.f32.mrf.mxu0
      %v1057 = vadd.f32 0.0, %v1056
      %v1058 = vpop.f32.mrf.mxu0
      %1059 = vmatprep.mubr.f32.mxu0 0.0
      %1060 = vmatmul.mubr.f32.gmra.mxu0 %v381
      %v1061 = vpop.f32.mrf.mxu0
      %v1062 = vadd.f32 0.0, %v1061
      %v1063 = vpop.f32.mrf.mxu0
      %1064 = vmatprep.mubr.f32.mxu0 0.0
      %1065 = vmatmul.mubr.f32.gmra.mxu0 %v384
      %v1066 = vpop.f32.mrf.mxu0
      %v1067 = vadd.f32 0.0, %v1066
      %v1068 = vpop.f32.mrf.mxu0
      %1069 = vmatprep.mubr.f32.mxu0 0.0
      %1070 = vmatmul.mubr.f32.gmra.mxu0 %v387
      %v1071 = vpop.f32.mrf.mxu0
      %v1072 = vadd.f32 0.0, %v1071
      %v1073 = vpop.f32.mrf.mxu0
      %1074 = vmatprep.mubr.f32.mxu0 0.0
      %1075 = vmatmul.mubr.f32.gmra.mxu0 %v390
      %v1076 = vpop.f32.mrf.mxu0
      %v1077 = vadd.f32 0.0, %v1076
      %v1078 = vpop.f32.mrf.mxu0
      %1079 = vmatprep.mubr.f32.mxu0 0.0
      %1080 = vmatmul.mubr.f32.gmra.mxu0 %v393
      %v1081 = vpop.f32.mrf.mxu0
      %v1082 = vadd.f32 0.0, %v1081
      %v1083 = vpop.f32.mrf.mxu0
      %1084 = vmatprep.mubr.f32.mxu0 0.0
      %1085 = vmatmul.mubr.f32.gmra.mxu0 %v396
      %v1086 = vpop.f32.mrf.mxu0
      %v1087 = vadd.f32 0.0, %v1086
      %v1088 = vpop.f32.mrf.mxu0
      %1089 = vmatprep.mubr.f32.mxu0 0.0
      %1090 = vmatmul.mubr.f32.gmra.mxu0 %v399
      %v1091 = vpop.f32.mrf.mxu0
      %v1092 = vadd.f32 0.0, %v1091
      %v1093 = vpop.f32.mrf.mxu0
      %1094 = vmatprep.mubr.f32.mxu0 0.0
      %1095 = vmatmul.mubr.f32.gmra.mxu0 %v402
      %v1096 = vpop.f32.mrf.mxu0
      %v1097 = vadd.f32 0.0, %v1096
      %v1098 = vpop.f32.mrf.mxu0
      %1099 = vmatprep.mubr.f32.mxu0 0.0
      %1100 = vmatmul.mubr.f32.gmra.mxu0 %v405
      %v1101 = vpop.f32.mrf.mxu0
      %v1102 = vadd.f32 0.0, %v1101
      %v1103 = vpop.f32.mrf.mxu0
      %1104 = vmatprep.mubr.f32.mxu0 0.0
      %1105 = vmatmul.mubr.f32.gmra.mxu0 %v408
      %v1106 = vpop.f32.mrf.mxu0
      %v1107 = vadd.f32 0.0, %v1106
      %v1108 = vpop.f32.mrf.mxu0
      %1109 = vmatprep.mubr.f32.mxu0 0.0
      %1110 = vmatmul.mubr.f32.gmra.mxu0 %v411
      %v1111 = vpop.f32.mrf.mxu0
      %v1112 = vadd.f32 0.0, %v1111
      %v1113 = vpop.f32.mrf.mxu0
      %1114 = vmatprep.mubr.f32.mxu0 0.0
      %1115 = vmatmul.mubr.f32.gmra.mxu0 %v414
      %v1116 = vpop.f32.mrf.mxu0
      %v1117 = vadd.f32 0.0, %v1116
      %v1118 = vpop.f32.mrf.mxu0
      %1119 = vmatprep.mubr.f32.mxu0 0.0
      %1120 = vmatmul.mubr.f32.gmra.mxu0 %v417
      %v1121 = vpop.f32.mrf.mxu0
      %v1122 = vadd.f32 0.0, %v1121
      %v1123 = vpop.f32.mrf.mxu0
      %1124 = vmatprep.mubr.f32.mxu0 0.0
      %1125 = vmatmul.mubr.f32.gmra.mxu0 %v420
      %v1126 = vpop.f32.mrf.mxu0
      %v1127 = vadd.f32 0.0, %v1126
      %v1128 = vpop.f32.mrf.mxu0
      %1129 = vmatprep.mubr.f32.mxu0 0.0
      %1130 = vmatmul.mubr.f32.gmra.mxu0 %v423
      %v1131 = vpop.f32.mrf.mxu0
      %v1132 = vadd.f32 0.0, %v1131
      %v1133 = vpop.f32.mrf.mxu0
      %1134 = vmatprep.mubr.f32.mxu0 0.0
      %1135 = vmatmul.mubr.f32.gmra.mxu0 %v426
      %v1136 = vpop.f32.mrf.mxu0
      %v1137 = vadd.f32 0.0, %v1136
      %v1138 = vpop.f32.mrf.mxu0
      %1139 = vmatprep.mubr.f32.mxu0 0.0
      %1140 = vmatmul.mubr.f32.gmra.mxu0 %v429
      %v1141 = vpop.f32.mrf.mxu0
      %v1142 = vadd.f32 0.0, %v1141
      %v1143 = vpop.f32.mrf.mxu0
      %1144 = vmatprep.mubr.f32.mxu0 0.0
      %1145 = vmatmul.mubr.f32.gmra.mxu0 %v432
      %v1146 = vpop.f32.mrf.mxu0
      %v1147 = vadd.f32 0.0, %v1146
      %v1148 = vpop.f32.mrf.mxu0
      %1149 = vmatprep.mubr.f32.mxu0 0.0
      %1150 = vmatmul.mubr.f32.gmra.mxu0 %v435
      %v1151 = vpop.f32.mrf.mxu0
      %v1152 = vadd.f32 0.0, %v1151
      %v1153 = vpop.f32.mrf.mxu0
      %1154 = vmatprep.mubr.f32.mxu0 0.0
      %1155 = vmatmul.mubr.f32.gmra.mxu0 %v438
      %v1156 = vpop.f32.mrf.mxu0
      %v1157 = vadd.f32 0.0, %v1156
      %v1158 = vpop.f32.mrf.mxu0
      %1159 = vmatprep.mubr.f32.mxu0 0.0
      %1160 = vmatmul.mubr.f32.gmra.mxu0 %v441
      %v1161 = vpop.f32.mrf.mxu0
      %v1162 = vadd.f32 0.0, %v1161
      %v1163 = vpop.f32.mrf.mxu0
      %1164 = vmatprep.mubr.f32.mxu0 0.0
      %1165 = vmatmul.mubr.f32.gmra.mxu0 %v444
      %v1166 = vpop.f32.mrf.mxu0
      %v1167 = vadd.f32 0.0, %v1166
      %v1168 = vpop.f32.mrf.mxu0
      %1169 = vmatprep.mubr.f32.mxu0 0.0
      %1170 = vmatmul.mubr.f32.gmra.mxu0 %v447
      %v1171 = vpop.f32.mrf.mxu0
      %v1172 = vadd.f32 0.0, %v1171
      %v1173 = vpop.f32.mrf.mxu0
      %1174 = vmatprep.mubr.f32.mxu0 0.0
      %1175 = vmatmul.mubr.f32.gmra.mxu0 %v450
      %v1176 = vpop.f32.mrf.mxu0
      %v1177 = vadd.f32 0.0, %v1176
      %v1178 = vpop.f32.mrf.mxu0
      %1179 = vmatprep.mubr.f32.mxu0 0.0
      %1180 = vmatmul.mubr.f32.gmra.mxu0 %v453
      %v1181 = vpop.f32.mrf.mxu0
      %v1182 = vadd.f32 0.0, %v1181
      %v1183 = vpop.f32.mrf.mxu0
      %1184 = vmatprep.mubr.f32.mxu0 0.0
      %1185 = vmatmul.mubr.f32.gmra.mxu0 %v456
      %v1186 = vpop.f32.mrf.mxu0
      %v1187 = vadd.f32 0.0, %v1186
      %v1188 = vpop.f32.mrf.mxu0
      %1189 = vmatprep.mubr.f32.mxu0 0.0
      %1190 = vmatmul.mubr.f32.gmra.mxu0 %v459
      %v1191 = vpop.f32.mrf.mxu0
      %v1192 = vadd.f32 0.0, %v1191
      %v1193 = vpop.f32.mrf.mxu0
      %1194 = vmatprep.mubr.f32.mxu0 0.0
      %1195 = vmatmul.mubr.f32.gmra.mxu0 %v462
      %v1196 = vpop.f32.mrf.mxu0
      %v1197 = vadd.f32 0.0, %v1196
      %v1198 = vpop.f32.mrf.mxu0
      %1199 = vmatprep.mubr.f32.mxu0 0.0
      %1200 = vmatmul.mubr.f32.gmra.mxu0 %v465
      %v1201 = vpop.f32.mrf.mxu0
      %v1202 = vadd.f32 0.0, %v1201
      %v1203 = vpop.f32.mrf.mxu0
      %1204 = vmatprep.mubr.f32.mxu0 0.0
      %1205 = vmatmul.mubr.f32.gmra.mxu0 %v468
      %v1206 = vpop.f32.mrf.mxu0
      %v1207 = vadd.f32 0.0, %v1206
      %v1208 = vpop.f32.mrf.mxu0
      %1209 = vmatprep.mubr.f32.mxu0 0.0
      %1210 = vmatmul.mubr.f32.gmra.mxu0 %v471
      %v1211 = vpop.f32.mrf.mxu0
      %v1212 = vadd.f32 0.0, %v1211
      %v1213 = vpop.f32.mrf.mxu0
      %1214 = vmatprep.mubr.f32.mxu0 0.0
      %1215 = vmatmul.mubr.f32.gmra.mxu0 %v474
      %v1216 = vpop.f32.mrf.mxu0
      %v1217 = vadd.f32 0.0, %v1216
      %v1218 = vpop.f32.mrf.mxu0
      %1219 = vmatprep.mubr.f32.mxu0 0.0
      %1220 = vmatmul.mubr.f32.gmra.mxu0 %v477
      %v1221 = vpop.f32.mrf.mxu0
      %v1222 = vadd.f32 0.0, %v1221
      %v1223 = vpop.f32.mrf.mxu0
      %1224 = vmatprep.mubr.f32.mxu0 0.0
      %1225 = vmatmul.mubr.f32.gmra.mxu0 %v480
      %v1226 = vpop.f32.mrf.mxu0
      %v1227 = vadd.f32 0.0, %v1226
      %v1228 = vpop.f32.mrf.mxu0
      %1229 = vmatprep.mubr.f32.mxu0 0.0
      %1230 = vmatmul.mubr.f32.gmra.mxu0 %v483
      %v1231 = vpop.f32.mrf.mxu0
      %v1232 = vadd.f32 0.0, %v1231
      %v1233 = vpop.f32.mrf.mxu0
      %1234 = vmatprep.mubr.f32.mxu0 0.0
      %1235 = vmatmul.mubr.f32.gmra.mxu0 %v486
      %v1236 = vpop.f32.mrf.mxu0
      %v1237 = vadd.f32 0.0, %v1236
      %v1238 = vpop.f32.mrf.mxu0
      %1239 = vmatprep.mubr.f32.mxu0 0.0
      %1240 = vmatmul.mubr.f32.gmra.mxu0 %v489
      %v1241 = vpop.f32.mrf.mxu0
      %v1242 = vadd.f32 0.0, %v1241
      %v1243 = vpop.f32.mrf.mxu0
      %1244 = vmatprep.mubr.f32.mxu0 0.0
      %1245 = vmatmul.mubr.f32.gmra.mxu0 %v492
      %v1246 = vpop.f32.mrf.mxu0
      %v1247 = vadd.f32 0.0, %v1246
      %v1248 = vpop.f32.mrf.mxu0
      %1249 = vmatprep.mubr.f32.mxu0 0.0
      %1250 = vmatmul.mubr.f32.gmra.mxu0 %v495
      %v1251 = vpop.f32.mrf.mxu0
      %v1252 = vadd.f32 0.0, %v1251
      %v1253 = vpop.f32.mrf.mxu0
      %1254 = vmatprep.mubr.f32.mxu0 0.0
      %1255 = vmatmul.mubr.f32.gmra.mxu0 %v498
      %v1256 = vpop.f32.mrf.mxu0
      %v1257 = vadd.f32 0.0, %v1256
      %v1258 = vpop.f32.mrf.mxu0
      %1259 = vmatprep.mubr.f32.mxu0 0.0
      %1260 = vmatmul.mubr.f32.gmra.mxu0 %v501
      %v1261 = vpop.f32.mrf.mxu0
      %v1262 = vadd.f32 0.0, %v1261
      %v1263 = vpop.f32.mrf.mxu0
      %1264 = vmatprep.mubr.f32.mxu0 0.0
      %1265 = vmatmul.mubr.f32.gmra.mxu0 %v504
      %v1266 = vpop.f32.mrf.mxu0
      %v1267 = vadd.f32 0.0, %v1266
      %v1268 = vpop.f32.mrf.mxu0
      %1269 = vmatprep.mubr.f32.mxu0 0.0
      %1270 = vmatmul.mubr.f32.gmra.mxu0 %v507
      %v1271 = vpop.f32.mrf.mxu0
      %v1272 = vadd.f32 0.0, %v1271
      %v1273 = vpop.f32.mrf.mxu0
      %1274 = vmatprep.mubr.f32.mxu0 0.0
      %1275 = vmatmul.mubr.f32.gmra.mxu0 %v510
      %v1276 = vpop.f32.mrf.mxu0
      %v1277 = vadd.f32 0.0, %v1276
      %v1278 = vpop.f32.mrf.mxu0
      %1279 = vmatprep.mubr.f32.mxu0 0.0
      %1280 = vmatmul.mubr.f32.gmra.mxu0 %v513
      %v1281 = vpop.f32.mrf.mxu0
      %v1282 = vadd.f32 0.0, %v1281
      %v1283 = vpop.f32.mrf.mxu0
      %1284 = vmatprep.mubr.f32.mxu0 0.0
      %1285 = vmatmul.mubr.f32.gmra.mxu0 %v516
      %v1286 = vpop.f32.mrf.mxu0
      %v1287 = vadd.f32 0.0, %v1286
      %v1288 = vpop.f32.mrf.mxu0
      %1289 = vmatprep.mubr.f32.mxu0 0.0
      %1290 = vmatmul.mubr.f32.gmra.mxu0 %v519
      %v1291 = vpop.f32.mrf.mxu0
      %v1292 = vadd.f32 0.0, %v1291
      %v1293 = vpop.f32.mrf.mxu0
      %1294 = vdwg.mxu0
      %v1295 = vld [vmem:[%s3] sm:$0xff]
      %v1296 = vld [vmem:[%s3 + $0x8] sm:$0xff]
      %v1297 = vld [vmem:[%s3 + $0x10] sm:$0xff]
      %v1298 = vld [vmem:[%s3 + $0x18] sm:$0xff]
      %1299 = vmatprep.subr.mxu0 0.0
      %1300 = vmatpush1.msra.mxu0 0.0
      %1301 = vmatprep.subr.mxu0 0.0
      %1302 = vmatpush1.msra.mxu0 0.0
      %1303 = vmatprep.subr.mxu0 0.0
      %1304 = vmatpush1.msra.mxu0 0.0
      %1305 = vmatprep.subr.mxu0 0.0
      %1306 = vmatpush1.msra.mxu0 0.0
      %1307 = vmatprep.subr.mxu0 0.0
      %1308 = vmatpush1.msra.mxu0 0.0
      %1309 = vmatprep.subr.mxu0 0.0
      %1310 = vmatpush1.msra.mxu0 0.0
      %1311 = vmatprep.subr.mxu0 0.0
      %1312 = vmatpush1.msra.mxu0 0.0
      %1313 = vmatprep.subr.mxu0 0.0
      %1314 = vmatpush1.msra.mxu0 0.0
      %1315 = vmatprep.subr.mxu0 0.0
      %1316 = vmatpush1.msra.mxu0 0.0
      %1317 = vmatprep.subr.mxu0 0.0
      %1318 = vmatpush1.msra.mxu0 0.0
      %1319 = vmatprep.subr.mxu0 0.0
      %1320 = vmatpush1.msra.mxu0 0.0
      %1321 = vmatprep.subr.mxu0 0.0
      %1322 = vmatpush1.msra.mxu0 0.0
      %1323 = vmatprep.subr.mxu0 0.0
      %1324 = vmatpush1.msra.mxu0 %v1298
      %1325 = vmatprep.subr.mxu0 0.0
      %1326 = vmatpush1.msra.mxu0 %v1297
      %1327 = vmatprep.subr.mxu0 0.0
      %1328 = vmatpush1.msra.mxu0 %v1296
      %1329 = vmatprep.subr.mxu0 0.0
      %1330 = vmatpush1.msra.mxu0 %v1295
      %1331 = vmatprep.subr.mxu0 0.0
      %1332 = vmatpush2.msra.mxu0 0.0
      %1333 = vmatprep.subr.mxu0 0.0
      %1334 = vmatpush2.msra.mxu0 0.0
      %1335 = vmatprep.subr.mxu0 0.0
      %1336 = vmatpush2.msra.mxu0 0.0
      %1337 = vmatprep.subr.mxu0 0.0
      %1338 = vmatpush2.msra.mxu0 0.0
      %1339 = vmatprep.subr.mxu0 0.0
      %1340 = vmatpush2.msra.mxu0 0.0
      %1341 = vmatprep.subr.mxu0 0.0
      %1342 = vmatpush2.msra.mxu0 0.0
      %1343 = vmatprep.subr.mxu0 0.0
      %1344 = vmatpush2.msra.mxu0 0.0
      %1345 = vmatprep.subr.mxu0 0.0
      %1346 = vmatpush2.msra.mxu0 0.0
      %1347 = vmatprep.subr.mxu0 0.0
      %1348 = vmatpush2.msra.mxu0 0.0
      %1349 = vmatprep.subr.mxu0 0.0
      %1350 = vmatpush2.msra.mxu0 0.0
      %1351 = vmatprep.subr.mxu0 0.0
      %1352 = vmatpush2.msra.mxu0 0.0
      %1353 = vmatprep.subr.mxu0 0.0
      %1354 = vmatpush2.msra.mxu0 0.0
      %1355 = vmatprep.subr.mxu0 0.0
      %1356 = vmatpush2.msra.mxu0 0.0
      %1357 = vmatprep.subr.mxu0 0.0
      %1358 = vmatpush2.msra.mxu0 0.0
      %1359 = vmatprep.subr.mxu0 0.0
      %1360 = vmatpush2.msra.mxu0 0.0
      %1361 = vmatprep.subr.mxu0 0.0
      %1362 = vmatpush2.msra.mxu0 0.0
      %1363 = vmatprep.mubr.f32.mxu0 0.0
      %1364 = vmatmul.mubr.f32.gmra.mxu0 %v330
      %v1365 = vpop.f32.mrf.mxu0
      %v1366 = vadd.f32 0.0, %v1365
      %v1367 = vpop.f32.mrf.mxu0
      %1368 = vmatprep.mubr.f32.mxu0 0.0
      %1369 = vmatmul.mubr.f32.gmra.mxu0 %v333
      %v1370 = vpop.f32.mrf.mxu0
      %v1371 = vadd.f32 0.0, %v1370
      %v1372 = vpop.f32.mrf.mxu0
      %1373 = vmatprep.mubr.f32.mxu0 0.0
      %1374 = vmatmul.mubr.f32.gmra.mxu0 %v336
      %v1375 = vpop.f32.mrf.mxu0
      %v1376 = vadd.f32 0.0, %v1375
      %v1377 = vpop.f32.mrf.mxu0
      %1378 = vmatprep.mubr.f32.mxu0 0.0
      %1379 = vmatmul.mubr.f32.gmra.mxu0 %v339
      %v1380 = vpop.f32.mrf.mxu0
      %v1381 = vadd.f32 0.0, %v1380
      %v1382 = vpop.f32.mrf.mxu0
      %1383 = vmatprep.mubr.f32.mxu0 0.0
      %1384 = vmatmul.mubr.f32.gmra.mxu0 %v342
      %v1385 = vpop.f32.mrf.mxu0
      %v1386 = vadd.f32 0.0, %v1385
      %v1387 = vpop.f32.mrf.mxu0
      %1388 = vmatprep.mubr.f32.mxu0 0.0
      %1389 = vmatmul.mubr.f32.gmra.mxu0 %v345
      %v1390 = vpop.f32.mrf.mxu0
      %v1391 = vadd.f32 0.0, %v1390
      %v1392 = vpop.f32.mrf.mxu0
      %1393 = vmatprep.mubr.f32.mxu0 0.0
      %1394 = vmatmul.mubr.f32.gmra.mxu0 %v348
      %v1395 = vpop.f32.mrf.mxu0
      %v1396 = vadd.f32 0.0, %v1395
      %v1397 = vpop.f32.mrf.mxu0
      %1398 = vmatprep.mubr.f32.mxu0 0.0
      %1399 = vmatmul.mubr.f32.gmra.mxu0 %v351
      %v1400 = vpop.f32.mrf.mxu0
      %v1401 = vadd.f32 0.0, %v1400
      %v1402 = vpop.f32.mrf.mxu0
      %1403 = vmatprep.mubr.f32.mxu0 0.0
      %1404 = vmatmul.mubr.f32.gmra.mxu0 %v354
      %v1405 = vpop.f32.mrf.mxu0
      %v1406 = vadd.f32 0.0, %v1405
      %v1407 = vpop.f32.mrf.mxu0
      %1408 = vmatprep.mubr.f32.mxu0 0.0
      %1409 = vmatmul.mubr.f32.gmra.mxu0 %v357
      %v1410 = vpop.f32.mrf.mxu0
      %v1411 = vadd.f32 0.0, %v1410
      %v1412 = vpop.f32.mrf.mxu0
      %1413 = vmatprep.mubr.f32.mxu0 0.0
      %1414 = vmatmul.mubr.f32.gmra.mxu0 %v360
      %v1415 = vpop.f32.mrf.mxu0
      %v1416 = vadd.f32 0.0, %v1415
      %v1417 = vpop.f32.mrf.mxu0
      %1418 = vmatprep.mubr.f32.mxu0 0.0
      %1419 = vmatmul.mubr.f32.gmra.mxu0 %v363
      %v1420 = vpop.f32.mrf.mxu0
      %v1421 = vadd.f32 0.0, %v1420
      %v1422 = vpop.f32.mrf.mxu0
      %1423 = vmatprep.mubr.f32.mxu0 0.0
      %1424 = vmatmul.mubr.f32.gmra.mxu0 %v366
      %v1425 = vpop.f32.mrf.mxu0
      %v1426 = vadd.f32 0.0, %v1425
      %v1427 = vpop.f32.mrf.mxu0
      %1428 = vmatprep.mubr.f32.mxu0 0.0
      %1429 = vmatmul.mubr.f32.gmra.mxu0 %v369
      %v1430 = vpop.f32.mrf.mxu0
      %v1431 = vadd.f32 0.0, %v1430
      %v1432 = vpop.f32.mrf.mxu0
      %1433 = vmatprep.mubr.f32.mxu0 0.0
      %1434 = vmatmul.mubr.f32.gmra.mxu0 %v372
      %v1435 = vpop.f32.mrf.mxu0
      %v1436 = vadd.f32 0.0, %v1435
      %v1437 = vpop.f32.mrf.mxu0
      %1438 = vmatprep.mubr.f32.mxu0 0.0
      %1439 = vmatmul.mubr.f32.gmra.mxu0 %v375
      %v1440 = vpop.f32.mrf.mxu0
      %v1441 = vadd.f32 0.0, %v1440
      %v1442 = vpop.f32.mrf.mxu0
      %1443 = vmatprep.mubr.f32.mxu0 0.0
      %1444 = vmatmul.mubr.f32.gmra.mxu0 %v378
      %v1445 = vpop.f32.mrf.mxu0
      %v1446 = vadd.f32 0.0, %v1445
      %v1447 = vpop.f32.mrf.mxu0
      %1448 = vmatprep.mubr.f32.mxu0 0.0
      %1449 = vmatmul.mubr.f32.gmra.mxu0 %v381
      %v1450 = vpop.f32.mrf.mxu0
      %v1451 = vadd.f32 0.0, %v1450
      %v1452 = vpop.f32.mrf.mxu0
      %1453 = vmatprep.mubr.f32.mxu0 0.0
      %1454 = vmatmul.mubr.f32.gmra.mxu0 %v384
      %v1455 = vpop.f32.mrf.mxu0
      %v1456 = vadd.f32 0.0, %v1455
      %v1457 = vpop.f32.mrf.mxu0
      %1458 = vmatprep.mubr.f32.mxu0 0.0
      %1459 = vmatmul.mubr.f32.gmra.mxu0 %v387
      %v1460 = vpop.f32.mrf.mxu0
      %v1461 = vadd.f32 0.0, %v1460
      %v1462 = vpop.f32.mrf.mxu0
      %1463 = vmatprep.mubr.f32.mxu0 0.0
      %1464 = vmatmul.mubr.f32.gmra.mxu0 %v390
      %v1465 = vpop.f32.mrf.mxu0
      %v1466 = vadd.f32 0.0, %v1465
      %v1467 = vpop.f32.mrf.mxu0
      %1468 = vmatprep.mubr.f32.mxu0 0.0
      %1469 = vmatmul.mubr.f32.gmra.mxu0 %v393
      %v1470 = vpop.f32.mrf.mxu0
      %v1471 = vadd.f32 0.0, %v1470
      %v1472 = vpop.f32.mrf.mxu0
      %1473 = vmatprep.mubr.f32.mxu0 0.0
      %1474 = vmatmul.mubr.f32.gmra.mxu0 %v396
      %v1475 = vpop.f32.mrf.mxu0
      %v1476 = vadd.f32 0.0, %v1475
      %v1477 = vpop.f32.mrf.mxu0
      %1478 = vmatprep.mubr.f32.mxu0 0.0
      %1479 = vmatmul.mubr.f32.gmra.mxu0 %v399
      %v1480 = vpop.f32.mrf.mxu0
      %v1481 = vadd.f32 0.0, %v1480
      %v1482 = vpop.f32.mrf.mxu0
      %1483 = vmatprep.mubr.f32.mxu0 0.0
      %1484 = vmatmul.mubr.f32.gmra.mxu0 %v402
      %v1485 = vpop.f32.mrf.mxu0
      %v1486 = vadd.f32 0.0, %v1485
      %v1487 = vpop.f32.mrf.mxu0
      %1488 = vmatprep.mubr.f32.mxu0 0.0
      %1489 = vmatmul.mubr.f32.gmra.mxu0 %v405
      %v1490 = vpop.f32.mrf.mxu0
      %v1491 = vadd.f32 0.0, %v1490
      %v1492 = vpop.f32.mrf.mxu0
      %1493 = vmatprep.mubr.f32.mxu0 0.0
      %1494 = vmatmul.mubr.f32.gmra.mxu0 %v408
      %v1495 = vpop.f32.mrf.mxu0
      %v1496 = vadd.f32 0.0, %v1495
      %v1497 = vpop.f32.mrf.mxu0
      %1498 = vmatprep.mubr.f32.mxu0 0.0
      %1499 = vmatmul.mubr.f32.gmra.mxu0 %v411
      %v1500 = vpop.f32.mrf.mxu0
      %v1501 = vadd.f32 0.0, %v1500
      %v1502 = vpop.f32.mrf.mxu0
      %1503 = vmatprep.mubr.f32.mxu0 0.0
      %1504 = vmatmul.mubr.f32.gmra.mxu0 %v414
      %v1505 = vpop.f32.mrf.mxu0
      %v1506 = vadd.f32 0.0, %v1505
      %v1507 = vpop.f32.mrf.mxu0
      %1508 = vmatprep.mubr.f32.mxu0 0.0
      %1509 = vmatmul.mubr.f32.gmra.mxu0 %v417
      %v1510 = vpop.f32.mrf.mxu0
      %v1511 = vadd.f32 0.0, %v1510
      %v1512 = vpop.f32.mrf.mxu0
      %1513 = vmatprep.mubr.f32.mxu0 0.0
      %1514 = vmatmul.mubr.f32.gmra.mxu0 %v420
      %v1515 = vpop.f32.mrf.mxu0
      %v1516 = vadd.f32 0.0, %v1515
      %v1517 = vpop.f32.mrf.mxu0
      %1518 = vmatprep.mubr.f32.mxu0 0.0
      %1519 = vmatmul.mubr.f32.gmra.mxu0 %v423
      %v1520 = vpop.f32.mrf.mxu0
      %v1521 = vadd.f32 0.0, %v1520
      %v1522 = vpop.f32.mrf.mxu0
      %1523 = vmatprep.mubr.f32.mxu0 0.0
      %1524 = vmatmul.mubr.f32.gmra.mxu0 %v426
      %v1525 = vpop.f32.mrf.mxu0
      %v1526 = vadd.f32 0.0, %v1525
      %v1527 = vpop.f32.mrf.mxu0
      %1528 = vmatprep.mubr.f32.mxu0 0.0
      %1529 = vmatmul.mubr.f32.gmra.mxu0 %v429
      %v1530 = vpop.f32.mrf.mxu0
      %v1531 = vadd.f32 0.0, %v1530
      %v1532 = vpop.f32.mrf.mxu0
      %1533 = vmatprep.mubr.f32.mxu0 0.0
      %1534 = vmatmul.mubr.f32.gmra.mxu0 %v432
      %v1535 = vpop.f32.mrf.mxu0
      %v1536 = vadd.f32 0.0, %v1535
      %v1537 = vpop.f32.mrf.mxu0
      %1538 = vmatprep.mubr.f32.mxu0 0.0
      %1539 = vmatmul.mubr.f32.gmra.mxu0 %v435
      %v1540 = vpop.f32.mrf.mxu0
      %v1541 = vadd.f32 0.0, %v1540
      %v1542 = vpop.f32.mrf.mxu0
      %1543 = vmatprep.mubr.f32.mxu0 0.0
      %1544 = vmatmul.mubr.f32.gmra.mxu0 %v438
      %v1545 = vpop.f32.mrf.mxu0
      %v1546 = vadd.f32 0.0, %v1545
      %v1547 = vpop.f32.mrf.mxu0
      %1548 = vmatprep.mubr.f32.mxu0 0.0
      %1549 = vmatmul.mubr.f32.gmra.mxu0 %v441
      %v1550 = vpop.f32.mrf.mxu0
      %v1551 = vadd.f32 0.0, %v1550
      %v1552 = vpop.f32.mrf.mxu0
      %1553 = vmatprep.mubr.f32.mxu0 0.0
      %1554 = vmatmul.mubr.f32.gmra.mxu0 %v444
      %v1555 = vpop.f32.mrf.mxu0
      %v1556 = vadd.f32 0.0, %v1555
      %v1557 = vpop.f32.mrf.mxu0
      %1558 = vmatprep.mubr.f32.mxu0 0.0
      %1559 = vmatmul.mubr.f32.gmra.mxu0 %v447
      %v1560 = vpop.f32.mrf.mxu0
      %v1561 = vadd.f32 0.0, %v1560
      %v1562 = vpop.f32.mrf.mxu0
      %1563 = vmatprep.mubr.f32.mxu0 0.0
      %1564 = vmatmul.mubr.f32.gmra.mxu0 %v450
      %v1565 = vpop.f32.mrf.mxu0
      %v1566 = vadd.f32 0.0, %v1565
      %v1567 = vpop.f32.mrf.mxu0
      %1568 = vmatprep.mubr.f32.mxu0 0.0
      %1569 = vmatmul.mubr.f32.gmra.mxu0 %v453
      %v1570 = vpop.f32.mrf.mxu0
      %v1571 = vadd.f32 0.0, %v1570
      %v1572 = vpop.f32.mrf.mxu0
      %1573 = vmatprep.mubr.f32.mxu0 0.0
      %1574 = vmatmul.mubr.f32.gmra.mxu0 %v456
      %v1575 = vpop.f32.mrf.mxu0
      %v1576 = vadd.f32 0.0, %v1575
      %v1577 = vpop.f32.mrf.mxu0
      %1578 = vmatprep.mubr.f32.mxu0 0.0
      %1579 = vmatmul.mubr.f32.gmra.mxu0 %v459
      %v1580 = vpop.f32.mrf.mxu0
      %v1581 = vadd.f32 0.0, %v1580
      %v1582 = vpop.f32.mrf.mxu0
      %1583 = vmatprep.mubr.f32.mxu0 0.0
      %1584 = vmatmul.mubr.f32.gmra.mxu0 %v462
      %v1585 = vpop.f32.mrf.mxu0
      %v1586 = vadd.f32 0.0, %v1585
      %v1587 = vpop.f32.mrf.mxu0
      %1588 = vmatprep.mubr.f32.mxu0 0.0
      %1589 = vmatmul.mubr.f32.gmra.mxu0 %v465
      %v1590 = vpop.f32.mrf.mxu0
      %v1591 = vadd.f32 0.0, %v1590
      %v1592 = vpop.f32.mrf.mxu0
      %1593 = vmatprep.mubr.f32.mxu0 0.0
      %1594 = vmatmul.mubr.f32.gmra.mxu0 %v468
      %v1595 = vpop.f32.mrf.mxu0
      %v1596 = vadd.f32 0.0, %v1595
      %v1597 = vpop.f32.mrf.mxu0
      %1598 = vmatprep.mubr.f32.mxu0 0.0
      %1599 = vmatmul.mubr.f32.gmra.mxu0 %v471
      %v1600 = vpop.f32.mrf.mxu0
      %v1601 = vadd.f32 0.0, %v1600
      %v1602 = vpop.f32.mrf.mxu0
      %1603 = vmatprep.mubr.f32.mxu0 0.0
      %1604 = vmatmul.mubr.f32.gmra.mxu0 %v474
      %v1605 = vpop.f32.mrf.mxu0
      %v1606 = vadd.f32 0.0, %v1605
      %v1607 = vpop.f32.mrf.mxu0
      %1608 = vmatprep.mubr.f32.mxu0 0.0
      %1609 = vmatmul.mubr.f32.gmra.mxu0 %v477
      %v1610 = vpop.f32.mrf.mxu0
      %v1611 = vadd.f32 0.0, %v1610
      %v1612 = vpop.f32.mrf.mxu0
      %1613 = vmatprep.mubr.f32.mxu0 0.0
      %1614 = vmatmul.mubr.f32.gmra.mxu0 %v480
      %v1615 = vpop.f32.mrf.mxu0
      %v1616 = vadd.f32 0.0, %v1615
      %v1617 = vpop.f32.mrf.mxu0
      %1618 = vmatprep.mubr.f32.mxu0 0.0
      %1619 = vmatmul.mubr.f32.gmra.mxu0 %v483
      %v1620 = vpop.f32.mrf.mxu0
      %v1621 = vadd.f32 0.0, %v1620
      %v1622 = vpop.f32.mrf.mxu0
      %1623 = vmatprep.mubr.f32.mxu0 0.0
      %1624 = vmatmul.mubr.f32.gmra.mxu0 %v486
      %v1625 = vpop.f32.mrf.mxu0
      %v1626 = vadd.f32 0.0, %v1625
      %v1627 = vpop.f32.mrf.mxu0
      %1628 = vmatprep.mubr.f32.mxu0 0.0
      %1629 = vmatmul.mubr.f32.gmra.mxu0 %v489
      %v1630 = vpop.f32.mrf.mxu0
      %v1631 = vadd.f32 0.0, %v1630
      %v1632 = vpop.f32.mrf.mxu0
      %1633 = vmatprep.mubr.f32.mxu0 0.0
      %1634 = vmatmul.mubr.f32.gmra.mxu0 %v492
      %v1635 = vpop.f32.mrf.mxu0
      %v1636 = vadd.f32 0.0, %v1635
      %v1637 = vpop.f32.mrf.mxu0
      %1638 = vmatprep.mubr.f32.mxu0 0.0
      %1639 = vmatmul.mubr.f32.gmra.mxu0 %v495
      %v1640 = vpop.f32.mrf.mxu0
      %v1641 = vadd.f32 0.0, %v1640
      %v1642 = vpop.f32.mrf.mxu0
      %1643 = vmatprep.mubr.f32.mxu0 0.0
      %1644 = vmatmul.mubr.f32.gmra.mxu0 %v498
      %v1645 = vpop.f32.mrf.mxu0
      %v1646 = vadd.f32 0.0, %v1645
      %v1647 = vpop.f32.mrf.mxu0
      %1648 = vmatprep.mubr.f32.mxu0 0.0
      %1649 = vmatmul.mubr.f32.gmra.mxu0 %v501
      %v1650 = vpop.f32.mrf.mxu0
      %v1651 = vadd.f32 0.0, %v1650
      %v1652 = vpop.f32.mrf.mxu0
      %1653 = vmatprep.mubr.f32.mxu0 0.0
      %1654 = vmatmul.mubr.f32.gmra.mxu0 %v504
      %v1655 = vpop.f32.mrf.mxu0
      %v1656 = vadd.f32 0.0, %v1655
      %v1657 = vpop.f32.mrf.mxu0
      %1658 = vmatprep.mubr.f32.mxu0 0.0
      %1659 = vmatmul.mubr.f32.gmra.mxu0 %v507
      %v1660 = vpop.f32.mrf.mxu0
      %v1661 = vadd.f32 0.0, %v1660
      %v1662 = vpop.f32.mrf.mxu0
      %1663 = vmatprep.mubr.f32.mxu0 0.0
      %1664 = vmatmul.mubr.f32.gmra.mxu0 %v510
      %v1665 = vpop.f32.mrf.mxu0
      %v1666 = vadd.f32 0.0, %v1665
      %v1667 = vpop.f32.mrf.mxu0
      %1668 = vmatprep.mubr.f32.mxu0 0.0
      %1669 = vmatmul.mubr.f32.gmra.mxu0 %v513
      %v1670 = vpop.f32.mrf.mxu0
      %v1671 = vadd.f32 0.0, %v1670
      %v1672 = vpop.f32.mrf.mxu0
      %1673 = vmatprep.mubr.f32.mxu0 0.0
      %1674 = vmatmul.mubr.f32.gmra.mxu0 %v516
      %v1675 = vpop.f32.mrf.mxu0
      %v1676 = vadd.f32 0.0, %v1675
      %v1677 = vpop.f32.mrf.mxu0
      %1678 = vmatprep.mubr.f32.mxu0 0.0
      %1679 = vmatmul.mubr.f32.gmra.mxu0 %v519
      %v1680 = vpop.f32.mrf.mxu0
      %v1681 = vadd.f32 0.0, %v1680
      %v1682 = vpop.f32.mrf.mxu0
      %1683 = vdwg.mxu0
      %v1685 = vsel %vm328, %v588, 0
      %v1688 = vsel %vm328, %v593, 0
      %v1691 = vsel %vm328, %v598, 0
      %v1694 = vsel %vm328, %v603, 0
      %v1697 = vsel %vm328, %v608, 0
      %v1700 = vsel %vm328, %v613, 0
      %v1703 = vsel %vm328, %v618, 0
      %v1706 = vsel %vm328, %v623, 0
      %v1709 = vsel %vm328, %v977, 0
      %v1712 = vsel %vm328, %v982, 0
      %v1715 = vsel %vm328, %v987, 0
      %v1718 = vsel %vm328, %v992, 0
      %v1721 = vsel %vm328, %v997, 0
      %v1724 = vsel %vm328, %v1002, 0
      %v1727 = vsel %vm328, %v1007, 0
      %v1730 = vsel %vm328, %v1012, 0
      %1732 = vmatprep.subr.mxu0 0.0
      %1733 = vmatpush1.xpose.msra.mxu0 0.0
      %1734 = vmatprep.subr.mxu0 0.0
      %1735 = vmatpush1.xpose.msra.mxu0 0.0
      %1736 = vmatprep.subr.mxu0 0.0
      %1737 = vmatpush1.xpose.msra.mxu0 0.0
      %1738 = vmatprep.subr.mxu0 0.0
      %1739 = vmatpush1.xpose.msra.mxu0 0.0
      %1740 = vmatprep.subr.mxu0 0.0
      %1741 = vmatpush1.xpose.msra.mxu0 0.0
      %1742 = vmatprep.subr.mxu0 0.0
      %1743 = vmatpush1.xpose.msra.mxu0 0.0
      %1744 = vmatprep.subr.mxu0 0.0
      %1745 = vmatpush1.xpose.msra.mxu0 0.0
      %1746 = vmatprep.subr.mxu0 0.0
      %1747 = vmatpush1.xpose.msra.mxu0 0.0
      %1748 = vmatprep.subr.mxu0 0.0
      %1749 = vmatpush1.xpose.msra.mxu0 %v1730
      %1750 = vmatprep.subr.mxu0 0.0
      %1751 = vmatpush1.xpose.msra.mxu0 %v1727
      %1752 = vmatprep.subr.mxu0 0.0
      %1753 = vmatpush1.xpose.msra.mxu0 %v1724
      %1754 = vmatprep.subr.mxu0 0.0
      %1755 = vmatpush1.xpose.msra.mxu0 %v1721
      %1756 = vmatprep.subr.mxu0 0.0
      %1757 = vmatpush1.xpose.msra.mxu0 %v1718
      %1758 = vmatprep.subr.mxu0 0.0
      %1759 = vmatpush1.xpose.msra.mxu0 %v1715
      %1760 = vmatprep.subr.mxu0 0.0
      %1761 = vmatpush1.xpose.msra.mxu0 %v1712
      %1762 = vmatprep.subr.mxu0 0.0
      %1763 = vmatpush1.xpose.msra.mxu0 %v1709
      %1764 = vmatprep.subr.mxu0 0.0
      %1765 = vmatpush2.xpose.msra.mxu0 0.0
      %1766 = vmatprep.subr.mxu0 0.0
      %1767 = vmatpush2.xpose.msra.mxu0 0.0
      %1768 = vmatprep.subr.mxu0 0.0
      %1769 = vmatpush2.xpose.msra.mxu0 0.0
      %1770 = vmatprep.subr.mxu0 0.0
      %1771 = vmatpush2.xpose.msra.mxu0 0.0
      %1772 = vmatprep.subr.mxu0 0.0
      %1773 = vmatpush2.xpose.msra.mxu0 0.0
      %1774 = vmatprep.subr.mxu0 0.0
      %1775 = vmatpush2.xpose.msra.mxu0 0.0
      %1776 = vmatprep.subr.mxu0 0.0
      %1777 = vmatpush2.xpose.msra.mxu0 0.0
      %1778 = vmatprep.subr.mxu0 0.0
      %1779 = vmatpush2.xpose.msra.mxu0 0.0
      %1780 = vmatprep.subr.mxu0 0.0
      %1781 = vmatpush2.xpose.msra.mxu0 0.0
      %1782 = vmatprep.subr.mxu0 0.0
      %1783 = vmatpush2.xpose.msra.mxu0 0.0
      %1784 = vmatprep.subr.mxu0 0.0
      %1785 = vmatpush2.xpose.msra.mxu0 0.0
      %1786 = vmatprep.subr.mxu0 0.0
      %1787 = vmatpush2.xpose.msra.mxu0 0.0
      %1788 = vmatprep.subr.mxu0 0.0
      %1789 = vmatpush2.xpose.msra.mxu0 0.0
      %1790 = vmatprep.subr.mxu0 0.0
      %1791 = vmatpush2.xpose.msra.mxu0 0.0
      %1792 = vmatprep.subr.mxu0 0.0
      %1793 = vmatpush2.xpose.msra.mxu0 0.0
      %1794 = vmatprep.subr.mxu0 0.0
      %1795 = vmatpush2.xpose.msra.mxu0 0.0
      %1796 = vmatprep.mubr.f32.mxu0 0.0
      %1797 = vmatmul.mubr.f32.gmra.mxu0 %v1685
      %v1798 = vpop.f32.mrf.mxu0
      %v1799 = vadd.f32 0.0, %v1798
      %v1800 = vpop.f32.mrf.mxu0
      %1801 = vmatprep.mubr.f32.mxu0 0.0
      %1802 = vmatmul.mubr.f32.gmra.mxu0 %v1688
      %v1803 = vpop.f32.mrf.mxu0
      %v1804 = vadd.f32 0.0, %v1803
      %v1805 = vpop.f32.mrf.mxu0
      %1806 = vmatprep.mubr.f32.mxu0 0.0
      %1807 = vmatmul.mubr.f32.gmra.mxu0 %v1691
      %v1808 = vpop.f32.mrf.mxu0
      %v1809 = vadd.f32 0.0, %v1808
      %v1810 = vpop.f32.mrf.mxu0
      %1811 = vmatprep.mubr.f32.mxu0 0.0
      %1812 = vmatmul.mubr.f32.gmra.mxu0 %v1694
      %v1813 = vpop.f32.mrf.mxu0
      %v1814 = vadd.f32 0.0, %v1813
      %v1815 = vpop.f32.mrf.mxu0
      %1816 = vmatprep.mubr.f32.mxu0 0.0
      %1817 = vmatmul.mubr.f32.gmra.mxu0 %v1697
      %v1818 = vpop.f32.mrf.mxu0
      %v1819 = vadd.f32 0.0, %v1818
      %v1820 = vpop.f32.mrf.mxu0
      %1821 = vmatprep.mubr.f32.mxu0 0.0
      %1822 = vmatmul.mubr.f32.gmra.mxu0 %v1700
      %v1823 = vpop.f32.mrf.mxu0
      %v1824 = vadd.f32 0.0, %v1823
      %v1825 = vpop.f32.mrf.mxu0
      %1826 = vmatprep.mubr.f32.mxu0 0.0
      %1827 = vmatmul.mubr.f32.gmra.mxu0 %v1703
      %v1828 = vpop.f32.mrf.mxu0
      %v1829 = vadd.f32 0.0, %v1828
      %v1830 = vpop.f32.mrf.mxu0
      %1831 = vmatprep.mubr.f32.mxu0 0.0
      %1832 = vmatmul.mubr.f32.gmra.mxu0 %v1706
      %v1833 = vpop.f32.mrf.mxu0
      %v1834 = vadd.f32 0.0, %v1833
      %v1835 = vpop.f32.mrf.mxu0
      %1836 = vdwg.mxu0
      %v1838 = vsel %vm328, %v628, 0
      %v1841 = vsel %vm328, %v633, 0
      %v1844 = vsel %vm328, %v638, 0
      %v1847 = vsel %vm328, %v643, 0
      %v1850 = vsel %vm328, %v648, 0
      %v1853 = vsel %vm328, %v653, 0
      %v1856 = vsel %vm328, %v658, 0
      %v1859 = vsel %vm328, %v663, 0
      %v1862 = vsel %vm328, %v1017, 0
      %v1865 = vsel %vm328, %v1022, 0
      %v1868 = vsel %vm328, %v1027, 0
      %v1871 = vsel %vm328, %v1032, 0
      %v1874 = vsel %vm328, %v1037, 0
      %v1877 = vsel %vm328, %v1042, 0
      %v1880 = vsel %vm328, %v1047, 0
      %v1883 = vsel %vm328, %v1052, 0
      %1885 = vmatprep.subr.mxu0 0.0
      %1886 = vmatpush1.xpose.msra.mxu0 0.0
      %1887 = vmatprep.subr.mxu0 0.0
      %1888 = vmatpush1.xpose.msra.mxu0 0.0
      %1889 = vmatprep.subr.mxu0 0.0
      %1890 = vmatpush1.xpose.msra.mxu0 0.0
      %1891 = vmatprep.subr.mxu0 0.0
      %1892 = vmatpush1.xpose.msra.mxu0 0.0
      %1893 = vmatprep.subr.mxu0 0.0
      %1894 = vmatpush1.xpose.msra.mxu0 0.0
      %1895 = vmatprep.subr.mxu0 0.0
      %1896 = vmatpush1.xpose.msra.mxu0 0.0
      %1897 = vmatprep.subr.mxu0 0.0
      %1898 = vmatpush1.xpose.msra.mxu0 0.0
      %1899 = vmatprep.subr.mxu0 0.0
      %1900 = vmatpush1.xpose.msra.mxu0 0.0
      %1901 = vmatprep.subr.mxu0 0.0
      %1902 = vmatpush1.xpose.msra.mxu0 %v1883
      %1903 = vmatprep.subr.mxu0 0.0
      %1904 = vmatpush1.xpose.msra.mxu0 %v1880
      %1905 = vmatprep.subr.mxu0 0.0
      %1906 = vmatpush1.xpose.msra.mxu0 %v1877
      %1907 = vmatprep.subr.mxu0 0.0
      %1908 = vmatpush1.xpose.msra.mxu0 %v1874
      %1909 = vmatprep.subr.mxu0 0.0
      %1910 = vmatpush1.xpose.msra.mxu0 %v1871
      %1911 = vmatprep.subr.mxu0 0.0
      %1912 = vmatpush1.xpose.msra.mxu0 %v1868
      %1913 = vmatprep.subr.mxu0 0.0
      %1914 = vmatpush1.xpose.msra.mxu0 %v1865
      %1915 = vmatprep.subr.mxu0 0.0
      %1916 = vmatpush1.xpose.msra.mxu0 %v1862
      %1917 = vmatprep.subr.mxu0 0.0
      %1918 = vmatpush2.xpose.msra.mxu0 0.0
      %1919 = vmatprep.subr.mxu0 0.0
      %1920 = vmatpush2.xpose.msra.mxu0 0.0
      %1921 = vmatprep.subr.mxu0 0.0
      %1922 = vmatpush2.xpose.msra.mxu0 0.0
      %1923 = vmatprep.subr.mxu0 0.0
      %1924 = vmatpush2.xpose.msra.mxu0 0.0
      %1925 = vmatprep.subr.mxu0 0.0
      %1926 = vmatpush2.xpose.msra.mxu0 0.0
      %1927 = vmatprep.subr.mxu0 0.0
      %1928 = vmatpush2.xpose.msra.mxu0 0.0
      %1929 = vmatprep.subr.mxu0 0.0
      %1930 = vmatpush2.xpose.msra.mxu0 0.0
      %1931 = vmatprep.subr.mxu0 0.0
      %1932 = vmatpush2.xpose.msra.mxu0 0.0
      %1933 = vmatprep.subr.mxu0 0.0
      %1934 = vmatpush2.xpose.msra.mxu0 0.0
      %1935 = vmatprep.subr.mxu0 0.0
      %1936 = vmatpush2.xpose.msra.mxu0 0.0
      %1937 = vmatprep.subr.mxu0 0.0
      %1938 = vmatpush2.xpose.msra.mxu0 0.0
      %1939 = vmatprep.subr.mxu0 0.0
      %1940 = vmatpush2.xpose.msra.mxu0 0.0
      %1941 = vmatprep.subr.mxu0 0.0
      %1942 = vmatpush2.xpose.msra.mxu0 0.0
      %1943 = vmatprep.subr.mxu0 0.0
      %1944 = vmatpush2.xpose.msra.mxu0 0.0
      %1945 = vmatprep.subr.mxu0 0.0
      %1946 = vmatpush2.xpose.msra.mxu0 0.0
      %1947 = vmatprep.subr.mxu0 0.0
      %1948 = vmatpush2.xpose.msra.mxu0 0.0
      %1949 = vmatprep.mubr.f32.mxu0 0.0
      %1950 = vmatmul.mubr.f32.gmra.mxu0 %v1838
      %v1951 = vpop.f32.mrf.mxu0
      %v1952 = vadd.f32 0.0, %v1951
      %v1953 = vpop.f32.mrf.mxu0
      %1954 = vmatprep.mubr.f32.mxu0 0.0
      %1955 = vmatmul.mubr.f32.gmra.mxu0 %v1841
      %v1956 = vpop.f32.mrf.mxu0
      %v1957 = vadd.f32 0.0, %v1956
      %v1958 = vpop.f32.mrf.mxu0
      %1959 = vmatprep.mubr.f32.mxu0 0.0
      %1960 = vmatmul.mubr.f32.gmra.mxu0 %v1844
      %v1961 = vpop.f32.mrf.mxu0
      %v1962 = vadd.f32 0.0, %v1961
      %v1963 = vpop.f32.mrf.mxu0
      %1964 = vmatprep.mubr.f32.mxu0 0.0
      %1965 = vmatmul.mubr.f32.gmra.mxu0 %v1847
      %v1966 = vpop.f32.mrf.mxu0
      %v1967 = vadd.f32 0.0, %v1966
      %v1968 = vpop.f32.mrf.mxu0
      %1969 = vmatprep.mubr.f32.mxu0 0.0
      %1970 = vmatmul.mubr.f32.gmra.mxu0 %v1850
      %v1971 = vpop.f32.mrf.mxu0
      %v1972 = vadd.f32 0.0, %v1971
      %v1973 = vpop.f32.mrf.mxu0
      %1974 = vmatprep.mubr.f32.mxu0 0.0
      %1975 = vmatmul.mubr.f32.gmra.mxu0 %v1853
      %v1976 = vpop.f32.mrf.mxu0
      %v1977 = vadd.f32 0.0, %v1976
      %v1978 = vpop.f32.mrf.mxu0
      %1979 = vmatprep.mubr.f32.mxu0 0.0
      %1980 = vmatmul.mubr.f32.gmra.mxu0 %v1856
      %v1981 = vpop.f32.mrf.mxu0
      %v1982 = vadd.f32 0.0, %v1981
      %v1983 = vpop.f32.mrf.mxu0
      %1984 = vmatprep.mubr.f32.mxu0 0.0
      %1985 = vmatmul.mubr.f32.gmra.mxu0 %v1859
      %v1986 = vpop.f32.mrf.mxu0
      %v1987 = vadd.f32 0.0, %v1986
      %v1988 = vpop.f32.mrf.mxu0
      %1989 = vdwg.mxu0
      %v1991 = vsel %vm328, %v668, 0
      %v1994 = vsel %vm328, %v673, 0
      %v1997 = vsel %vm328, %v678, 0
      %v2000 = vsel %vm328, %v683, 0
      %v2003 = vsel %vm328, %v688, 0
      %v2006 = vsel %vm328, %v693, 0
      %v2009 = vsel %vm328, %v698, 0
      %v2012 = vsel %vm328, %v703, 0
      %v2015 = vsel %vm328, %v1057, 0
      %v2018 = vsel %vm328, %v1062, 0
      %v2021 = vsel %vm328, %v1067, 0
      %v2024 = vsel %vm328, %v1072, 0
      %v2027 = vsel %vm328, %v1077, 0
      %v2030 = vsel %vm328, %v1082, 0
      %v2033 = vsel %vm328, %v1087, 0
      %v2036 = vsel %vm328, %v1092, 0
      %2038 = vmatprep.subr.mxu0 0.0
      %2039 = vmatpush1.xpose.msra.mxu0 0.0
      %2040 = vmatprep.subr.mxu0 0.0
      %2041 = vmatpush1.xpose.msra.mxu0 0.0
      %2042 = vmatprep.subr.mxu0 0.0
      %2043 = vmatpush1.xpose.msra.mxu0 0.0
      %2044 = vmatprep.subr.mxu0 0.0
      %2045 = vmatpush1.xpose.msra.mxu0 0.0
      %2046 = vmatprep.subr.mxu0 0.0
      %2047 = vmatpush1.xpose.msra.mxu0 0.0
      %2048 = vmatprep.subr.mxu0 0.0
      %2049 = vmatpush1.xpose.msra.mxu0 0.0
      %2050 = vmatprep.subr.mxu0 0.0
      %2051 = vmatpush1.xpose.msra.mxu0 0.0
      %2052 = vmatprep.subr.mxu0 0.0
      %2053 = vmatpush1.xpose.msra.mxu0 0.0
      %2054 = vmatprep.subr.mxu0 0.0
      %2055 = vmatpush1.xpose.msra.mxu0 %v2036
      %2056 = vmatprep.subr.mxu0 0.0
      %2057 = vmatpush1.xpose.msra.mxu0 %v2033
      %2058 = vmatprep.subr.mxu0 0.0
      %2059 = vmatpush1.xpose.msra.mxu0 %v2030
      %2060 = vmatprep.subr.mxu0 0.0
      %2061 = vmatpush1.xpose.msra.mxu0 %v2027
      %2062 = vmatprep.subr.mxu0 0.0
      %2063 = vmatpush1.xpose.msra.mxu0 %v2024
      %2064 = vmatprep.subr.mxu0 0.0
      %2065 = vmatpush1.xpose.msra.mxu0 %v2021
      %2066 = vmatprep.subr.mxu0 0.0
      %2067 = vmatpush1.xpose.msra.mxu0 %v2018
      %2068 = vmatprep.subr.mxu0 0.0
      %2069 = vmatpush1.xpose.msra.mxu0 %v2015
      %2070 = vmatprep.subr.mxu0 0.0
      %2071 = vmatpush2.xpose.msra.mxu0 0.0
      %2072 = vmatprep.subr.mxu0 0.0
      %2073 = vmatpush2.xpose.msra.mxu0 0.0
      %2074 = vmatprep.subr.mxu0 0.0
      %2075 = vmatpush2.xpose.msra.mxu0 0.0
      %2076 = vmatprep.subr.mxu0 0.0
      %2077 = vmatpush2.xpose.msra.mxu0 0.0
      %2078 = vmatprep.subr.mxu0 0.0
      %2079 = vmatpush2.xpose.msra.mxu0 0.0
      %2080 = vmatprep.subr.mxu0 0.0
      %2081 = vmatpush2.xpose.msra.mxu0 0.0
      %2082 = vmatprep.subr.mxu0 0.0
      %2083 = vmatpush2.xpose.msra.mxu0 0.0
      %2084 = vmatprep.subr.mxu0 0.0
      %2085 = vmatpush2.xpose.msra.mxu0 0.0
      %2086 = vmatprep.subr.mxu0 0.0
      %2087 = vmatpush2.xpose.msra.mxu0 0.0
      %2088 = vmatprep.subr.mxu0 0.0
      %2089 = vmatpush2.xpose.msra.mxu0 0.0
      %2090 = vmatprep.subr.mxu0 0.0
      %2091 = vmatpush2.xpose.msra.mxu0 0.0
      %2092 = vmatprep.subr.mxu0 0.0
      %2093 = vmatpush2.xpose.msra.mxu0 0.0
      %2094 = vmatprep.subr.mxu0 0.0
      %2095 = vmatpush2.xpose.msra.mxu0 0.0
      %2096 = vmatprep.subr.mxu0 0.0
      %2097 = vmatpush2.xpose.msra.mxu0 0.0
      %2098 = vmatprep.subr.mxu0 0.0
      %2099 = vmatpush2.xpose.msra.mxu0 0.0
      %2100 = vmatprep.subr.mxu0 0.0
      %2101 = vmatpush2.xpose.msra.mxu0 0.0
      %2102 = vmatprep.mubr.f32.mxu0 0.0
      %2103 = vmatmul.mubr.f32.gmra.mxu0 %v1991
      %v2104 = vpop.f32.mrf.mxu0
      %v2105 = vadd.f32 0.0, %v2104
      %v2106 = vpop.f32.mrf.mxu0
      %2107 = vmatprep.mubr.f32.mxu0 0.0
      %2108 = vmatmul.mubr.f32.gmra.mxu0 %v1994
      %v2109 = vpop.f32.mrf.mxu0
      %v2110 = vadd.f32 0.0, %v2109
      %v2111 = vpop.f32.mrf.mxu0
      %2112 = vmatprep.mubr.f32.mxu0 0.0
      %2113 = vmatmul.mubr.f32.gmra.mxu0 %v1997
      %v2114 = vpop.f32.mrf.mxu0
      %v2115 = vadd.f32 0.0, %v2114
      %v2116 = vpop.f32.mrf.mxu0
      %2117 = vmatprep.mubr.f32.mxu0 0.0
      %2118 = vmatmul.mubr.f32.gmra.mxu0 %v2000
      %v2119 = vpop.f32.mrf.mxu0
      %v2120 = vadd.f32 0.0, %v2119
      %v2121 = vpop.f32.mrf.mxu0
      %2122 = vmatprep.mubr.f32.mxu0 0.0
      %2123 = vmatmul.mubr.f32.gmra.mxu0 %v2003
      %v2124 = vpop.f32.mrf.mxu0
      %v2125 = vadd.f32 0.0, %v2124
      %v2126 = vpop.f32.mrf.mxu0
      %2127 = vmatprep.mubr.f32.mxu0 0.0
      %2128 = vmatmul.mubr.f32.gmra.mxu0 %v2006
      %v2129 = vpop.f32.mrf.mxu0
      %v2130 = vadd.f32 0.0, %v2129
      %v2131 = vpop.f32.mrf.mxu0
      %2132 = vmatprep.mubr.f32.mxu0 0.0
      %2133 = vmatmul.mubr.f32.gmra.mxu0 %v2009
      %v2134 = vpop.f32.mrf.mxu0
      %v2135 = vadd.f32 0.0, %v2134
      %v2136 = vpop.f32.mrf.mxu0
      %2137 = vmatprep.mubr.f32.mxu0 0.0
      %2138 = vmatmul.mubr.f32.gmra.mxu0 %v2012
      %v2139 = vpop.f32.mrf.mxu0
      %v2140 = vadd.f32 0.0, %v2139
      %v2141 = vpop.f32.mrf.mxu0
      %2142 = vdwg.mxu0
      %v2144 = vsel %vm328, %v708, 0
      %v2147 = vsel %vm328, %v713, 0
      %v2150 = vsel %vm328, %v718, 0
      %v2153 = vsel %vm328, %v723, 0
      %v2156 = vsel %vm328, %v728, 0
      %v2159 = vsel %vm328, %v733, 0
      %v2162 = vsel %vm328, %v738, 0
      %v2165 = vsel %vm328, %v743, 0
      %v2168 = vsel %vm328, %v1097, 0
      %v2171 = vsel %vm328, %v1102, 0
      %v2174 = vsel %vm328, %v1107, 0
      %v2177 = vsel %vm328, %v1112, 0
      %v2180 = vsel %vm328, %v1117, 0
      %v2183 = vsel %vm328, %v1122, 0
      %v2186 = vsel %vm328, %v1127, 0
      %v2189 = vsel %vm328, %v1132, 0
      %2191 = vmatprep.subr.mxu0 0.0
      %2192 = vmatpush1.xpose.msra.mxu0 0.0
      %2193 = vmatprep.subr.mxu0 0.0
      %2194 = vmatpush1.xpose.msra.mxu0 0.0
      %2195 = vmatprep.subr.mxu0 0.0
      %2196 = vmatpush1.xpose.msra.mxu0 0.0
      %2197 = vmatprep.subr.mxu0 0.0
      %2198 = vmatpush1.xpose.msra.mxu0 0.0
      %2199 = vmatprep.subr.mxu0 0.0
      %2200 = vmatpush1.xpose.msra.mxu0 0.0
      %2201 = vmatprep.subr.mxu0 0.0
      %2202 = vmatpush1.xpose.msra.mxu0 0.0
      %2203 = vmatprep.subr.mxu0 0.0
      %2204 = vmatpush1.xpose.msra.mxu0 0.0
      %2205 = vmatprep.subr.mxu0 0.0
      %2206 = vmatpush1.xpose.msra.mxu0 0.0
      %2207 = vmatprep.subr.mxu0 0.0
      %2208 = vmatpush1.xpose.msra.mxu0 %v2189
      %2209 = vmatprep.subr.mxu0 0.0
      %2210 = vmatpush1.xpose.msra.mxu0 %v2186
      %2211 = vmatprep.subr.mxu0 0.0
      %2212 = vmatpush1.xpose.msra.mxu0 %v2183
      %2213 = vmatprep.subr.mxu0 0.0
      %2214 = vmatpush1.xpose.msra.mxu0 %v2180
      %2215 = vmatprep.subr.mxu0 0.0
      %2216 = vmatpush1.xpose.msra.mxu0 %v2177
      %2217 = vmatprep.subr.mxu0 0.0
      %2218 = vmatpush1.xpose.msra.mxu0 %v2174
      %2219 = vmatprep.subr.mxu0 0.0
      %2220 = vmatpush1.xpose.msra.mxu0 %v2171
      %2221 = vmatprep.subr.mxu0 0.0
      %2222 = vmatpush1.xpose.msra.mxu0 %v2168
      %2223 = vmatprep.subr.mxu0 0.0
      %2224 = vmatpush2.xpose.msra.mxu0 0.0
      %2225 = vmatprep.subr.mxu0 0.0
      %2226 = vmatpush2.xpose.msra.mxu0 0.0
      %2227 = vmatprep.subr.mxu0 0.0
      %2228 = vmatpush2.xpose.msra.mxu0 0.0
      %2229 = vmatprep.subr.mxu0 0.0
      %2230 = vmatpush2.xpose.msra.mxu0 0.0
      %2231 = vmatprep.subr.mxu0 0.0
      %2232 = vmatpush2.xpose.msra.mxu0 0.0
      %2233 = vmatprep.subr.mxu0 0.0
      %2234 = vmatpush2.xpose.msra.mxu0 0.0
      %2235 = vmatprep.subr.mxu0 0.0
      %2236 = vmatpush2.xpose.msra.mxu0 0.0
      %2237 = vmatprep.subr.mxu0 0.0
      %2238 = vmatpush2.xpose.msra.mxu0 0.0
      %2239 = vmatprep.subr.mxu0 0.0
      %2240 = vmatpush2.xpose.msra.mxu0 0.0
      %2241 = vmatprep.subr.mxu0 0.0
      %2242 = vmatpush2.xpose.msra.mxu0 0.0
      %2243 = vmatprep.subr.mxu0 0.0
      %2244 = vmatpush2.xpose.msra.mxu0 0.0
      %2245 = vmatprep.subr.mxu0 0.0
      %2246 = vmatpush2.xpose.msra.mxu0 0.0
      %2247 = vmatprep.subr.mxu0 0.0
      %2248 = vmatpush2.xpose.msra.mxu0 0.0
      %2249 = vmatprep.subr.mxu0 0.0
      %2250 = vmatpush2.xpose.msra.mxu0 0.0
      %2251 = vmatprep.subr.mxu0 0.0
      %2252 = vmatpush2.xpose.msra.mxu0 0.0
      %2253 = vmatprep.subr.mxu0 0.0
      %2254 = vmatpush2.xpose.msra.mxu0 0.0
      %2255 = vmatprep.mubr.f32.mxu0 0.0
      %2256 = vmatmul.mubr.f32.gmra.mxu0 %v2144
      %v2257 = vpop.f32.mrf.mxu0
      %v2258 = vadd.f32 0.0, %v2257
      %v2259 = vpop.f32.mrf.mxu0
      %2260 = vmatprep.mubr.f32.mxu0 0.0
      %2261 = vmatmul.mubr.f32.gmra.mxu0 %v2147
      %v2262 = vpop.f32.mrf.mxu0
      %v2263 = vadd.f32 0.0, %v2262
      %v2264 = vpop.f32.mrf.mxu0
      %2265 = vmatprep.mubr.f32.mxu0 0.0
      %2266 = vmatmul.mubr.f32.gmra.mxu0 %v2150
      %v2267 = vpop.f32.mrf.mxu0
      %v2268 = vadd.f32 0.0, %v2267
      %v2269 = vpop.f32.mrf.mxu0
      %2270 = vmatprep.mubr.f32.mxu0 0.0
      %2271 = vmatmul.mubr.f32.gmra.mxu0 %v2153
      %v2272 = vpop.f32.mrf.mxu0
      %v2273 = vadd.f32 0.0, %v2272
      %v2274 = vpop.f32.mrf.mxu0
      %2275 = vmatprep.mubr.f32.mxu0 0.0
      %2276 = vmatmul.mubr.f32.gmra.mxu0 %v2156
      %v2277 = vpop.f32.mrf.mxu0
      %v2278 = vadd.f32 0.0, %v2277
      %v2279 = vpop.f32.mrf.mxu0
      %2280 = vmatprep.mubr.f32.mxu0 0.0
      %2281 = vmatmul.mubr.f32.gmra.mxu0 %v2159
      %v2282 = vpop.f32.mrf.mxu0
      %v2283 = vadd.f32 0.0, %v2282
      %v2284 = vpop.f32.mrf.mxu0
      %2285 = vmatprep.mubr.f32.mxu0 0.0
      %2286 = vmatmul.mubr.f32.gmra.mxu0 %v2162
      %v2287 = vpop.f32.mrf.mxu0
      %v2288 = vadd.f32 0.0, %v2287
      %v2289 = vpop.f32.mrf.mxu0
      %2290 = vmatprep.mubr.f32.mxu0 0.0
      %2291 = vmatmul.mubr.f32.gmra.mxu0 %v2165
      %v2292 = vpop.f32.mrf.mxu0
      %v2293 = vadd.f32 0.0, %v2292
      %v2294 = vpop.f32.mrf.mxu0
      %2295 = vdwg.mxu0
      %v2297 = vsel %vm328, %v748, 0
      %v2300 = vsel %vm328, %v753, 0
      %v2303 = vsel %vm328, %v758, 0
      %v2306 = vsel %vm328, %v763, 0
      %v2309 = vsel %vm328, %v768, 0
      %v2312 = vsel %vm328, %v773, 0
      %v2315 = vsel %vm328, %v778, 0
      %v2318 = vsel %vm328, %v783, 0
      %v2321 = vsel %vm328, %v1137, 0
      %v2324 = vsel %vm328, %v1142, 0
      %v2327 = vsel %vm328, %v1147, 0
      %v2330 = vsel %vm328, %v1152, 0
      %v2333 = vsel %vm328, %v1157, 0
      %v2336 = vsel %vm328, %v1162, 0
      %v2339 = vsel %vm328, %v1167, 0
      %v2342 = vsel %vm328, %v1172, 0
      %2344 = vmatprep.subr.mxu0 0.0
      %2345 = vmatpush1.xpose.msra.mxu0 0.0
      %2346 = vmatprep.subr.mxu0 0.0
      %2347 = vmatpush1.xpose.msra.mxu0 0.0
      %2348 = vmatprep.subr.mxu0 0.0
      %2349 = vmatpush1.xpose.msra.mxu0 0.0
      %2350 = vmatprep.subr.mxu0 0.0
      %2351 = vmatpush1.xpose.msra.mxu0 0.0
      %2352 = vmatprep.subr.mxu0 0.0
      %2353 = vmatpush1.xpose.msra.mxu0 0.0
      %2354 = vmatprep.subr.mxu0 0.0
      %2355 = vmatpush1.xpose.msra.mxu0 0.0
      %2356 = vmatprep.subr.mxu0 0.0
      %2357 = vmatpush1.xpose.msra.mxu0 0.0
      %2358 = vmatprep.subr.mxu0 0.0
      %2359 = vmatpush1.xpose.msra.mxu0 0.0
      %2360 = vmatprep.subr.mxu0 0.0
      %2361 = vmatpush1.xpose.msra.mxu0 %v2342
      %2362 = vmatprep.subr.mxu0 0.0
      %2363 = vmatpush1.xpose.msra.mxu0 %v2339
      %2364 = vmatprep.subr.mxu0 0.0
      %2365 = vmatpush1.xpose.msra.mxu0 %v2336
      %2366 = vmatprep.subr.mxu0 0.0
      %2367 = vmatpush1.xpose.msra.mxu0 %v2333
      %2368 = vmatprep.subr.mxu0 0.0
      %2369 = vmatpush1.xpose.msra.mxu0 %v2330
      %2370 = vmatprep.subr.mxu0 0.0
      %2371 = vmatpush1.xpose.msra.mxu0 %v2327
      %2372 = vmatprep.subr.mxu0 0.0
      %2373 = vmatpush1.xpose.msra.mxu0 %v2324
      %2374 = vmatprep.subr.mxu0 0.0
      %2375 = vmatpush1.xpose.msra.mxu0 %v2321
      %2376 = vmatprep.subr.mxu0 0.0
      %2377 = vmatpush2.xpose.msra.mxu0 0.0
      %2378 = vmatprep.subr.mxu0 0.0
      %2379 = vmatpush2.xpose.msra.mxu0 0.0
      %2380 = vmatprep.subr.mxu0 0.0
      %2381 = vmatpush2.xpose.msra.mxu0 0.0
      %2382 = vmatprep.subr.mxu0 0.0
      %2383 = vmatpush2.xpose.msra.mxu0 0.0
      %2384 = vmatprep.subr.mxu0 0.0
      %2385 = vmatpush2.xpose.msra.mxu0 0.0
      %2386 = vmatprep.subr.mxu0 0.0
      %2387 = vmatpush2.xpose.msra.mxu0 0.0
      %2388 = vmatprep.subr.mxu0 0.0
      %2389 = vmatpush2.xpose.msra.mxu0 0.0
      %2390 = vmatprep.subr.mxu0 0.0
      %2391 = vmatpush2.xpose.msra.mxu0 0.0
      %2392 = vmatprep.subr.mxu0 0.0
      %2393 = vmatpush2.xpose.msra.mxu0 0.0
      %2394 = vmatprep.subr.mxu0 0.0
      %2395 = vmatpush2.xpose.msra.mxu0 0.0
      %2396 = vmatprep.subr.mxu0 0.0
      %2397 = vmatpush2.xpose.msra.mxu0 0.0
      %2398 = vmatprep.subr.mxu0 0.0
      %2399 = vmatpush2.xpose.msra.mxu0 0.0
      %2400 = vmatprep.subr.mxu0 0.0
      %2401 = vmatpush2.xpose.msra.mxu0 0.0
      %2402 = vmatprep.subr.mxu0 0.0
      %2403 = vmatpush2.xpose.msra.mxu0 0.0
      %2404 = vmatprep.subr.mxu0 0.0
      %2405 = vmatpush2.xpose.msra.mxu0 0.0
      %2406 = vmatprep.subr.mxu0 0.0
      %2407 = vmatpush2.xpose.msra.mxu0 0.0
      %2408 = vmatprep.mubr.f32.mxu0 0.0
      %2409 = vmatmul.mubr.f32.gmra.mxu0 %v2297
      %v2410 = vpop.f32.mrf.mxu0
      %v2411 = vadd.f32 0.0, %v2410
      %v2412 = vpop.f32.mrf.mxu0
      %2413 = vmatprep.mubr.f32.mxu0 0.0
      %2414 = vmatmul.mubr.f32.gmra.mxu0 %v2300
      %v2415 = vpop.f32.mrf.mxu0
      %v2416 = vadd.f32 0.0, %v2415
      %v2417 = vpop.f32.mrf.mxu0
      %2418 = vmatprep.mubr.f32.mxu0 0.0
      %2419 = vmatmul.mubr.f32.gmra.mxu0 %v2303
      %v2420 = vpop.f32.mrf.mxu0
      %v2421 = vadd.f32 0.0, %v2420
      %v2422 = vpop.f32.mrf.mxu0
      %2423 = vmatprep.mubr.f32.mxu0 0.0
      %2424 = vmatmul.mubr.f32.gmra.mxu0 %v2306
      %v2425 = vpop.f32.mrf.mxu0
      %v2426 = vadd.f32 0.0, %v2425
      %v2427 = vpop.f32.mrf.mxu0
      %2428 = vmatprep.mubr.f32.mxu0 0.0
      %2429 = vmatmul.mubr.f32.gmra.mxu0 %v2309
      %v2430 = vpop.f32.mrf.mxu0
      %v2431 = vadd.f32 0.0, %v2430
      %v2432 = vpop.f32.mrf.mxu0
      %2433 = vmatprep.mubr.f32.mxu0 0.0
      %2434 = vmatmul.mubr.f32.gmra.mxu0 %v2312
      %v2435 = vpop.f32.mrf.mxu0
      %v2436 = vadd.f32 0.0, %v2435
      %v2437 = vpop.f32.mrf.mxu0
      %2438 = vmatprep.mubr.f32.mxu0 0.0
      %2439 = vmatmul.mubr.f32.gmra.mxu0 %v2315
      %v2440 = vpop.f32.mrf.mxu0
      %v2441 = vadd.f32 0.0, %v2440
      %v2442 = vpop.f32.mrf.mxu0
      %2443 = vmatprep.mubr.f32.mxu0 0.0
      %2444 = vmatmul.mubr.f32.gmra.mxu0 %v2318
      %v2445 = vpop.f32.mrf.mxu0
      %v2446 = vadd.f32 0.0, %v2445
      %v2447 = vpop.f32.mrf.mxu0
      %2448 = vdwg.mxu0
      %v2450 = vsel %vm328, %v788, 0
      %v2453 = vsel %vm328, %v793, 0
      %v2456 = vsel %vm328, %v798, 0
      %v2459 = vsel %vm328, %v803, 0
      %v2462 = vsel %vm328, %v808, 0
      %v2465 = vsel %vm328, %v813, 0
      %v2468 = vsel %vm328, %v818, 0
      %v2471 = vsel %vm328, %v823, 0
      %v2474 = vsel %vm328, %v1177, 0
      %v2477 = vsel %vm328, %v1182, 0
      %v2480 = vsel %vm328, %v1187, 0
      %v2483 = vsel %vm328, %v1192, 0
      %v2486 = vsel %vm328, %v1197, 0
      %v2489 = vsel %vm328, %v1202, 0
      %v2492 = vsel %vm328, %v1207, 0
      %v2495 = vsel %vm328, %v1212, 0
      %2497 = vmatprep.subr.mxu0 0.0
      %2498 = vmatpush1.xpose.msra.mxu0 0.0
      %2499 = vmatprep.subr.mxu0 0.0
      %2500 = vmatpush1.xpose.msra.mxu0 0.0
      %2501 = vmatprep.subr.mxu0 0.0
      %2502 = vmatpush1.xpose.msra.mxu0 0.0
      %2503 = vmatprep.subr.mxu0 0.0
      %2504 = vmatpush1.xpose.msra.mxu0 0.0
      %2505 = vmatprep.subr.mxu0 0.0
      %2506 = vmatpush1.xpose.msra.mxu0 0.0
      %2507 = vmatprep.subr.mxu0 0.0
      %2508 = vmatpush1.xpose.msra.mxu0 0.0
      %2509 = vmatprep.subr.mxu0 0.0
      %2510 = vmatpush1.xpose.msra.mxu0 0.0
      %2511 = vmatprep.subr.mxu0 0.0
      %2512 = vmatpush1.xpose.msra.mxu0 0.0
      %2513 = vmatprep.subr.mxu0 0.0
      %2514 = vmatpush1.xpose.msra.mxu0 %v2495
      %2515 = vmatprep.subr.mxu0 0.0
      %2516 = vmatpush1.xpose.msra.mxu0 %v2492
      %2517 = vmatprep.subr.mxu0 0.0
      %2518 = vmatpush1.xpose.msra.mxu0 %v2489
      %2519 = vmatprep.subr.mxu0 0.0
      %2520 = vmatpush1.xpose.msra.mxu0 %v2486
      %2521 = vmatprep.subr.mxu0 0.0
      %2522 = vmatpush1.xpose.msra.mxu0 %v2483
      %2523 = vmatprep.subr.mxu0 0.0
      %2524 = vmatpush1.xpose.msra.mxu0 %v2480
      %2525 = vmatprep.subr.mxu0 0.0
      %2526 = vmatpush1.xpose.msra.mxu0 %v2477
      %2527 = vmatprep.subr.mxu0 0.0
      %2528 = vmatpush1.xpose.msra.mxu0 %v2474
      %2529 = vmatprep.subr.mxu0 0.0
      %2530 = vmatpush2.xpose.msra.mxu0 0.0
      %2531 = vmatprep.subr.mxu0 0.0
      %2532 = vmatpush2.xpose.msra.mxu0 0.0
      %2533 = vmatprep.subr.mxu0 0.0
      %2534 = vmatpush2.xpose.msra.mxu0 0.0
      %2535 = vmatprep.subr.mxu0 0.0
      %2536 = vmatpush2.xpose.msra.mxu0 0.0
      %2537 = vmatprep.subr.mxu0 0.0
      %2538 = vmatpush2.xpose.msra.mxu0 0.0
      %2539 = vmatprep.subr.mxu0 0.0
      %2540 = vmatpush2.xpose.msra.mxu0 0.0
      %2541 = vmatprep.subr.mxu0 0.0
      %2542 = vmatpush2.xpose.msra.mxu0 0.0
      %2543 = vmatprep.subr.mxu0 0.0
      %2544 = vmatpush2.xpose.msra.mxu0 0.0
      %2545 = vmatprep.subr.mxu0 0.0
      %2546 = vmatpush2.xpose.msra.mxu0 0.0
      %2547 = vmatprep.subr.mxu0 0.0
      %2548 = vmatpush2.xpose.msra.mxu0 0.0
      %2549 = vmatprep.subr.mxu0 0.0
      %2550 = vmatpush2.xpose.msra.mxu0 0.0
      %2551 = vmatprep.subr.mxu0 0.0
      %2552 = vmatpush2.xpose.msra.mxu0 0.0
      %2553 = vmatprep.subr.mxu0 0.0
      %2554 = vmatpush2.xpose.msra.mxu0 0.0
      %2555 = vmatprep.subr.mxu0 0.0
      %2556 = vmatpush2.xpose.msra.mxu0 0.0
      %2557 = vmatprep.subr.mxu0 0.0
      %2558 = vmatpush2.xpose.msra.mxu0 0.0
      %2559 = vmatprep.subr.mxu0 0.0
      %2560 = vmatpush2.xpose.msra.mxu0 0.0
      %2561 = vmatprep.mubr.f32.mxu0 0.0
      %2562 = vmatmul.mubr.f32.gmra.mxu0 %v2450
      %v2563 = vpop.f32.mrf.mxu0
      %v2564 = vadd.f32 0.0, %v2563
      %v2565 = vpop.f32.mrf.mxu0
      %2566 = vmatprep.mubr.f32.mxu0 0.0
      %2567 = vmatmul.mubr.f32.gmra.mxu0 %v2453
      %v2568 = vpop.f32.mrf.mxu0
      %v2569 = vadd.f32 0.0, %v2568
      %v2570 = vpop.f32.mrf.mxu0
      %2571 = vmatprep.mubr.f32.mxu0 0.0
      %2572 = vmatmul.mubr.f32.gmra.mxu0 %v2456
      %v2573 = vpop.f32.mrf.mxu0
      %v2574 = vadd.f32 0.0, %v2573
      %v2575 = vpop.f32.mrf.mxu0
      %2576 = vmatprep.mubr.f32.mxu0 0.0
      %2577 = vmatmul.mubr.f32.gmra.mxu0 %v2459
      %v2578 = vpop.f32.mrf.mxu0
      %v2579 = vadd.f32 0.0, %v2578
      %v2580 = vpop.f32.mrf.mxu0
      %2581 = vmatprep.mubr.f32.mxu0 0.0
      %2582 = vmatmul.mubr.f32.gmra.mxu0 %v2462
      %v2583 = vpop.f32.mrf.mxu0
      %v2584 = vadd.f32 0.0, %v2583
      %v2585 = vpop.f32.mrf.mxu0
      %2586 = vmatprep.mubr.f32.mxu0 0.0
      %2587 = vmatmul.mubr.f32.gmra.mxu0 %v2465
      %v2588 = vpop.f32.mrf.mxu0
      %v2589 = vadd.f32 0.0, %v2588
      %v2590 = vpop.f32.mrf.mxu0
      %2591 = vmatprep.mubr.f32.mxu0 0.0
      %2592 = vmatmul.mubr.f32.gmra.mxu0 %v2468
      %v2593 = vpop.f32.mrf.mxu0
      %v2594 = vadd.f32 0.0, %v2593
      %v2595 = vpop.f32.mrf.mxu0
      %2596 = vmatprep.mubr.f32.mxu0 0.0
      %2597 = vmatmul.mubr.f32.gmra.mxu0 %v2471
      %v2598 = vpop.f32.mrf.mxu0
      %v2599 = vadd.f32 0.0, %v2598
      %v2600 = vpop.f32.mrf.mxu0
      %2601 = vdwg.mxu0
      %v2603 = vsel %vm328, %v828, 0
      %v2606 = vsel %vm328, %v833, 0
      %v2609 = vsel %vm328, %v838, 0
      %v2612 = vsel %vm328, %v843, 0
      %v2615 = vsel %vm328, %v848, 0
      %v2618 = vsel %vm328, %v853, 0
      %v2621 = vsel %vm328, %v858, 0
      %v2624 = vsel %vm328, %v863, 0
      %v2627 = vsel %vm328, %v1217, 0
      %v2630 = vsel %vm328, %v1222, 0
      %v2633 = vsel %vm328, %v1227, 0
      %v2636 = vsel %vm328, %v1232, 0
      %v2639 = vsel %vm328, %v1237, 0
      %v2642 = vsel %vm328, %v1242, 0
      %v2645 = vsel %vm328, %v1247, 0
      %v2648 = vsel %vm328, %v1252, 0
      %2650 = vmatprep.subr.mxu0 0.0
      %2651 = vmatpush1.xpose.msra.mxu0 0.0
      %2652 = vmatprep.subr.mxu0 0.0
      %2653 = vmatpush1.xpose.msra.mxu0 0.0
      %2654 = vmatprep.subr.mxu0 0.0
      %2655 = vmatpush1.xpose.msra.mxu0 0.0
      %2656 = vmatprep.subr.mxu0 0.0
      %2657 = vmatpush1.xpose.msra.mxu0 0.0
      %2658 = vmatprep.subr.mxu0 0.0
      %2659 = vmatpush1.xpose.msra.mxu0 0.0
      %2660 = vmatprep.subr.mxu0 0.0
      %2661 = vmatpush1.xpose.msra.mxu0 0.0
      %2662 = vmatprep.subr.mxu0 0.0
      %2663 = vmatpush1.xpose.msra.mxu0 0.0
      %2664 = vmatprep.subr.mxu0 0.0
      %2665 = vmatpush1.xpose.msra.mxu0 0.0
      %2666 = vmatprep.subr.mxu0 0.0
      %2667 = vmatpush1.xpose.msra.mxu0 %v2648
      %2668 = vmatprep.subr.mxu0 0.0
      %2669 = vmatpush1.xpose.msra.mxu0 %v2645
      %2670 = vmatprep.subr.mxu0 0.0
      %2671 = vmatpush1.xpose.msra.mxu0 %v2642
      %2672 = vmatprep.subr.mxu0 0.0
      %2673 = vmatpush1.xpose.msra.mxu0 %v2639
      %2674 = vmatprep.subr.mxu0 0.0
      %2675 = vmatpush1.xpose.msra.mxu0 %v2636
      %2676 = vmatprep.subr.mxu0 0.0
      %2677 = vmatpush1.xpose.msra.mxu0 %v2633
      %2678 = vmatprep.subr.mxu0 0.0
      %2679 = vmatpush1.xpose.msra.mxu0 %v2630
      %2680 = vmatprep.subr.mxu0 0.0
      %2681 = vmatpush1.xpose.msra.mxu0 %v2627
      %2682 = vmatprep.subr.mxu0 0.0
      %2683 = vmatpush2.xpose.msra.mxu0 0.0
      %2684 = vmatprep.subr.mxu0 0.0
      %2685 = vmatpush2.xpose.msra.mxu0 0.0
      %2686 = vmatprep.subr.mxu0 0.0
      %2687 = vmatpush2.xpose.msra.mxu0 0.0
      %2688 = vmatprep.subr.mxu0 0.0
      %2689 = vmatpush2.xpose.msra.mxu0 0.0
      %2690 = vmatprep.subr.mxu0 0.0
      %2691 = vmatpush2.xpose.msra.mxu0 0.0
      %2692 = vmatprep.subr.mxu0 0.0
      %2693 = vmatpush2.xpose.msra.mxu0 0.0
      %2694 = vmatprep.subr.mxu0 0.0
      %2695 = vmatpush2.xpose.msra.mxu0 0.0
      %2696 = vmatprep.subr.mxu0 0.0
      %2697 = vmatpush2.xpose.msra.mxu0 0.0
      %2698 = vmatprep.subr.mxu0 0.0
      %2699 = vmatpush2.xpose.msra.mxu0 0.0
      %2700 = vmatprep.subr.mxu0 0.0
      %2701 = vmatpush2.xpose.msra.mxu0 0.0
      %2702 = vmatprep.subr.mxu0 0.0
      %2703 = vmatpush2.xpose.msra.mxu0 0.0
      %2704 = vmatprep.subr.mxu0 0.0
      %2705 = vmatpush2.xpose.msra.mxu0 0.0
      %2706 = vmatprep.subr.mxu0 0.0
      %2707 = vmatpush2.xpose.msra.mxu0 0.0
      %2708 = vmatprep.subr.mxu0 0.0
      %2709 = vmatpush2.xpose.msra.mxu0 0.0
      %2710 = vmatprep.subr.mxu0 0.0
      %2711 = vmatpush2.xpose.msra.mxu0 0.0
      %2712 = vmatprep.subr.mxu0 0.0
      %2713 = vmatpush2.xpose.msra.mxu0 0.0
      %2714 = vmatprep.mubr.f32.mxu0 0.0
      %2715 = vmatmul.mubr.f32.gmra.mxu0 %v2603
      %v2716 = vpop.f32.mrf.mxu0
      %v2717 = vadd.f32 0.0, %v2716
      %v2718 = vpop.f32.mrf.mxu0
      %2719 = vmatprep.mubr.f32.mxu0 0.0
      %2720 = vmatmul.mubr.f32.gmra.mxu0 %v2606
      %v2721 = vpop.f32.mrf.mxu0
      %v2722 = vadd.f32 0.0, %v2721
      %v2723 = vpop.f32.mrf.mxu0
      %2724 = vmatprep.mubr.f32.mxu0 0.0
      %2725 = vmatmul.mubr.f32.gmra.mxu0 %v2609
      %v2726 = vpop.f32.mrf.mxu0
      %v2727 = vadd.f32 0.0, %v2726
      %v2728 = vpop.f32.mrf.mxu0
      %2729 = vmatprep.mubr.f32.mxu0 0.0
      %2730 = vmatmul.mubr.f32.gmra.mxu0 %v2612
      %v2731 = vpop.f32.mrf.mxu0
      %v2732 = vadd.f32 0.0, %v2731
      %v2733 = vpop.f32.mrf.mxu0
      %2734 = vmatprep.mubr.f32.mxu0 0.0
      %2735 = vmatmul.mubr.f32.gmra.mxu0 %v2615
      %v2736 = vpop.f32.mrf.mxu0
      %v2737 = vadd.f32 0.0, %v2736
      %v2738 = vpop.f32.mrf.mxu0
      %2739 = vmatprep.mubr.f32.mxu0 0.0
      %2740 = vmatmul.mubr.f32.gmra.mxu0 %v2618
      %v2741 = vpop.f32.mrf.mxu0
      %v2742 = vadd.f32 0.0, %v2741
      %v2743 = vpop.f32.mrf.mxu0
      %2744 = vmatprep.mubr.f32.mxu0 0.0
      %2745 = vmatmul.mubr.f32.gmra.mxu0 %v2621
      %v2746 = vpop.f32.mrf.mxu0
      %v2747 = vadd.f32 0.0, %v2746
      %v2748 = vpop.f32.mrf.mxu0
      %2749 = vmatprep.mubr.f32.mxu0 0.0
      %2750 = vmatmul.mubr.f32.gmra.mxu0 %v2624
      %v2751 = vpop.f32.mrf.mxu0
      %v2752 = vadd.f32 0.0, %v2751
      %v2753 = vpop.f32.mrf.mxu0
      %2754 = vdwg.mxu0
      %v2756 = vsel %vm328, %v868, 0
      %v2759 = vsel %vm328, %v873, 0
      %v2762 = vsel %vm328, %v878, 0
      %v2765 = vsel %vm328, %v883, 0
      %v2768 = vsel %vm328, %v888, 0
      %v2771 = vsel %vm328, %v893, 0
      %v2774 = vsel %vm328, %v898, 0
      %v2777 = vsel %vm328, %v903, 0
      %v2780 = vsel %vm328, %v1257, 0
      %v2783 = vsel %vm328, %v1262, 0
      %v2786 = vsel %vm328, %v1267, 0
      %v2789 = vsel %vm328, %v1272, 0
      %v2792 = vsel %vm328, %v1277, 0
      %v2795 = vsel %vm328, %v1282, 0
      %v2798 = vsel %vm328, %v1287, 0
      %v2801 = vsel %vm328, %v1292, 0
      %2803 = vmatprep.subr.mxu0 0.0
      %2804 = vmatpush1.xpose.msra.mxu0 0.0
      %2805 = vmatprep.subr.mxu0 0.0
      %2806 = vmatpush1.xpose.msra.mxu0 0.0
      %2807 = vmatprep.subr.mxu0 0.0
      %2808 = vmatpush1.xpose.msra.mxu0 0.0
      %2809 = vmatprep.subr.mxu0 0.0
      %2810 = vmatpush1.xpose.msra.mxu0 0.0
      %2811 = vmatprep.subr.mxu0 0.0
      %2812 = vmatpush1.xpose.msra.mxu0 0.0
      %2813 = vmatprep.subr.mxu0 0.0
      %2814 = vmatpush1.xpose.msra.mxu0 0.0
      %2815 = vmatprep.subr.mxu0 0.0
      %2816 = vmatpush1.xpose.msra.mxu0 0.0
      %2817 = vmatprep.subr.mxu0 0.0
      %2818 = vmatpush1.xpose.msra.mxu0 0.0
      %2819 = vmatprep.subr.mxu0 0.0
      %2820 = vmatpush1.xpose.msra.mxu0 %v2801
      %2821 = vmatprep.subr.mxu0 0.0
      %2822 = vmatpush1.xpose.msra.mxu0 %v2798
      %2823 = vmatprep.subr.mxu0 0.0
      %2824 = vmatpush1.xpose.msra.mxu0 %v2795
      %2825 = vmatprep.subr.mxu0 0.0
      %2826 = vmatpush1.xpose.msra.mxu0 %v2792
      %2827 = vmatprep.subr.mxu0 0.0
      %2828 = vmatpush1.xpose.msra.mxu0 %v2789
      %2829 = vmatprep.subr.mxu0 0.0
      %2830 = vmatpush1.xpose.msra.mxu0 %v2786
      %2831 = vmatprep.subr.mxu0 0.0
      %2832 = vmatpush1.xpose.msra.mxu0 %v2783
      %2833 = vmatprep.subr.mxu0 0.0
      %2834 = vmatpush1.xpose.msra.mxu0 %v2780
      %2835 = vmatprep.subr.mxu0 0.0
      %2836 = vmatpush2.xpose.msra.mxu0 0.0
      %2837 = vmatprep.subr.mxu0 0.0
      %2838 = vmatpush2.xpose.msra.mxu0 0.0
      %2839 = vmatprep.subr.mxu0 0.0
      %2840 = vmatpush2.xpose.msra.mxu0 0.0
      %2841 = vmatprep.subr.mxu0 0.0
      %2842 = vmatpush2.xpose.msra.mxu0 0.0
      %2843 = vmatprep.subr.mxu0 0.0
      %2844 = vmatpush2.xpose.msra.mxu0 0.0
      %2845 = vmatprep.subr.mxu0 0.0
      %2846 = vmatpush2.xpose.msra.mxu0 0.0
      %2847 = vmatprep.subr.mxu0 0.0
      %2848 = vmatpush2.xpose.msra.mxu0 0.0
      %2849 = vmatprep.subr.mxu0 0.0
      %2850 = vmatpush2.xpose.msra.mxu0 0.0
      %2851 = vmatprep.subr.mxu0 0.0
      %2852 = vmatpush2.xpose.msra.mxu0 0.0
      %2853 = vmatprep.subr.mxu0 0.0
      %2854 = vmatpush2.xpose.msra.mxu0 0.0
      %2855 = vmatprep.subr.mxu0 0.0
      %2856 = vmatpush2.xpose.msra.mxu0 0.0
      %2857 = vmatprep.subr.mxu0 0.0
      %2858 = vmatpush2.xpose.msra.mxu0 0.0
      %2859 = vmatprep.subr.mxu0 0.0
      %2860 = vmatpush2.xpose.msra.mxu0 0.0
      %2861 = vmatprep.subr.mxu0 0.0
      %2862 = vmatpush2.xpose.msra.mxu0 0.0
      %2863 = vmatprep.subr.mxu0 0.0
      %2864 = vmatpush2.xpose.msra.mxu0 0.0
      %2865 = vmatprep.subr.mxu0 0.0
      %2866 = vmatpush2.xpose.msra.mxu0 0.0
      %2867 = vmatprep.mubr.f32.mxu0 0.0
      %2868 = vmatmul.mubr.f32.gmra.mxu0 %v2756
      %v2869 = vpop.f32.mrf.mxu0
      %v2870 = vadd.f32 0.0, %v2869
      %v2871 = vpop.f32.mrf.mxu0
      %2872 = vmatprep.mubr.f32.mxu0 0.0
      %2873 = vmatmul.mubr.f32.gmra.mxu0 %v2759
      %v2874 = vpop.f32.mrf.mxu0
      %v2875 = vadd.f32 0.0, %v2874
      %v2876 = vpop.f32.mrf.mxu0
      %2877 = vmatprep.mubr.f32.mxu0 0.0
      %2878 = vmatmul.mubr.f32.gmra.mxu0 %v2762
      %v2879 = vpop.f32.mrf.mxu0
      %v2880 = vadd.f32 0.0, %v2879
      %v2881 = vpop.f32.mrf.mxu0
      %2882 = vmatprep.mubr.f32.mxu0 0.0
      %2883 = vmatmul.mubr.f32.gmra.mxu0 %v2765
      %v2884 = vpop.f32.mrf.mxu0
      %v2885 = vadd.f32 0.0, %v2884
      %v2886 = vpop.f32.mrf.mxu0
      %2887 = vmatprep.mubr.f32.mxu0 0.0
      %2888 = vmatmul.mubr.f32.gmra.mxu0 %v2768
      %v2889 = vpop.f32.mrf.mxu0
      %v2890 = vadd.f32 0.0, %v2889
      %v2891 = vpop.f32.mrf.mxu0
      %2892 = vmatprep.mubr.f32.mxu0 0.0
      %2893 = vmatmul.mubr.f32.gmra.mxu0 %v2771
      %v2894 = vpop.f32.mrf.mxu0
      %v2895 = vadd.f32 0.0, %v2894
      %v2896 = vpop.f32.mrf.mxu0
      %2897 = vmatprep.mubr.f32.mxu0 0.0
      %2898 = vmatmul.mubr.f32.gmra.mxu0 %v2774
      %v2899 = vpop.f32.mrf.mxu0
      %v2900 = vadd.f32 0.0, %v2899
      %v2901 = vpop.f32.mrf.mxu0
      %2902 = vmatprep.mubr.f32.mxu0 0.0
      %2903 = vmatmul.mubr.f32.gmra.mxu0 %v2777
      %v2904 = vpop.f32.mrf.mxu0
      %v2905 = vadd.f32 0.0, %v2904
      %v2906 = vpop.f32.mrf.mxu0
      %2907 = vdwg.mxu0
      %vm2908 = vcmask 523264
      %v2909 = vsel %vm2908, %v1799, -inf
      %2910 = vmax.xlane.f32.xlu0 %v2909
      %v2911 = vpop.xlane.xlu0 %2910
      %v2912 = vsel %vm2908, %v1804, -inf
      %2913 = vmax.xlane.f32.xlu0 %v2912
      %v2914 = vpop.xlane.xlu0 %2913
      %v2915 = vsel %vm2908, %v1809, -inf
      %2916 = vmax.xlane.f32.xlu0 %v2915
      %v2917 = vpop.xlane.xlu0 %2916
      %v2918 = vsel %vm2908, %v1814, -inf
      %2919 = vmax.xlane.f32.xlu0 %v2918
      %v2920 = vpop.xlane.xlu0 %2919
      %v2921 = vsel %vm2908, %v1819, -inf
      %2922 = vmax.xlane.f32.xlu0 %v2921
      %v2923 = vpop.xlane.xlu0 %2922
      %v2924 = vsel %vm2908, %v1824, -inf
      %2925 = vmax.xlane.f32.xlu0 %v2924
      %v2926 = vpop.xlane.xlu0 %2925
      %v2927 = vsel %vm2908, %v1829, -inf
      %2928 = vmax.xlane.f32.xlu0 %v2927
      %v2929 = vpop.xlane.xlu0 %2928
      %v2930 = vsel %vm2908, %v1834, -inf
      %2931 = vmax.xlane.f32.xlu0 %v2930
      %v2932 = vpop.xlane.xlu0 %2931
      %v2933 = vsel %vm2908, %v1952, -inf
      %2934 = vmax.xlane.f32.xlu0 %v2933
      %v2935 = vpop.xlane.xlu0 %2934
      %v2936 = vsel %vm2908, %v1957, -inf
      %2937 = vmax.xlane.f32.xlu0 %v2936
      %v2938 = vpop.xlane.xlu0 %2937
      %v2939 = vsel %vm2908, %v1962, -inf
      %2940 = vmax.xlane.f32.xlu0 %v2939
      %v2941 = vpop.xlane.xlu0 %2940
      %v2942 = vsel %vm2908, %v1967, -inf
      %2943 = vmax.xlane.f32.xlu0 %v2942
      %v2944 = vpop.xlane.xlu0 %2943
      %v2945 = vsel %vm2908, %v1972, -inf
      %2946 = vmax.xlane.f32.xlu0 %v2945
      %v2947 = vpop.xlane.xlu0 %2946
      %v2948 = vsel %vm2908, %v1977, -inf
      %2949 = vmax.xlane.f32.xlu0 %v2948
      %v2950 = vpop.xlane.xlu0 %2949
      %v2951 = vsel %vm2908, %v1982, -inf
      %2952 = vmax.xlane.f32.xlu0 %v2951
      %v2953 = vpop.xlane.xlu0 %2952
      %v2954 = vsel %vm2908, %v1987, -inf
      %2955 = vmax.xlane.f32.xlu0 %v2954
      %v2956 = vpop.xlane.xlu0 %2955
      %v2957 = vsel %vm2908, %v2105, -inf
      %2958 = vmax.xlane.f32.xlu0 %v2957
      %v2959 = vpop.xlane.xlu0 %2958
      %v2960 = vsel %vm2908, %v2110, -inf
      %2961 = vmax.xlane.f32.xlu0 %v2960
      %v2962 = vpop.xlane.xlu0 %2961
      %v2963 = vsel %vm2908, %v2115, -inf
      %2964 = vmax.xlane.f32.xlu0 %v2963
      %v2965 = vpop.xlane.xlu0 %2964
      %v2966 = vsel %vm2908, %v2120, -inf
      %2967 = vmax.xlane.f32.xlu0 %v2966
      %v2968 = vpop.xlane.xlu0 %2967
      %v2969 = vsel %vm2908, %v2125, -inf
      %2970 = vmax.xlane.f32.xlu0 %v2969
      %v2971 = vpop.xlane.xlu0 %2970
      %v2972 = vsel %vm2908, %v2130, -inf
      %2973 = vmax.xlane.f32.xlu0 %v2972
      %v2974 = vpop.xlane.xlu0 %2973
      %v2975 = vsel %vm2908, %v2135, -inf
      %2976 = vmax.xlane.f32.xlu0 %v2975
      %v2977 = vpop.xlane.xlu0 %2976
      %v2978 = vsel %vm2908, %v2140, -inf
      %2979 = vmax.xlane.f32.xlu0 %v2978
      %v2980 = vpop.xlane.xlu0 %2979
      %v2981 = vsel %vm2908, %v2258, -inf
      %2982 = vmax.xlane.f32.xlu0 %v2981
      %v2983 = vpop.xlane.xlu0 %2982
      %v2984 = vsel %vm2908, %v2263, -inf
      %2985 = vmax.xlane.f32.xlu0 %v2984
      %v2986 = vpop.xlane.xlu0 %2985
      %v2987 = vsel %vm2908, %v2268, -inf
      %2988 = vmax.xlane.f32.xlu0 %v2987
      %v2989 = vpop.xlane.xlu0 %2988
      %v2990 = vsel %vm2908, %v2273, -inf
      %2991 = vmax.xlane.f32.xlu0 %v2990
      %v2992 = vpop.xlane.xlu0 %2991
      %v2993 = vsel %vm2908, %v2278, -inf
      %2994 = vmax.xlane.f32.xlu0 %v2993
      %v2995 = vpop.xlane.xlu0 %2994
      %v2996 = vsel %vm2908, %v2283, -inf
      %2997 = vmax.xlane.f32.xlu0 %v2996
      %v2998 = vpop.xlane.xlu0 %2997
      %v2999 = vsel %vm2908, %v2288, -inf
      %3000 = vmax.xlane.f32.xlu0 %v2999
      %v3001 = vpop.xlane.xlu0 %3000
      %v3002 = vsel %vm2908, %v2293, -inf
      %3003 = vmax.xlane.f32.xlu0 %v3002
      %v3004 = vpop.xlane.xlu0 %3003
      %v3005 = vsel %vm2908, %v2411, -inf
      %3006 = vmax.xlane.f32.xlu0 %v3005
      %v3007 = vpop.xlane.xlu0 %3006
      %v3008 = vsel %vm2908, %v2416, -inf
      %3009 = vmax.xlane.f32.xlu0 %v3008
      %v3010 = vpop.xlane.xlu0 %3009
      %v3011 = vsel %vm2908, %v2421, -inf
      %3012 = vmax.xlane.f32.xlu0 %v3011
      %v3013 = vpop.xlane.xlu0 %3012
      %v3014 = vsel %vm2908, %v2426, -inf
      %3015 = vmax.xlane.f32.xlu0 %v3014
      %v3016 = vpop.xlane.xlu0 %3015
      %v3017 = vsel %vm2908, %v2431, -inf
      %3018 = vmax.xlane.f32.xlu0 %v3017
      %v3019 = vpop.xlane.xlu0 %3018
      %v3020 = vsel %vm2908, %v2436, -inf
      %3021 = vmax.xlane.f32.xlu0 %v3020
      %v3022 = vpop.xlane.xlu0 %3021
      %v3023 = vsel %vm2908, %v2441, -inf
      %3024 = vmax.xlane.f32.xlu0 %v3023
      %v3025 = vpop.xlane.xlu0 %3024
      %v3026 = vsel %vm2908, %v2446, -inf
      %3027 = vmax.xlane.f32.xlu0 %v3026
      %v3028 = vpop.xlane.xlu0 %3027
      %v3029 = vsel %vm2908, %v2564, -inf
      %3030 = vmax.xlane.f32.xlu0 %v3029
      %v3031 = vpop.xlane.xlu0 %3030
      %v3032 = vsel %vm2908, %v2569, -inf
      %3033 = vmax.xlane.f32.xlu0 %v3032
      %v3034 = vpop.xlane.xlu0 %3033
      %v3035 = vsel %vm2908, %v2574, -inf
      %3036 = vmax.xlane.f32.xlu0 %v3035
      %v3037 = vpop.xlane.xlu0 %3036
      %v3038 = vsel %vm2908, %v2579, -inf
      %3039 = vmax.xlane.f32.xlu0 %v3038
      %v3040 = vpop.xlane.xlu0 %3039
      %v3041 = vsel %vm2908, %v2584, -inf
      %3042 = vmax.xlane.f32.xlu0 %v3041
      %v3043 = vpop.xlane.xlu0 %3042
      %v3044 = vsel %vm2908, %v2589, -inf
      %3045 = vmax.xlane.f32.xlu0 %v3044
      %v3046 = vpop.xlane.xlu0 %3045
      %v3047 = vsel %vm2908, %v2594, -inf
      %3048 = vmax.xlane.f32.xlu0 %v3047
      %v3049 = vpop.xlane.xlu0 %3048
      %v3050 = vsel %vm2908, %v2599, -inf
      %3051 = vmax.xlane.f32.xlu0 %v3050
      %v3052 = vpop.xlane.xlu0 %3051
      %v3053 = vsel %vm2908, %v2717, -inf
      %3054 = vmax.xlane.f32.xlu0 %v3053
      %v3055 = vpop.xlane.xlu0 %3054
      %v3056 = vsel %vm2908, %v2722, -inf
      %3057 = vmax.xlane.f32.xlu0 %v3056
      %v3058 = vpop.xlane.xlu0 %3057
      %v3059 = vsel %vm2908, %v2727, -inf
      %3060 = vmax.xlane.f32.xlu0 %v3059
      %v3061 = vpop.xlane.xlu0 %3060
      %v3062 = vsel %vm2908, %v2732, -inf
      %3063 = vmax.xlane.f32.xlu0 %v3062
      %v3064 = vpop.xlane.xlu0 %3063
      %v3065 = vsel %vm2908, %v2737, -inf
      %3066 = vmax.xlane.f32.xlu0 %v3065
      %v3067 = vpop.xlane.xlu0 %3066
      %v3068 = vsel %vm2908, %v2742, -inf
      %3069 = vmax.xlane.f32.xlu0 %v3068
      %v3070 = vpop.xlane.xlu0 %3069
      %v3071 = vsel %vm2908, %v2747, -inf
      %3072 = vmax.xlane.f32.xlu0 %v3071
      %v3073 = vpop.xlane.xlu0 %3072
      %v3074 = vsel %vm2908, %v2752, -inf
      %3075 = vmax.xlane.f32.xlu0 %v3074
      %v3076 = vpop.xlane.xlu0 %3075
      %v3077 = vsel %vm2908, %v2870, -inf
      %3078 = vmax.xlane.f32.xlu0 %v3077
      %v3079 = vpop.xlane.xlu0 %3078
      %v3080 = vsel %vm2908, %v2875, -inf
      %3081 = vmax.xlane.f32.xlu0 %v3080
      %v3082 = vpop.xlane.xlu0 %3081
      %v3083 = vsel %vm2908, %v2880, -inf
      %3084 = vmax.xlane.f32.xlu0 %v3083
      %v3085 = vpop.xlane.xlu0 %3084
      %v3086 = vsel %vm2908, %v2885, -inf
      %3087 = vmax.xlane.f32.xlu0 %v3086
      %v3088 = vpop.xlane.xlu0 %3087
      %v3089 = vsel %vm2908, %v2890, -inf
      %3090 = vmax.xlane.f32.xlu0 %v3089
      %v3091 = vpop.xlane.xlu0 %3090
      %v3092 = vsel %vm2908, %v2895, -inf
      %3093 = vmax.xlane.f32.xlu0 %v3092
      %v3094 = vpop.xlane.xlu0 %3093
      %v3095 = vsel %vm2908, %v2900, -inf
      %3096 = vmax.xlane.f32.xlu0 %v3095
      %v3097 = vpop.xlane.xlu0 %3096
      %v3098 = vsel %vm2908, %v2905, -inf
      %3099 = vmax.xlane.f32.xlu0 %v3098
      %v3100 = vpop.xlane.xlu0 %3099
      %v3101 = vsub.f32 %v1799, %v2911
      %v3102 = vsub.f32 %v1804, %v2914
      %v3103 = vsub.f32 %v1809, %v2917
      %v3104 = vsub.f32 %v1814, %v2920
      %v3105 = vsub.f32 %v1819, %v2923
      %v3106 = vsub.f32 %v1824, %v2926
      %v3107 = vsub.f32 %v1829, %v2929
      %v3108 = vsub.f32 %v1834, %v2932
      %v3109 = vsub.f32 %v1952, %v2935
      %v3110 = vsub.f32 %v1957, %v2938
      %v3111 = vsub.f32 %v1962, %v2941
      %v3112 = vsub.f32 %v1967, %v2944
      %v3113 = vsub.f32 %v1972, %v2947
      %v3114 = vsub.f32 %v1977, %v2950
      %v3115 = vsub.f32 %v1982, %v2953
      %v3116 = vsub.f32 %v1987, %v2956
      %v3117 = vsub.f32 %v2105, %v2959
      %v3118 = vsub.f32 %v2110, %v2962
      %v3119 = vsub.f32 %v2115, %v2965
      %v3120 = vsub.f32 %v2120, %v2968
      %v3121 = vsub.f32 %v2125, %v2971
      %v3122 = vsub.f32 %v2130, %v2974
      %v3123 = vsub.f32 %v2135, %v2977
      %v3124 = vsub.f32 %v2140, %v2980
      %v3125 = vsub.f32 %v2258, %v2983
      %v3126 = vsub.f32 %v2263, %v2986
      %v3127 = vsub.f32 %v2268, %v2989
      %v3128 = vsub.f32 %v2273, %v2992
      %v3129 = vsub.f32 %v2278, %v2995
      %v3130 = vsub.f32 %v2283, %v2998
      %v3131 = vsub.f32 %v2288, %v3001
      %v3132 = vsub.f32 %v2293, %v3004
      %v3133 = vsub.f32 %v2411, %v3007
      %v3134 = vsub.f32 %v2416, %v3010
      %v3135 = vsub.f32 %v2421, %v3013
      %v3136 = vsub.f32 %v2426, %v3016
      %v3137 = vsub.f32 %v2431, %v3019
      %v3138 = vsub.f32 %v2436, %v3022
      %v3139 = vsub.f32 %v2441, %v3025
      %v3140 = vsub.f32 %v2446, %v3028
      %v3141 = vsub.f32 %v2564, %v3031
      %v3142 = vsub.f32 %v2569, %v3034
      %v3143 = vsub.f32 %v2574, %v3037
      %v3144 = vsub.f32 %v2579, %v3040
      %v3145 = vsub.f32 %v2584, %v3043
      %v3146 = vsub.f32 %v2589, %v3046
      %v3147 = vsub.f32 %v2594, %v3049
      %v3148 = vsub.f32 %v2599, %v3052
      %v3149 = vsub.f32 %v2717, %v3055
      %v3150 = vsub.f32 %v2722, %v3058
      %v3151 = vsub.f32 %v2727, %v3061
      %v3152 = vsub.f32 %v2732, %v3064
      %v3153 = vsub.f32 %v2737, %v3067
      %v3154 = vsub.f32 %v2742, %v3070
      %v3155 = vsub.f32 %v2747, %v3073
      %v3156 = vsub.f32 %v2752, %v3076
      %v3157 = vsub.f32 %v2870, %v3079
      %v3158 = vsub.f32 %v2875, %v3082
      %v3159 = vsub.f32 %v2880, %v3085
      %v3160 = vsub.f32 %v2885, %v3088
      %v3161 = vsub.f32 %v2890, %v3091
      %v3162 = vsub.f32 %v2895, %v3094
      %v3163 = vsub.f32 %v2900, %v3097
      %v3164 = vsub.f32 %v2905, %v3100
      %v3165 = vmul.f32 %v3101, 1.442695
      %v3166 = vpow.pop %v3165
      %v3167 = vmul.f32 %v3102, 1.442695
      %v3168 = vpow.pop %v3167
      %v3169 = vmul.f32 %v3103, 1.442695
      %v3170 = vpow.pop %v3169
      %v3171 = vmul.f32 %v3104, 1.442695
      %v3172 = vpow.pop %v3171
      %v3173 = vmul.f32 %v3105, 1.442695
      %v3174 = vpow.pop %v3173
      %v3175 = vmul.f32 %v3106, 1.442695
      %v3176 = vpow.pop %v3175
      %v3177 = vmul.f32 %v3107, 1.442695
      %v3178 = vpow.pop %v3177
      %v3179 = vmul.f32 %v3108, 1.442695
      %v3180 = vpow.pop %v3179
      %v3181 = vmul.f32 %v3109, 1.442695
      %v3182 = vpow.pop %v3181
      %v3183 = vmul.f32 %v3110, 1.442695
      %v3184 = vpow.pop %v3183
      %v3185 = vmul.f32 %v3111, 1.442695
      %v3186 = vpow.pop %v3185
      %v3187 = vmul.f32 %v3112, 1.442695
      %v3188 = vpow.pop %v3187
      %v3189 = vmul.f32 %v3113, 1.442695
      %v3190 = vpow.pop %v3189
      %v3191 = vmul.f32 %v3114, 1.442695
      %v3192 = vpow.pop %v3191
      %v3193 = vmul.f32 %v3115, 1.442695
      %v3194 = vpow.pop %v3193
      %v3195 = vmul.f32 %v3116, 1.442695
      %v3196 = vpow.pop %v3195
      %v3197 = vmul.f32 %v3117, 1.442695
      %v3198 = vpow.pop %v3197
      %v3199 = vmul.f32 %v3118, 1.442695
      %v3200 = vpow.pop %v3199
      %v3201 = vmul.f32 %v3119, 1.442695
      %v3202 = vpow.pop %v3201
      %v3203 = vmul.f32 %v3120, 1.442695
      %v3204 = vpow.pop %v3203
      %v3205 = vmul.f32 %v3121, 1.442695
      %v3206 = vpow.pop %v3205
      %v3207 = vmul.f32 %v3122, 1.442695
      %v3208 = vpow.pop %v3207
      %v3209 = vmul.f32 %v3123, 1.442695
      %v3210 = vpow.pop %v3209
      %v3211 = vmul.f32 %v3124, 1.442695
      %v3212 = vpow.pop %v3211
      %v3213 = vmul.f32 %v3125, 1.442695
      %v3214 = vpow.pop %v3213
      %v3215 = vmul.f32 %v3126, 1.442695
      %v3216 = vpow.pop %v3215
      %v3217 = vmul.f32 %v3127, 1.442695
      %v3218 = vpow.pop %v3217
      %v3219 = vmul.f32 %v3128, 1.442695
      %v3220 = vpow.pop %v3219
      %v3221 = vmul.f32 %v3129, 1.442695
      %v3222 = vpow.pop %v3221
      %v3223 = vmul.f32 %v3130, 1.442695
      %v3224 = vpow.pop %v3223
      %v3225 = vmul.f32 %v3131, 1.442695
      %v3226 = vpow.pop %v3225
      %v3227 = vmul.f32 %v3132, 1.442695
      %v3228 = vpow.pop %v3227
      %v3229 = vmul.f32 %v3133, 1.442695
      %v3230 = vpow.pop %v3229
      %v3231 = vmul.f32 %v3134, 1.442695
      %v3232 = vpow.pop %v3231
      %v3233 = vmul.f32 %v3135, 1.442695
      %v3234 = vpow.pop %v3233
      %v3235 = vmul.f32 %v3136, 1.442695
      %v3236 = vpow.pop %v3235
      %v3237 = vmul.f32 %v3137, 1.442695
      %v3238 = vpow.pop %v3237
      %v3239 = vmul.f32 %v3138, 1.442695
      %v3240 = vpow.pop %v3239
      %v3241 = vmul.f32 %v3139, 1.442695
      %v3242 = vpow.pop %v3241
      %v3243 = vmul.f32 %v3140, 1.442695
      %v3244 = vpow.pop %v3243
      %v3245 = vmul.f32 %v3141, 1.442695
      %v3246 = vpow.pop %v3245
      %v3247 = vmul.f32 %v3142, 1.442695
      %v3248 = vpow.pop %v3247
      %v3249 = vmul.f32 %v3143, 1.442695
      %v3250 = vpow.pop %v3249
      %v3251 = vmul.f32 %v3144, 1.442695
      %v3252 = vpow.pop %v3251
      %v3253 = vmul.f32 %v3145, 1.442695
      %v3254 = vpow.pop %v3253
      %v3255 = vmul.f32 %v3146, 1.442695
      %v3256 = vpow.pop %v3255
      %v3257 = vmul.f32 %v3147, 1.442695
      %v3258 = vpow.pop %v3257
      %v3259 = vmul.f32 %v3148, 1.442695
      %v3260 = vpow.pop %v3259
      %v3261 = vmul.f32 %v3149, 1.442695
      %v3262 = vpow.pop %v3261
      %v3263 = vmul.f32 %v3150, 1.442695
      %v3264 = vpow.pop %v3263
      %v3265 = vmul.f32 %v3151, 1.442695
      %v3266 = vpow.pop %v3265
      %v3267 = vmul.f32 %v3152, 1.442695
      %v3268 = vpow.pop %v3267
      %v3269 = vmul.f32 %v3153, 1.442695
      %v3270 = vpow.pop %v3269
      %v3271 = vmul.f32 %v3154, 1.442695
      %v3272 = vpow.pop %v3271
      %v3273 = vmul.f32 %v3155, 1.442695
      %v3274 = vpow.pop %v3273
      %v3275 = vmul.f32 %v3156, 1.442695
      %v3276 = vpow.pop %v3275
      %v3277 = vmul.f32 %v3157, 1.442695
      %v3278 = vpow.pop %v3277
      %v3279 = vmul.f32 %v3158, 1.442695
      %v3280 = vpow.pop %v3279
      %v3281 = vmul.f32 %v3159, 1.442695
      %v3282 = vpow.pop %v3281
      %v3283 = vmul.f32 %v3160, 1.442695
      %v3284 = vpow.pop %v3283
      %v3285 = vmul.f32 %v3161, 1.442695
      %v3286 = vpow.pop %v3285
      %v3287 = vmul.f32 %v3162, 1.442695
      %v3288 = vpow.pop %v3287
      %v3289 = vmul.f32 %v3163, 1.442695
      %v3290 = vpow.pop %v3289
      %v3291 = vmul.f32 %v3164, 1.442695
      %v3292 = vpow.pop %v3291
      %v3293 = vsel %vm2908, %v3166, 0.0
      %3294 = vadd.xlane.f32.xlu0 %v3293
      %v3295 = vpop.xlane.xlu0 %3294
      %v3296 = vsel %vm2908, %v3168, 0.0
      %3297 = vadd.xlane.f32.xlu0 %v3296
      %v3298 = vpop.xlane.xlu0 %3297
      %v3299 = vsel %vm2908, %v3170, 0.0
      %3300 = vadd.xlane.f32.xlu0 %v3299
      %v3301 = vpop.xlane.xlu0 %3300
      %v3302 = vsel %vm2908, %v3172, 0.0
      %3303 = vadd.xlane.f32.xlu0 %v3302
      %v3304 = vpop.xlane.xlu0 %3303
      %v3305 = vsel %vm2908, %v3174, 0.0
      %3306 = vadd.xlane.f32.xlu0 %v3305
      %v3307 = vpop.xlane.xlu0 %3306
      %v3308 = vsel %vm2908, %v3176, 0.0
      %3309 = vadd.xlane.f32.xlu0 %v3308
      %v3310 = vpop.xlane.xlu0 %3309
      %v3311 = vsel %vm2908, %v3178, 0.0
      %3312 = vadd.xlane.f32.xlu0 %v3311
      %v3313 = vpop.xlane.xlu0 %3312
      %v3314 = vsel %vm2908, %v3180, 0.0
      %3315 = vadd.xlane.f32.xlu0 %v3314
      %v3316 = vpop.xlane.xlu0 %3315
      %v3317 = vsel %vm2908, %v3182, 0.0
      %3318 = vadd.xlane.f32.xlu0 %v3317
      %v3319 = vpop.xlane.xlu0 %3318
      %v3320 = vsel %vm2908, %v3184, 0.0
      %3321 = vadd.xlane.f32.xlu0 %v3320
      %v3322 = vpop.xlane.xlu0 %3321
      %v3323 = vsel %vm2908, %v3186, 0.0
      %3324 = vadd.xlane.f32.xlu0 %v3323
      %v3325 = vpop.xlane.xlu0 %3324
      %v3326 = vsel %vm2908, %v3188, 0.0
      %3327 = vadd.xlane.f32.xlu0 %v3326
      %v3328 = vpop.xlane.xlu0 %3327
      %v3329 = vsel %vm2908, %v3190, 0.0
      %3330 = vadd.xlane.f32.xlu0 %v3329
      %v3331 = vpop.xlane.xlu0 %3330
      %v3332 = vsel %vm2908, %v3192, 0.0
      %3333 = vadd.xlane.f32.xlu0 %v3332
      %v3334 = vpop.xlane.xlu0 %3333
      %v3335 = vsel %vm2908, %v3194, 0.0
      %3336 = vadd.xlane.f32.xlu0 %v3335
      %v3337 = vpop.xlane.xlu0 %3336
      %v3338 = vsel %vm2908, %v3196, 0.0
      %3339 = vadd.xlane.f32.xlu0 %v3338
      %v3340 = vpop.xlane.xlu0 %3339
      %v3341 = vsel %vm2908, %v3198, 0.0
      %3342 = vadd.xlane.f32.xlu0 %v3341
      %v3343 = vpop.xlane.xlu0 %3342
      %v3344 = vsel %vm2908, %v3200, 0.0
      %3345 = vadd.xlane.f32.xlu0 %v3344
      %v3346 = vpop.xlane.xlu0 %3345
      %v3347 = vsel %vm2908, %v3202, 0.0
      %3348 = vadd.xlane.f32.xlu0 %v3347
      %v3349 = vpop.xlane.xlu0 %3348
      %v3350 = vsel %vm2908, %v3204, 0.0
      %3351 = vadd.xlane.f32.xlu0 %v3350
      %v3352 = vpop.xlane.xlu0 %3351
      %v3353 = vsel %vm2908, %v3206, 0.0
      %3354 = vadd.xlane.f32.xlu0 %v3353
      %v3355 = vpop.xlane.xlu0 %3354
      %v3356 = vsel %vm2908, %v3208, 0.0
      %3357 = vadd.xlane.f32.xlu0 %v3356
      %v3358 = vpop.xlane.xlu0 %3357
      %v3359 = vsel %vm2908, %v3210, 0.0
      %3360 = vadd.xlane.f32.xlu0 %v3359
      %v3361 = vpop.xlane.xlu0 %3360
      %v3362 = vsel %vm2908, %v3212, 0.0
      %3363 = vadd.xlane.f32.xlu0 %v3362
      %v3364 = vpop.xlane.xlu0 %3363
      %v3365 = vsel %vm2908, %v3214, 0.0
      %3366 = vadd.xlane.f32.xlu0 %v3365
      %v3367 = vpop.xlane.xlu0 %3366
      %v3368 = vsel %vm2908, %v3216, 0.0
      %3369 = vadd.xlane.f32.xlu0 %v3368
      %v3370 = vpop.xlane.xlu0 %3369
      %v3371 = vsel %vm2908, %v3218, 0.0
      %3372 = vadd.xlane.f32.xlu0 %v3371
      %v3373 = vpop.xlane.xlu0 %3372
      %v3374 = vsel %vm2908, %v3220, 0.0
      %3375 = vadd.xlane.f32.xlu0 %v3374
      %v3376 = vpop.xlane.xlu0 %3375
      %v3377 = vsel %vm2908, %v3222, 0.0
      %3378 = vadd.xlane.f32.xlu0 %v3377
      %v3379 = vpop.xlane.xlu0 %3378
      %v3380 = vsel %vm2908, %v3224, 0.0
      %3381 = vadd.xlane.f32.xlu0 %v3380
      %v3382 = vpop.xlane.xlu0 %3381
      %v3383 = vsel %vm2908, %v3226, 0.0
      %3384 = vadd.xlane.f32.xlu0 %v3383
      %v3385 = vpop.xlane.xlu0 %3384
      %v3386 = vsel %vm2908, %v3228, 0.0
      %3387 = vadd.xlane.f32.xlu0 %v3386
      %v3388 = vpop.xlane.xlu0 %3387
      %v3389 = vsel %vm2908, %v3230, 0.0
      %3390 = vadd.xlane.f32.xlu0 %v3389
      %v3391 = vpop.xlane.xlu0 %3390
      %v3392 = vsel %vm2908, %v3232, 0.0
      %3393 = vadd.xlane.f32.xlu0 %v3392
      %v3394 = vpop.xlane.xlu0 %3393
      %v3395 = vsel %vm2908, %v3234, 0.0
      %3396 = vadd.xlane.f32.xlu0 %v3395
      %v3397 = vpop.xlane.xlu0 %3396
      %v3398 = vsel %vm2908, %v3236, 0.0
      %3399 = vadd.xlane.f32.xlu0 %v3398
      %v3400 = vpop.xlane.xlu0 %3399
      %v3401 = vsel %vm2908, %v3238, 0.0
      %3402 = vadd.xlane.f32.xlu0 %v3401
      %v3403 = vpop.xlane.xlu0 %3402
      %v3404 = vsel %vm2908, %v3240, 0.0
      %3405 = vadd.xlane.f32.xlu0 %v3404
      %v3406 = vpop.xlane.xlu0 %3405
      %v3407 = vsel %vm2908, %v3242, 0.0
      %3408 = vadd.xlane.f32.xlu0 %v3407
      %v3409 = vpop.xlane.xlu0 %3408
      %v3410 = vsel %vm2908, %v3244, 0.0
      %3411 = vadd.xlane.f32.xlu0 %v3410
      %v3412 = vpop.xlane.xlu0 %3411
      %v3413 = vsel %vm2908, %v3246, 0.0
      %3414 = vadd.xlane.f32.xlu0 %v3413
      %v3415 = vpop.xlane.xlu0 %3414
      %v3416 = vsel %vm2908, %v3248, 0.0
      %3417 = vadd.xlane.f32.xlu0 %v3416
      %v3418 = vpop.xlane.xlu0 %3417
      %v3419 = vsel %vm2908, %v3250, 0.0
      %3420 = vadd.xlane.f32.xlu0 %v3419
      %v3421 = vpop.xlane.xlu0 %3420
      %v3422 = vsel %vm2908, %v3252, 0.0
      %3423 = vadd.xlane.f32.xlu0 %v3422
      %v3424 = vpop.xlane.xlu0 %3423
      %v3425 = vsel %vm2908, %v3254, 0.0
      %3426 = vadd.xlane.f32.xlu0 %v3425
      %v3427 = vpop.xlane.xlu0 %3426
      %v3428 = vsel %vm2908, %v3256, 0.0
      %3429 = vadd.xlane.f32.xlu0 %v3428
      %v3430 = vpop.xlane.xlu0 %3429
      %v3431 = vsel %vm2908, %v3258, 0.0
      %3432 = vadd.xlane.f32.xlu0 %v3431
      %v3433 = vpop.xlane.xlu0 %3432
      %v3434 = vsel %vm2908, %v3260, 0.0
      %3435 = vadd.xlane.f32.xlu0 %v3434
      %v3436 = vpop.xlane.xlu0 %3435
      %v3437 = vsel %vm2908, %v3262, 0.0
      %3438 = vadd.xlane.f32.xlu0 %v3437
      %v3439 = vpop.xlane.xlu0 %3438
      %v3440 = vsel %vm2908, %v3264, 0.0
      %3441 = vadd.xlane.f32.xlu0 %v3440
      %v3442 = vpop.xlane.xlu0 %3441
      %v3443 = vsel %vm2908, %v3266, 0.0
      %3444 = vadd.xlane.f32.xlu0 %v3443
      %v3445 = vpop.xlane.xlu0 %3444
      %v3446 = vsel %vm2908, %v3268, 0.0
      %3447 = vadd.xlane.f32.xlu0 %v3446
      %v3448 = vpop.xlane.xlu0 %3447
      %v3449 = vsel %vm2908, %v3270, 0.0
      %3450 = vadd.xlane.f32.xlu0 %v3449
      %v3451 = vpop.xlane.xlu0 %3450
      %v3452 = vsel %vm2908, %v3272, 0.0
      %3453 = vadd.xlane.f32.xlu0 %v3452
      %v3454 = vpop.xlane.xlu0 %3453
      %v3455 = vsel %vm2908, %v3274, 0.0
      %3456 = vadd.xlane.f32.xlu0 %v3455
      %v3457 = vpop.xlane.xlu0 %3456
      %v3458 = vsel %vm2908, %v3276, 0.0
      %3459 = vadd.xlane.f32.xlu0 %v3458
      %v3460 = vpop.xlane.xlu0 %3459
      %v3461 = vsel %vm2908, %v3278, 0.0
      %3462 = vadd.xlane.f32.xlu0 %v3461
      %v3463 = vpop.xlane.xlu0 %3462
      %v3464 = vsel %vm2908, %v3280, 0.0
      %3465 = vadd.xlane.f32.xlu0 %v3464
      %v3466 = vpop.xlane.xlu0 %3465
      %v3467 = vsel %vm2908, %v3282, 0.0
      %3468 = vadd.xlane.f32.xlu0 %v3467
      %v3469 = vpop.xlane.xlu0 %3468
      %v3470 = vsel %vm2908, %v3284, 0.0
      %3471 = vadd.xlane.f32.xlu0 %v3470
      %v3472 = vpop.xlane.xlu0 %3471
      %v3473 = vsel %vm2908, %v3286, 0.0
      %3474 = vadd.xlane.f32.xlu0 %v3473
      %v3475 = vpop.xlane.xlu0 %3474
      %v3476 = vsel %vm2908, %v3288, 0.0
      %3477 = vadd.xlane.f32.xlu0 %v3476
      %v3478 = vpop.xlane.xlu0 %3477
      %v3479 = vsel %vm2908, %v3290, 0.0
      %3480 = vadd.xlane.f32.xlu0 %v3479
      %v3481 = vpop.xlane.xlu0 %3480
      %v3482 = vsel %vm2908, %v3292, 0.0
      %3483 = vadd.xlane.f32.xlu0 %v3482
      %v3484 = vpop.xlane.xlu0 %3483
      %v3486 = vsel %vm2908, %v3166, 0
      %v3489 = vsel %vm2908, %v3168, 0
      %v3492 = vsel %vm2908, %v3170, 0
      %v3495 = vsel %vm2908, %v3172, 0
      %v3498 = vsel %vm2908, %v3174, 0
      %v3501 = vsel %vm2908, %v3176, 0
      %v3504 = vsel %vm2908, %v3178, 0
      %v3507 = vsel %vm2908, %v3180, 0
      %3509 = vmatprep.subr.mxu0 0.0
      %3510 = vmatpush1.msra.mxu0 0.0
      %3511 = vmatprep.subr.mxu0 0.0
      %3512 = vmatpush1.msra.mxu0 0.0
      %3513 = vmatprep.subr.mxu0 0.0
      %3514 = vmatpush1.msra.mxu0 0.0
      %3515 = vmatprep.subr.mxu0 0.0
      %3516 = vmatpush1.msra.mxu0 0.0
      %3517 = vmatprep.subr.mxu0 0.0
      %3518 = vmatpush1.msra.mxu0 0.0
      %3519 = vmatprep.subr.mxu0 0.0
      %3520 = vmatpush1.msra.mxu0 0.0
      %3521 = vmatprep.subr.mxu0 0.0
      %3522 = vmatpush1.msra.mxu0 0.0
      %3523 = vmatprep.subr.mxu0 0.0
      %3524 = vmatpush1.msra.mxu0 0.0
      %3525 = vmatprep.subr.mxu0 0.0
      %3526 = vmatpush1.msra.mxu0 %v1401
      %3527 = vmatprep.subr.mxu0 0.0
      %3528 = vmatpush1.msra.mxu0 %v1396
      %3529 = vmatprep.subr.mxu0 0.0
      %3530 = vmatpush1.msra.mxu0 %v1391
      %3531 = vmatprep.subr.mxu0 0.0
      %3532 = vmatpush1.msra.mxu0 %v1386
      %3533 = vmatprep.subr.mxu0 0.0
      %3534 = vmatpush1.msra.mxu0 %v1381
      %3535 = vmatprep.subr.mxu0 0.0
      %3536 = vmatpush1.msra.mxu0 %v1376
      %3537 = vmatprep.subr.mxu0 0.0
      %3538 = vmatpush1.msra.mxu0 %v1371
      %3539 = vmatprep.subr.mxu0 0.0
      %3540 = vmatpush1.msra.mxu0 %v1366
      %3541 = vmatprep.subr.mxu0 0.0
      %3542 = vmatpush2.msra.mxu0 0.0
      %3543 = vmatprep.subr.mxu0 0.0
      %3544 = vmatpush2.msra.mxu0 0.0
      %3545 = vmatprep.subr.mxu0 0.0
      %3546 = vmatpush2.msra.mxu0 0.0
      %3547 = vmatprep.subr.mxu0 0.0
      %3548 = vmatpush2.msra.mxu0 0.0
      %3549 = vmatprep.subr.mxu0 0.0
      %3550 = vmatpush2.msra.mxu0 0.0
      %3551 = vmatprep.subr.mxu0 0.0
      %3552 = vmatpush2.msra.mxu0 0.0
      %3553 = vmatprep.subr.mxu0 0.0
      %3554 = vmatpush2.msra.mxu0 0.0
      %3555 = vmatprep.subr.mxu0 0.0
      %3556 = vmatpush2.msra.mxu0 0.0
      %3557 = vmatprep.subr.mxu0 0.0
      %3558 = vmatpush2.msra.mxu0 0.0
      %3559 = vmatprep.subr.mxu0 0.0
      %3560 = vmatpush2.msra.mxu0 0.0
      %3561 = vmatprep.subr.mxu0 0.0
      %3562 = vmatpush2.msra.mxu0 0.0
      %3563 = vmatprep.subr.mxu0 0.0
      %3564 = vmatpush2.msra.mxu0 0.0
      %3565 = vmatprep.subr.mxu0 0.0
      %3566 = vmatpush2.msra.mxu0 0.0
      %3567 = vmatprep.subr.mxu0 0.0
      %3568 = vmatpush2.msra.mxu0 0.0
      %3569 = vmatprep.subr.mxu0 0.0
      %3570 = vmatpush2.msra.mxu0 0.0
      %3571 = vmatprep.subr.mxu0 0.0
      %3572 = vmatpush2.msra.mxu0 0.0
      %3573 = vmatprep.mubr.f32.mxu0 0.0
      %3574 = vmatmul.mubr.f32.gmra.mxu0 %v3486
      %v3575 = vpop.f32.mrf.mxu0
      %v3576 = vadd.f32 0.0, %v3575
      %v3577 = vpop.f32.mrf.mxu0
      %3578 = vmatprep.mubr.f32.mxu0 0.0
      %3579 = vmatmul.mubr.f32.gmra.mxu0 %v3489
      %v3580 = vpop.f32.mrf.mxu0
      %v3581 = vadd.f32 0.0, %v3580
      %v3582 = vpop.f32.mrf.mxu0
      %3583 = vmatprep.mubr.f32.mxu0 0.0
      %3584 = vmatmul.mubr.f32.gmra.mxu0 %v3492
      %v3585 = vpop.f32.mrf.mxu0
      %v3586 = vadd.f32 0.0, %v3585
      %v3587 = vpop.f32.mrf.mxu0
      %3588 = vmatprep.mubr.f32.mxu0 0.0
      %3589 = vmatmul.mubr.f32.gmra.mxu0 %v3495
      %v3590 = vpop.f32.mrf.mxu0
      %v3591 = vadd.f32 0.0, %v3590
      %v3592 = vpop.f32.mrf.mxu0
      %3593 = vmatprep.mubr.f32.mxu0 0.0
      %3594 = vmatmul.mubr.f32.gmra.mxu0 %v3498
      %v3595 = vpop.f32.mrf.mxu0
      %v3596 = vadd.f32 0.0, %v3595
      %v3597 = vpop.f32.mrf.mxu0
      %3598 = vmatprep.mubr.f32.mxu0 0.0
      %3599 = vmatmul.mubr.f32.gmra.mxu0 %v3501
      %v3600 = vpop.f32.mrf.mxu0
      %v3601 = vadd.f32 0.0, %v3600
      %v3602 = vpop.f32.mrf.mxu0
      %3603 = vmatprep.mubr.f32.mxu0 0.0
      %3604 = vmatmul.mubr.f32.gmra.mxu0 %v3504
      %v3605 = vpop.f32.mrf.mxu0
      %v3606 = vadd.f32 0.0, %v3605
      %v3607 = vpop.f32.mrf.mxu0
      %3608 = vmatprep.mubr.f32.mxu0 0.0
      %3609 = vmatmul.mubr.f32.gmra.mxu0 %v3507
      %v3610 = vpop.f32.mrf.mxu0
      %v3611 = vadd.f32 0.0, %v3610
      %v3612 = vpop.f32.mrf.mxu0
      %3613 = vdwg.mxu0
      %v3615 = vsel %vm2908, %v3182, 0
      %v3618 = vsel %vm2908, %v3184, 0
      %v3621 = vsel %vm2908, %v3186, 0
      %v3624 = vsel %vm2908, %v3188, 0
      %v3627 = vsel %vm2908, %v3190, 0
      %v3630 = vsel %vm2908, %v3192, 0
      %v3633 = vsel %vm2908, %v3194, 0
      %v3636 = vsel %vm2908, %v3196, 0
      %3638 = vmatprep.subr.mxu0 0.0
      %3639 = vmatpush1.msra.mxu0 0.0
      %3640 = vmatprep.subr.mxu0 0.0
      %3641 = vmatpush1.msra.mxu0 0.0
      %3642 = vmatprep.subr.mxu0 0.0
      %3643 = vmatpush1.msra.mxu0 0.0
      %3644 = vmatprep.subr.mxu0 0.0
      %3645 = vmatpush1.msra.mxu0 0.0
      %3646 = vmatprep.subr.mxu0 0.0
      %3647 = vmatpush1.msra.mxu0 0.0
      %3648 = vmatprep.subr.mxu0 0.0
      %3649 = vmatpush1.msra.mxu0 0.0
      %3650 = vmatprep.subr.mxu0 0.0
      %3651 = vmatpush1.msra.mxu0 0.0
      %3652 = vmatprep.subr.mxu0 0.0
      %3653 = vmatpush1.msra.mxu0 0.0
      %3654 = vmatprep.subr.mxu0 0.0
      %3655 = vmatpush1.msra.mxu0 %v1441
      %3656 = vmatprep.subr.mxu0 0.0
      %3657 = vmatpush1.msra.mxu0 %v1436
      %3658 = vmatprep.subr.mxu0 0.0
      %3659 = vmatpush1.msra.mxu0 %v1431
      %3660 = vmatprep.subr.mxu0 0.0
      %3661 = vmatpush1.msra.mxu0 %v1426
      %3662 = vmatprep.subr.mxu0 0.0
      %3663 = vmatpush1.msra.mxu0 %v1421
      %3664 = vmatprep.subr.mxu0 0.0
      %3665 = vmatpush1.msra.mxu0 %v1416
      %3666 = vmatprep.subr.mxu0 0.0
      %3667 = vmatpush1.msra.mxu0 %v1411
      %3668 = vmatprep.subr.mxu0 0.0
      %3669 = vmatpush1.msra.mxu0 %v1406
      %3670 = vmatprep.subr.mxu0 0.0
      %3671 = vmatpush2.msra.mxu0 0.0
      %3672 = vmatprep.subr.mxu0 0.0
      %3673 = vmatpush2.msra.mxu0 0.0
      %3674 = vmatprep.subr.mxu0 0.0
      %3675 = vmatpush2.msra.mxu0 0.0
      %3676 = vmatprep.subr.mxu0 0.0
      %3677 = vmatpush2.msra.mxu0 0.0
      %3678 = vmatprep.subr.mxu0 0.0
      %3679 = vmatpush2.msra.mxu0 0.0
      %3680 = vmatprep.subr.mxu0 0.0
      %3681 = vmatpush2.msra.mxu0 0.0
      %3682 = vmatprep.subr.mxu0 0.0
      %3683 = vmatpush2.msra.mxu0 0.0
      %3684 = vmatprep.subr.mxu0 0.0
      %3685 = vmatpush2.msra.mxu0 0.0
      %3686 = vmatprep.subr.mxu0 0.0
      %3687 = vmatpush2.msra.mxu0 0.0
      %3688 = vmatprep.subr.mxu0 0.0
      %3689 = vmatpush2.msra.mxu0 0.0
      %3690 = vmatprep.subr.mxu0 0.0
      %3691 = vmatpush2.msra.mxu0 0.0
      %3692 = vmatprep.subr.mxu0 0.0
      %3693 = vmatpush2.msra.mxu0 0.0
      %3694 = vmatprep.subr.mxu0 0.0
      %3695 = vmatpush2.msra.mxu0 0.0
      %3696 = vmatprep.subr.mxu0 0.0
      %3697 = vmatpush2.msra.mxu0 0.0
      %3698 = vmatprep.subr.mxu0 0.0
      %3699 = vmatpush2.msra.mxu0 0.0
      %3700 = vmatprep.subr.mxu0 0.0
      %3701 = vmatpush2.msra.mxu0 0.0
      %3702 = vmatprep.mubr.f32.mxu0 0.0
      %3703 = vmatmul.mubr.f32.gmra.mxu0 %v3615
      %v3704 = vpop.f32.mrf.mxu0
      %v3705 = vadd.f32 0.0, %v3704
      %v3706 = vpop.f32.mrf.mxu0
      %3707 = vmatprep.mubr.f32.mxu0 0.0
      %3708 = vmatmul.mubr.f32.gmra.mxu0 %v3618
      %v3709 = vpop.f32.mrf.mxu0
      %v3710 = vadd.f32 0.0, %v3709
      %v3711 = vpop.f32.mrf.mxu0
      %3712 = vmatprep.mubr.f32.mxu0 0.0
      %3713 = vmatmul.mubr.f32.gmra.mxu0 %v3621
      %v3714 = vpop.f32.mrf.mxu0
      %v3715 = vadd.f32 0.0, %v3714
      %v3716 = vpop.f32.mrf.mxu0
      %3717 = vmatprep.mubr.f32.mxu0 0.0
      %3718 = vmatmul.mubr.f32.gmra.mxu0 %v3624
      %v3719 = vpop.f32.mrf.mxu0
      %v3720 = vadd.f32 0.0, %v3719
      %v3721 = vpop.f32.mrf.mxu0
      %3722 = vmatprep.mubr.f32.mxu0 0.0
      %3723 = vmatmul.mubr.f32.gmra.mxu0 %v3627
      %v3724 = vpop.f32.mrf.mxu0
      %v3725 = vadd.f32 0.0, %v3724
      %v3726 = vpop.f32.mrf.mxu0
      %3727 = vmatprep.mubr.f32.mxu0 0.0
      %3728 = vmatmul.mubr.f32.gmra.mxu0 %v3630
      %v3729 = vpop.f32.mrf.mxu0
      %v3730 = vadd.f32 0.0, %v3729
      %v3731 = vpop.f32.mrf.mxu0
      %3732 = vmatprep.mubr.f32.mxu0 0.0
      %3733 = vmatmul.mubr.f32.gmra.mxu0 %v3633
      %v3734 = vpop.f32.mrf.mxu0
      %v3735 = vadd.f32 0.0, %v3734
      %v3736 = vpop.f32.mrf.mxu0
      %3737 = vmatprep.mubr.f32.mxu0 0.0
      %3738 = vmatmul.mubr.f32.gmra.mxu0 %v3636
      %v3739 = vpop.f32.mrf.mxu0
      %v3740 = vadd.f32 0.0, %v3739
      %v3741 = vpop.f32.mrf.mxu0
      %3742 = vdwg.mxu0
      %v3744 = vsel %vm2908, %v3198, 0
      %v3747 = vsel %vm2908, %v3200, 0
      %v3750 = vsel %vm2908, %v3202, 0
      %v3753 = vsel %vm2908, %v3204, 0
      %v3756 = vsel %vm2908, %v3206, 0
      %v3759 = vsel %vm2908, %v3208, 0
      %v3762 = vsel %vm2908, %v3210, 0
      %v3765 = vsel %vm2908, %v3212, 0
      %3767 = vmatprep.subr.mxu0 0.0
      %3768 = vmatpush1.msra.mxu0 0.0
      %3769 = vmatprep.subr.mxu0 0.0
      %3770 = vmatpush1.msra.mxu0 0.0
      %3771 = vmatprep.subr.mxu0 0.0
      %3772 = vmatpush1.msra.mxu0 0.0
      %3773 = vmatprep.subr.mxu0 0.0
      %3774 = vmatpush1.msra.mxu0 0.0
      %3775 = vmatprep.subr.mxu0 0.0
      %3776 = vmatpush1.msra.mxu0 0.0
      %3777 = vmatprep.subr.mxu0 0.0
      %3778 = vmatpush1.msra.mxu0 0.0
      %3779 = vmatprep.subr.mxu0 0.0
      %3780 = vmatpush1.msra.mxu0 0.0
      %3781 = vmatprep.subr.mxu0 0.0
      %3782 = vmatpush1.msra.mxu0 0.0
      %3783 = vmatprep.subr.mxu0 0.0
      %3784 = vmatpush1.msra.mxu0 %v1481
      %3785 = vmatprep.subr.mxu0 0.0
      %3786 = vmatpush1.msra.mxu0 %v1476
      %3787 = vmatprep.subr.mxu0 0.0
      %3788 = vmatpush1.msra.mxu0 %v1471
      %3789 = vmatprep.subr.mxu0 0.0
      %3790 = vmatpush1.msra.mxu0 %v1466
      %3791 = vmatprep.subr.mxu0 0.0
      %3792 = vmatpush1.msra.mxu0 %v1461
      %3793 = vmatprep.subr.mxu0 0.0
      %3794 = vmatpush1.msra.mxu0 %v1456
      %3795 = vmatprep.subr.mxu0 0.0
      %3796 = vmatpush1.msra.mxu0 %v1451
      %3797 = vmatprep.subr.mxu0 0.0
      %3798 = vmatpush1.msra.mxu0 %v1446
      %3799 = vmatprep.subr.mxu0 0.0
      %3800 = vmatpush2.msra.mxu0 0.0
      %3801 = vmatprep.subr.mxu0 0.0
      %3802 = vmatpush2.msra.mxu0 0.0
      %3803 = vmatprep.subr.mxu0 0.0
      %3804 = vmatpush2.msra.mxu0 0.0
      %3805 = vmatprep.subr.mxu0 0.0
      %3806 = vmatpush2.msra.mxu0 0.0
      %3807 = vmatprep.subr.mxu0 0.0
      %3808 = vmatpush2.msra.mxu0 0.0
      %3809 = vmatprep.subr.mxu0 0.0
      %3810 = vmatpush2.msra.mxu0 0.0
      %3811 = vmatprep.subr.mxu0 0.0
      %3812 = vmatpush2.msra.mxu0 0.0
      %3813 = vmatprep.subr.mxu0 0.0
      %3814 = vmatpush2.msra.mxu0 0.0
      %3815 = vmatprep.subr.mxu0 0.0
      %3816 = vmatpush2.msra.mxu0 0.0
      %3817 = vmatprep.subr.mxu0 0.0
      %3818 = vmatpush2.msra.mxu0 0.0
      %3819 = vmatprep.subr.mxu0 0.0
      %3820 = vmatpush2.msra.mxu0 0.0
      %3821 = vmatprep.subr.mxu0 0.0
      %3822 = vmatpush2.msra.mxu0 0.0
      %3823 = vmatprep.subr.mxu0 0.0
      %3824 = vmatpush2.msra.mxu0 0.0
      %3825 = vmatprep.subr.mxu0 0.0
      %3826 = vmatpush2.msra.mxu0 0.0
      %3827 = vmatprep.subr.mxu0 0.0
      %3828 = vmatpush2.msra.mxu0 0.0
      %3829 = vmatprep.subr.mxu0 0.0
      %3830 = vmatpush2.msra.mxu0 0.0
      %3831 = vmatprep.mubr.f32.mxu0 0.0
      %3832 = vmatmul.mubr.f32.gmra.mxu0 %v3744
      %v3833 = vpop.f32.mrf.mxu0
      %v3834 = vadd.f32 0.0, %v3833
      %v3835 = vpop.f32.mrf.mxu0
      %3836 = vmatprep.mubr.f32.mxu0 0.0
      %3837 = vmatmul.mubr.f32.gmra.mxu0 %v3747
      %v3838 = vpop.f32.mrf.mxu0
      %v3839 = vadd.f32 0.0, %v3838
      %v3840 = vpop.f32.mrf.mxu0
      %3841 = vmatprep.mubr.f32.mxu0 0.0
      %3842 = vmatmul.mubr.f32.gmra.mxu0 %v3750
      %v3843 = vpop.f32.mrf.mxu0
      %v3844 = vadd.f32 0.0, %v3843
      %v3845 = vpop.f32.mrf.mxu0
      %3846 = vmatprep.mubr.f32.mxu0 0.0
      %3847 = vmatmul.mubr.f32.gmra.mxu0 %v3753
      %v3848 = vpop.f32.mrf.mxu0
      %v3849 = vadd.f32 0.0, %v3848
      %v3850 = vpop.f32.mrf.mxu0
      %3851 = vmatprep.mubr.f32.mxu0 0.0
      %3852 = vmatmul.mubr.f32.gmra.mxu0 %v3756
      %v3853 = vpop.f32.mrf.mxu0
      %v3854 = vadd.f32 0.0, %v3853
      %v3855 = vpop.f32.mrf.mxu0
      %3856 = vmatprep.mubr.f32.mxu0 0.0
      %3857 = vmatmul.mubr.f32.gmra.mxu0 %v3759
      %v3858 = vpop.f32.mrf.mxu0
      %v3859 = vadd.f32 0.0, %v3858
      %v3860 = vpop.f32.mrf.mxu0
      %3861 = vmatprep.mubr.f32.mxu0 0.0
      %3862 = vmatmul.mubr.f32.gmra.mxu0 %v3762
      %v3863 = vpop.f32.mrf.mxu0
      %v3864 = vadd.f32 0.0, %v3863
      %v3865 = vpop.f32.mrf.mxu0
      %3866 = vmatprep.mubr.f32.mxu0 0.0
      %3867 = vmatmul.mubr.f32.gmra.mxu0 %v3765
      %v3868 = vpop.f32.mrf.mxu0
      %v3869 = vadd.f32 0.0, %v3868
      %v3870 = vpop.f32.mrf.mxu0
      %3871 = vdwg.mxu0
      %v3873 = vsel %vm2908, %v3214, 0
      %v3876 = vsel %vm2908, %v3216, 0
      %v3879 = vsel %vm2908, %v3218, 0
      %v3882 = vsel %vm2908, %v3220, 0
      %v3885 = vsel %vm2908, %v3222, 0
      %v3888 = vsel %vm2908, %v3224, 0
      %v3891 = vsel %vm2908, %v3226, 0
      %v3894 = vsel %vm2908, %v3228, 0
      %3896 = vmatprep.subr.mxu0 0.0
      %3897 = vmatpush1.msra.mxu0 0.0
      %3898 = vmatprep.subr.mxu0 0.0
      %3899 = vmatpush1.msra.mxu0 0.0
      %3900 = vmatprep.subr.mxu0 0.0
      %3901 = vmatpush1.msra.mxu0 0.0
      %3902 = vmatprep.subr.mxu0 0.0
      %3903 = vmatpush1.msra.mxu0 0.0
      %3904 = vmatprep.subr.mxu0 0.0
      %3905 = vmatpush1.msra.mxu0 0.0
      %3906 = vmatprep.subr.mxu0 0.0
      %3907 = vmatpush1.msra.mxu0 0.0
      %3908 = vmatprep.subr.mxu0 0.0
      %3909 = vmatpush1.msra.mxu0 0.0
      %3910 = vmatprep.subr.mxu0 0.0
      %3911 = vmatpush1.msra.mxu0 0.0
      %3912 = vmatprep.subr.mxu0 0.0
      %3913 = vmatpush1.msra.mxu0 %v1521
      %3914 = vmatprep.subr.mxu0 0.0
      %3915 = vmatpush1.msra.mxu0 %v1516
      %3916 = vmatprep.subr.mxu0 0.0
      %3917 = vmatpush1.msra.mxu0 %v1511
      %3918 = vmatprep.subr.mxu0 0.0
      %3919 = vmatpush1.msra.mxu0 %v1506
      %3920 = vmatprep.subr.mxu0 0.0
      %3921 = vmatpush1.msra.mxu0 %v1501
      %3922 = vmatprep.subr.mxu0 0.0
      %3923 = vmatpush1.msra.mxu0 %v1496
      %3924 = vmatprep.subr.mxu0 0.0
      %3925 = vmatpush1.msra.mxu0 %v1491
      %3926 = vmatprep.subr.mxu0 0.0
      %3927 = vmatpush1.msra.mxu0 %v1486
      %3928 = vmatprep.subr.mxu0 0.0
      %3929 = vmatpush2.msra.mxu0 0.0
      %3930 = vmatprep.subr.mxu0 0.0
      %3931 = vmatpush2.msra.mxu0 0.0
      %3932 = vmatprep.subr.mxu0 0.0
      %3933 = vmatpush2.msra.mxu0 0.0
      %3934 = vmatprep.subr.mxu0 0.0
      %3935 = vmatpush2.msra.mxu0 0.0
      %3936 = vmatprep.subr.mxu0 0.0
      %3937 = vmatpush2.msra.mxu0 0.0
      %3938 = vmatprep.subr.mxu0 0.0
      %3939 = vmatpush2.msra.mxu0 0.0
      %3940 = vmatprep.subr.mxu0 0.0
      %3941 = vmatpush2.msra.mxu0 0.0
      %3942 = vmatprep.subr.mxu0 0.0
      %3943 = vmatpush2.msra.mxu0 0.0
      %3944 = vmatprep.subr.mxu0 0.0
      %3945 = vmatpush2.msra.mxu0 0.0
      %3946 = vmatprep.subr.mxu0 0.0
      %3947 = vmatpush2.msra.mxu0 0.0
      %3948 = vmatprep.subr.mxu0 0.0
      %3949 = vmatpush2.msra.mxu0 0.0
      %3950 = vmatprep.subr.mxu0 0.0
      %3951 = vmatpush2.msra.mxu0 0.0
      %3952 = vmatprep.subr.mxu0 0.0
      %3953 = vmatpush2.msra.mxu0 0.0
      %3954 = vmatprep.subr.mxu0 0.0
      %3955 = vmatpush2.msra.mxu0 0.0
      %3956 = vmatprep.subr.mxu0 0.0
      %3957 = vmatpush2.msra.mxu0 0.0
      %3958 = vmatprep.subr.mxu0 0.0
      %3959 = vmatpush2.msra.mxu0 0.0
      %3960 = vmatprep.mubr.f32.mxu0 0.0
      %3961 = vmatmul.mubr.f32.gmra.mxu0 %v3873
      %v3962 = vpop.f32.mrf.mxu0
      %v3963 = vadd.f32 0.0, %v3962
      %v3964 = vpop.f32.mrf.mxu0
      %3965 = vmatprep.mubr.f32.mxu0 0.0
      %3966 = vmatmul.mubr.f32.gmra.mxu0 %v3876
      %v3967 = vpop.f32.mrf.mxu0
      %v3968 = vadd.f32 0.0, %v3967
      %v3969 = vpop.f32.mrf.mxu0
      %3970 = vmatprep.mubr.f32.mxu0 0.0
      %3971 = vmatmul.mubr.f32.gmra.mxu0 %v3879
      %v3972 = vpop.f32.mrf.mxu0
      %v3973 = vadd.f32 0.0, %v3972
      %v3974 = vpop.f32.mrf.mxu0
      %3975 = vmatprep.mubr.f32.mxu0 0.0
      %3976 = vmatmul.mubr.f32.gmra.mxu0 %v3882
      %v3977 = vpop.f32.mrf.mxu0
      %v3978 = vadd.f32 0.0, %v3977
      %v3979 = vpop.f32.mrf.mxu0
      %3980 = vmatprep.mubr.f32.mxu0 0.0
      %3981 = vmatmul.mubr.f32.gmra.mxu0 %v3885
      %v3982 = vpop.f32.mrf.mxu0
      %v3983 = vadd.f32 0.0, %v3982
      %v3984 = vpop.f32.mrf.mxu0
      %3985 = vmatprep.mubr.f32.mxu0 0.0
      %3986 = vmatmul.mubr.f32.gmra.mxu0 %v3888
      %v3987 = vpop.f32.mrf.mxu0
      %v3988 = vadd.f32 0.0, %v3987
      %v3989 = vpop.f32.mrf.mxu0
      %3990 = vmatprep.mubr.f32.mxu0 0.0
      %3991 = vmatmul.mubr.f32.gmra.mxu0 %v3891
      %v3992 = vpop.f32.mrf.mxu0
      %v3993 = vadd.f32 0.0, %v3992
      %v3994 = vpop.f32.mrf.mxu0
      %3995 = vmatprep.mubr.f32.mxu0 0.0
      %3996 = vmatmul.mubr.f32.gmra.mxu0 %v3894
      %v3997 = vpop.f32.mrf.mxu0
      %v3998 = vadd.f32 0.0, %v3997
      %v3999 = vpop.f32.mrf.mxu0
      %4000 = vdwg.mxu0
      %v4002 = vsel %vm2908, %v3230, 0
      %v4005 = vsel %vm2908, %v3232, 0
      %v4008 = vsel %vm2908, %v3234, 0
      %v4011 = vsel %vm2908, %v3236, 0
      %v4014 = vsel %vm2908, %v3238, 0
      %v4017 = vsel %vm2908, %v3240, 0
      %v4020 = vsel %vm2908, %v3242, 0
      %v4023 = vsel %vm2908, %v3244, 0
      %4025 = vmatprep.subr.mxu0 0.0
      %4026 = vmatpush1.msra.mxu0 0.0
      %4027 = vmatprep.subr.mxu0 0.0
      %4028 = vmatpush1.msra.mxu0 0.0
      %4029 = vmatprep.subr.mxu0 0.0
      %4030 = vmatpush1.msra.mxu0 0.0
      %4031 = vmatprep.subr.mxu0 0.0
      %4032 = vmatpush1.msra.mxu0 0.0
      %4033 = vmatprep.subr.mxu0 0.0
      %4034 = vmatpush1.msra.mxu0 0.0
      %4035 = vmatprep.subr.mxu0 0.0
      %4036 = vmatpush1.msra.mxu0 0.0
      %4037 = vmatprep.subr.mxu0 0.0
      %4038 = vmatpush1.msra.mxu0 0.0
      %4039 = vmatprep.subr.mxu0 0.0
      %4040 = vmatpush1.msra.mxu0 0.0
      %4041 = vmatprep.subr.mxu0 0.0
      %4042 = vmatpush1.msra.mxu0 %v1561
      %4043 = vmatprep.subr.mxu0 0.0
      %4044 = vmatpush1.msra.mxu0 %v1556
      %4045 = vmatprep.subr.mxu0 0.0
      %4046 = vmatpush1.msra.mxu0 %v1551
      %4047 = vmatprep.subr.mxu0 0.0
      %4048 = vmatpush1.msra.mxu0 %v1546
      %4049 = vmatprep.subr.mxu0 0.0
      %4050 = vmatpush1.msra.mxu0 %v1541
      %4051 = vmatprep.subr.mxu0 0.0
      %4052 = vmatpush1.msra.mxu0 %v1536
      %4053 = vmatprep.subr.mxu0 0.0
      %4054 = vmatpush1.msra.mxu0 %v1531
      %4055 = vmatprep.subr.mxu0 0.0
      %4056 = vmatpush1.msra.mxu0 %v1526
      %4057 = vmatprep.subr.mxu0 0.0
      %4058 = vmatpush2.msra.mxu0 0.0
      %4059 = vmatprep.subr.mxu0 0.0
      %4060 = vmatpush2.msra.mxu0 0.0
      %4061 = vmatprep.subr.mxu0 0.0
      %4062 = vmatpush2.msra.mxu0 0.0
      %4063 = vmatprep.subr.mxu0 0.0
      %4064 = vmatpush2.msra.mxu0 0.0
      %4065 = vmatprep.subr.mxu0 0.0
      %4066 = vmatpush2.msra.mxu0 0.0
      %4067 = vmatprep.subr.mxu0 0.0
      %4068 = vmatpush2.msra.mxu0 0.0
      %4069 = vmatprep.subr.mxu0 0.0
      %4070 = vmatpush2.msra.mxu0 0.0
      %4071 = vmatprep.subr.mxu0 0.0
      %4072 = vmatpush2.msra.mxu0 0.0
      %4073 = vmatprep.subr.mxu0 0.0
      %4074 = vmatpush2.msra.mxu0 0.0
      %4075 = vmatprep.subr.mxu0 0.0
      %4076 = vmatpush2.msra.mxu0 0.0
      %4077 = vmatprep.subr.mxu0 0.0
      %4078 = vmatpush2.msra.mxu0 0.0
      %4079 = vmatprep.subr.mxu0 0.0
      %4080 = vmatpush2.msra.mxu0 0.0
      %4081 = vmatprep.subr.mxu0 0.0
      %4082 = vmatpush2.msra.mxu0 0.0
      %4083 = vmatprep.subr.mxu0 0.0
      %4084 = vmatpush2.msra.mxu0 0.0
      %4085 = vmatprep.subr.mxu0 0.0
      %4086 = vmatpush2.msra.mxu0 0.0
      %4087 = vmatprep.subr.mxu0 0.0
      %4088 = vmatpush2.msra.mxu0 0.0
      %4089 = vmatprep.mubr.f32.mxu0 0.0
      %4090 = vmatmul.mubr.f32.gmra.mxu0 %v4002
      %v4091 = vpop.f32.mrf.mxu0
      %v4092 = vadd.f32 0.0, %v4091
      %v4093 = vpop.f32.mrf.mxu0
      %4094 = vmatprep.mubr.f32.mxu0 0.0
      %4095 = vmatmul.mubr.f32.gmra.mxu0 %v4005
      %v4096 = vpop.f32.mrf.mxu0
      %v4097 = vadd.f32 0.0, %v4096
      %v4098 = vpop.f32.mrf.mxu0
      %4099 = vmatprep.mubr.f32.mxu0 0.0
      %4100 = vmatmul.mubr.f32.gmra.mxu0 %v4008
      %v4101 = vpop.f32.mrf.mxu0
      %v4102 = vadd.f32 0.0, %v4101
      %v4103 = vpop.f32.mrf.mxu0
      %4104 = vmatprep.mubr.f32.mxu0 0.0
      %4105 = vmatmul.mubr.f32.gmra.mxu0 %v4011
      %v4106 = vpop.f32.mrf.mxu0
      %v4107 = vadd.f32 0.0, %v4106
      %v4108 = vpop.f32.mrf.mxu0
      %4109 = vmatprep.mubr.f32.mxu0 0.0
      %4110 = vmatmul.mubr.f32.gmra.mxu0 %v4014
      %v4111 = vpop.f32.mrf.mxu0
      %v4112 = vadd.f32 0.0, %v4111
      %v4113 = vpop.f32.mrf.mxu0
      %4114 = vmatprep.mubr.f32.mxu0 0.0
      %4115 = vmatmul.mubr.f32.gmra.mxu0 %v4017
      %v4116 = vpop.f32.mrf.mxu0
      %v4117 = vadd.f32 0.0, %v4116
      %v4118 = vpop.f32.mrf.mxu0
      %4119 = vmatprep.mubr.f32.mxu0 0.0
      %4120 = vmatmul.mubr.f32.gmra.mxu0 %v4020
      %v4121 = vpop.f32.mrf.mxu0
      %v4122 = vadd.f32 0.0, %v4121
      %v4123 = vpop.f32.mrf.mxu0
      %4124 = vmatprep.mubr.f32.mxu0 0.0
      %4125 = vmatmul.mubr.f32.gmra.mxu0 %v4023
      %v4126 = vpop.f32.mrf.mxu0
      %v4127 = vadd.f32 0.0, %v4126
      %v4128 = vpop.f32.mrf.mxu0
      %4129 = vdwg.mxu0
      %v4131 = vsel %vm2908, %v3246, 0
      %v4134 = vsel %vm2908, %v3248, 0
      %v4137 = vsel %vm2908, %v3250, 0
      %v4140 = vsel %vm2908, %v3252, 0
      %v4143 = vsel %vm2908, %v3254, 0
      %v4146 = vsel %vm2908, %v3256, 0
      %v4149 = vsel %vm2908, %v3258, 0
      %v4152 = vsel %vm2908, %v3260, 0
      %4154 = vmatprep.subr.mxu0 0.0
      %4155 = vmatpush1.msra.mxu0 0.0
      %4156 = vmatprep.subr.mxu0 0.0
      %4157 = vmatpush1.msra.mxu0 0.0
      %4158 = vmatprep.subr.mxu0 0.0
      %4159 = vmatpush1.msra.mxu0 0.0
      %4160 = vmatprep.subr.mxu0 0.0
      %4161 = vmatpush1.msra.mxu0 0.0
      %4162 = vmatprep.subr.mxu0 0.0
      %4163 = vmatpush1.msra.mxu0 0.0
      %4164 = vmatprep.subr.mxu0 0.0
      %4165 = vmatpush1.msra.mxu0 0.0
      %4166 = vmatprep.subr.mxu0 0.0
      %4167 = vmatpush1.msra.mxu0 0.0
      %4168 = vmatprep.subr.mxu0 0.0
      %4169 = vmatpush1.msra.mxu0 0.0
      %4170 = vmatprep.subr.mxu0 0.0
      %4171 = vmatpush1.msra.mxu0 %v1601
      %4172 = vmatprep.subr.mxu0 0.0
      %4173 = vmatpush1.msra.mxu0 %v1596
      %4174 = vmatprep.subr.mxu0 0.0
      %4175 = vmatpush1.msra.mxu0 %v1591
      %4176 = vmatprep.subr.mxu0 0.0
      %4177 = vmatpush1.msra.mxu0 %v1586
      %4178 = vmatprep.subr.mxu0 0.0
      %4179 = vmatpush1.msra.mxu0 %v1581
      %4180 = vmatprep.subr.mxu0 0.0
      %4181 = vmatpush1.msra.mxu0 %v1576
      %4182 = vmatprep.subr.mxu0 0.0
      %4183 = vmatpush1.msra.mxu0 %v1571
      %4184 = vmatprep.subr.mxu0 0.0
      %4185 = vmatpush1.msra.mxu0 %v1566
      %4186 = vmatprep.subr.mxu0 0.0
      %4187 = vmatpush2.msra.mxu0 0.0
      %4188 = vmatprep.subr.mxu0 0.0
      %4189 = vmatpush2.msra.mxu0 0.0
      %4190 = vmatprep.subr.mxu0 0.0
      %4191 = vmatpush2.msra.mxu0 0.0
      %4192 = vmatprep.subr.mxu0 0.0
      %4193 = vmatpush2.msra.mxu0 0.0
      %4194 = vmatprep.subr.mxu0 0.0
      %4195 = vmatpush2.msra.mxu0 0.0
      %4196 = vmatprep.subr.mxu0 0.0
      %4197 = vmatpush2.msra.mxu0 0.0
      %4198 = vmatprep.subr.mxu0 0.0
      %4199 = vmatpush2.msra.mxu0 0.0
      %4200 = vmatprep.subr.mxu0 0.0
      %4201 = vmatpush2.msra.mxu0 0.0
      %4202 = vmatprep.subr.mxu0 0.0
      %4203 = vmatpush2.msra.mxu0 0.0
      %4204 = vmatprep.subr.mxu0 0.0
      %4205 = vmatpush2.msra.mxu0 0.0
      %4206 = vmatprep.subr.mxu0 0.0
      %4207 = vmatpush2.msra.mxu0 0.0
      %4208 = vmatprep.subr.mxu0 0.0
      %4209 = vmatpush2.msra.mxu0 0.0
      %4210 = vmatprep.subr.mxu0 0.0
      %4211 = vmatpush2.msra.mxu0 0.0
      %4212 = vmatprep.subr.mxu0 0.0
      %4213 = vmatpush2.msra.mxu0 0.0
      %4214 = vmatprep.subr.mxu0 0.0
      %4215 = vmatpush2.msra.mxu0 0.0
      %4216 = vmatprep.subr.mxu0 0.0
      %4217 = vmatpush2.msra.mxu0 0.0
      %4218 = vmatprep.mubr.f32.mxu0 0.0
      %4219 = vmatmul.mubr.f32.gmra.mxu0 %v4131
      %v4220 = vpop.f32.mrf.mxu0
      %v4221 = vadd.f32 0.0, %v4220
      %v4222 = vpop.f32.mrf.mxu0
      %4223 = vmatprep.mubr.f32.mxu0 0.0
      %4224 = vmatmul.mubr.f32.gmra.mxu0 %v4134
      %v4225 = vpop.f32.mrf.mxu0
      %v4226 = vadd.f32 0.0, %v4225
      %v4227 = vpop.f32.mrf.mxu0
      %4228 = vmatprep.mubr.f32.mxu0 0.0
      %4229 = vmatmul.mubr.f32.gmra.mxu0 %v4137
      %v4230 = vpop.f32.mrf.mxu0
      %v4231 = vadd.f32 0.0, %v4230
      %v4232 = vpop.f32.mrf.mxu0
      %4233 = vmatprep.mubr.f32.mxu0 0.0
      %4234 = vmatmul.mubr.f32.gmra.mxu0 %v4140
      %v4235 = vpop.f32.mrf.mxu0
      %v4236 = vadd.f32 0.0, %v4235
      %v4237 = vpop.f32.mrf.mxu0
      %4238 = vmatprep.mubr.f32.mxu0 0.0
      %4239 = vmatmul.mubr.f32.gmra.mxu0 %v4143
      %v4240 = vpop.f32.mrf.mxu0
      %v4241 = vadd.f32 0.0, %v4240
      %v4242 = vpop.f32.mrf.mxu0
      %4243 = vmatprep.mubr.f32.mxu0 0.0
      %4244 = vmatmul.mubr.f32.gmra.mxu0 %v4146
      %v4245 = vpop.f32.mrf.mxu0
      %v4246 = vadd.f32 0.0, %v4245
      %v4247 = vpop.f32.mrf.mxu0
      %4248 = vmatprep.mubr.f32.mxu0 0.0
      %4249 = vmatmul.mubr.f32.gmra.mxu0 %v4149
      %v4250 = vpop.f32.mrf.mxu0
      %v4251 = vadd.f32 0.0, %v4250
      %v4252 = vpop.f32.mrf.mxu0
      %4253 = vmatprep.mubr.f32.mxu0 0.0
      %4254 = vmatmul.mubr.f32.gmra.mxu0 %v4152
      %v4255 = vpop.f32.mrf.mxu0
      %v4256 = vadd.f32 0.0, %v4255
      %v4257 = vpop.f32.mrf.mxu0
      %4258 = vdwg.mxu0
      %v4260 = vsel %vm2908, %v3262, 0
      %v4263 = vsel %vm2908, %v3264, 0
      %v4266 = vsel %vm2908, %v3266, 0
      %v4269 = vsel %vm2908, %v3268, 0
      %v4272 = vsel %vm2908, %v3270, 0
      %v4275 = vsel %vm2908, %v3272, 0
      %v4278 = vsel %vm2908, %v3274, 0
      %v4281 = vsel %vm2908, %v3276, 0
      %4283 = vmatprep.subr.mxu0 0.0
      %4284 = vmatpush1.msra.mxu0 0.0
      %4285 = vmatprep.subr.mxu0 0.0
      %4286 = vmatpush1.msra.mxu0 0.0
      %4287 = vmatprep.subr.mxu0 0.0
      %4288 = vmatpush1.msra.mxu0 0.0
      %4289 = vmatprep.subr.mxu0 0.0
      %4290 = vmatpush1.msra.mxu0 0.0
      %4291 = vmatprep.subr.mxu0 0.0
      %4292 = vmatpush1.msra.mxu0 0.0
      %4293 = vmatprep.subr.mxu0 0.0
      %4294 = vmatpush1.msra.mxu0 0.0
      %4295 = vmatprep.subr.mxu0 0.0
      %4296 = vmatpush1.msra.mxu0 0.0
      %4297 = vmatprep.subr.mxu0 0.0
      %4298 = vmatpush1.msra.mxu0 0.0
      %4299 = vmatprep.subr.mxu0 0.0
      %4300 = vmatpush1.msra.mxu0 %v1641
      %4301 = vmatprep.subr.mxu0 0.0
      %4302 = vmatpush1.msra.mxu0 %v1636
      %4303 = vmatprep.subr.mxu0 0.0
      %4304 = vmatpush1.msra.mxu0 %v1631
      %4305 = vmatprep.subr.mxu0 0.0
      %4306 = vmatpush1.msra.mxu0 %v1626
      %4307 = vmatprep.subr.mxu0 0.0
      %4308 = vmatpush1.msra.mxu0 %v1621
      %4309 = vmatprep.subr.mxu0 0.0
      %4310 = vmatpush1.msra.mxu0 %v1616
      %4311 = vmatprep.subr.mxu0 0.0
      %4312 = vmatpush1.msra.mxu0 %v1611
      %4313 = vmatprep.subr.mxu0 0.0
      %4314 = vmatpush1.msra.mxu0 %v1606
      %4315 = vmatprep.subr.mxu0 0.0
      %4316 = vmatpush2.msra.mxu0 0.0
      %4317 = vmatprep.subr.mxu0 0.0
      %4318 = vmatpush2.msra.mxu0 0.0
      %4319 = vmatprep.subr.mxu0 0.0
      %4320 = vmatpush2.msra.mxu0 0.0
      %4321 = vmatprep.subr.mxu0 0.0
      %4322 = vmatpush2.msra.mxu0 0.0
      %4323 = vmatprep.subr.mxu0 0.0
      %4324 = vmatpush2.msra.mxu0 0.0
      %4325 = vmatprep.subr.mxu0 0.0
      %4326 = vmatpush2.msra.mxu0 0.0
      %4327 = vmatprep.subr.mxu0 0.0
      %4328 = vmatpush2.msra.mxu0 0.0
      %4329 = vmatprep.subr.mxu0 0.0
      %4330 = vmatpush2.msra.mxu0 0.0
      %4331 = vmatprep.subr.mxu0 0.0
      %4332 = vmatpush2.msra.mxu0 0.0
      %4333 = vmatprep.subr.mxu0 0.0
      %4334 = vmatpush2.msra.mxu0 0.0
      %4335 = vmatprep.subr.mxu0 0.0
      %4336 = vmatpush2.msra.mxu0 0.0
      %4337 = vmatprep.subr.mxu0 0.0
      %4338 = vmatpush2.msra.mxu0 0.0
      %4339 = vmatprep.subr.mxu0 0.0
      %4340 = vmatpush2.msra.mxu0 0.0
      %4341 = vmatprep.subr.mxu0 0.0
      %4342 = vmatpush2.msra.mxu0 0.0
      %4343 = vmatprep.subr.mxu0 0.0
      %4344 = vmatpush2.msra.mxu0 0.0
      %4345 = vmatprep.subr.mxu0 0.0
      %4346 = vmatpush2.msra.mxu0 0.0
      %4347 = vmatprep.mubr.f32.mxu0 0.0
      %4348 = vmatmul.mubr.f32.gmra.mxu0 %v4260
      %v4349 = vpop.f32.mrf.mxu0
      %v4350 = vadd.f32 0.0, %v4349
      %v4351 = vpop.f32.mrf.mxu0
      %4352 = vmatprep.mubr.f32.mxu0 0.0
      %4353 = vmatmul.mubr.f32.gmra.mxu0 %v4263
      %v4354 = vpop.f32.mrf.mxu0
      %v4355 = vadd.f32 0.0, %v4354
      %v4356 = vpop.f32.mrf.mxu0
      %4357 = vmatprep.mubr.f32.mxu0 0.0
      %4358 = vmatmul.mubr.f32.gmra.mxu0 %v4266
      %v4359 = vpop.f32.mrf.mxu0
      %v4360 = vadd.f32 0.0, %v4359
      %v4361 = vpop.f32.mrf.mxu0
      %4362 = vmatprep.mubr.f32.mxu0 0.0
      %4363 = vmatmul.mubr.f32.gmra.mxu0 %v4269
      %v4364 = vpop.f32.mrf.mxu0
      %v4365 = vadd.f32 0.0, %v4364
      %v4366 = vpop.f32.mrf.mxu0
      %4367 = vmatprep.mubr.f32.mxu0 0.0
      %4368 = vmatmul.mubr.f32.gmra.mxu0 %v4272
      %v4369 = vpop.f32.mrf.mxu0
      %v4370 = vadd.f32 0.0, %v4369
      %v4371 = vpop.f32.mrf.mxu0
      %4372 = vmatprep.mubr.f32.mxu0 0.0
      %4373 = vmatmul.mubr.f32.gmra.mxu0 %v4275
      %v4374 = vpop.f32.mrf.mxu0
      %v4375 = vadd.f32 0.0, %v4374
      %v4376 = vpop.f32.mrf.mxu0
      %4377 = vmatprep.mubr.f32.mxu0 0.0
      %4378 = vmatmul.mubr.f32.gmra.mxu0 %v4278
      %v4379 = vpop.f32.mrf.mxu0
      %v4380 = vadd.f32 0.0, %v4379
      %v4381 = vpop.f32.mrf.mxu0
      %4382 = vmatprep.mubr.f32.mxu0 0.0
      %4383 = vmatmul.mubr.f32.gmra.mxu0 %v4281
      %v4384 = vpop.f32.mrf.mxu0
      %v4385 = vadd.f32 0.0, %v4384
      %v4386 = vpop.f32.mrf.mxu0
      %4387 = vdwg.mxu0
      %v4389 = vsel %vm2908, %v3278, 0
      %v4392 = vsel %vm2908, %v3280, 0
      %v4395 = vsel %vm2908, %v3282, 0
      %v4398 = vsel %vm2908, %v3284, 0
      %v4401 = vsel %vm2908, %v3286, 0
      %v4404 = vsel %vm2908, %v3288, 0
      %v4407 = vsel %vm2908, %v3290, 0
      %v4410 = vsel %vm2908, %v3292, 0
      %4412 = vmatprep.subr.mxu0 0.0
      %4413 = vmatpush1.msra.mxu0 0.0
      %4414 = vmatprep.subr.mxu0 0.0
      %4415 = vmatpush1.msra.mxu0 0.0
      %4416 = vmatprep.subr.mxu0 0.0
      %4417 = vmatpush1.msra.mxu0 0.0
      %4418 = vmatprep.subr.mxu0 0.0
      %4419 = vmatpush1.msra.mxu0 0.0
      %4420 = vmatprep.subr.mxu0 0.0
      %4421 = vmatpush1.msra.mxu0 0.0
      %4422 = vmatprep.subr.mxu0 0.0
      %4423 = vmatpush1.msra.mxu0 0.0
      %4424 = vmatprep.subr.mxu0 0.0
      %4425 = vmatpush1.msra.mxu0 0.0
      %4426 = vmatprep.subr.mxu0 0.0
      %4427 = vmatpush1.msra.mxu0 0.0
      %4428 = vmatprep.subr.mxu0 0.0
      %4429 = vmatpush1.msra.mxu0 %v1681
      %4430 = vmatprep.subr.mxu0 0.0
      %4431 = vmatpush1.msra.mxu0 %v1676
      %4432 = vmatprep.subr.mxu0 0.0
      %4433 = vmatpush1.msra.mxu0 %v1671
      %4434 = vmatprep.subr.mxu0 0.0
      %4435 = vmatpush1.msra.mxu0 %v1666
      %4436 = vmatprep.subr.mxu0 0.0
      %4437 = vmatpush1.msra.mxu0 %v1661
      %4438 = vmatprep.subr.mxu0 0.0
      %4439 = vmatpush1.msra.mxu0 %v1656
      %4440 = vmatprep.subr.mxu0 0.0
      %4441 = vmatpush1.msra.mxu0 %v1651
      %4442 = vmatprep.subr.mxu0 0.0
      %4443 = vmatpush1.msra.mxu0 %v1646
      %4444 = vmatprep.subr.mxu0 0.0
      %4445 = vmatpush2.msra.mxu0 0.0
      %4446 = vmatprep.subr.mxu0 0.0
      %4447 = vmatpush2.msra.mxu0 0.0
      %4448 = vmatprep.subr.mxu0 0.0
      %4449 = vmatpush2.msra.mxu0 0.0
      %4450 = vmatprep.subr.mxu0 0.0
      %4451 = vmatpush2.msra.mxu0 0.0
      %4452 = vmatprep.subr.mxu0 0.0
      %4453 = vmatpush2.msra.mxu0 0.0
      %4454 = vmatprep.subr.mxu0 0.0
      %4455 = vmatpush2.msra.mxu0 0.0
      %4456 = vmatprep.subr.mxu0 0.0
      %4457 = vmatpush2.msra.mxu0 0.0
      %4458 = vmatprep.subr.mxu0 0.0
      %4459 = vmatpush2.msra.mxu0 0.0
      %4460 = vmatprep.subr.mxu0 0.0
      %4461 = vmatpush2.msra.mxu0 0.0
      %4462 = vmatprep.subr.mxu0 0.0
      %4463 = vmatpush2.msra.mxu0 0.0
      %4464 = vmatprep.subr.mxu0 0.0
      %4465 = vmatpush2.msra.mxu0 0.0
      %4466 = vmatprep.subr.mxu0 0.0
      %4467 = vmatpush2.msra.mxu0 0.0
      %4468 = vmatprep.subr.mxu0 0.0
      %4469 = vmatpush2.msra.mxu0 0.0
      %4470 = vmatprep.subr.mxu0 0.0
      %4471 = vmatpush2.msra.mxu0 0.0
      %4472 = vmatprep.subr.mxu0 0.0
      %4473 = vmatpush2.msra.mxu0 0.0
      %4474 = vmatprep.subr.mxu0 0.0
      %4475 = vmatpush2.msra.mxu0 0.0
      %4476 = vmatprep.mubr.f32.mxu0 0.0
      %4477 = vmatmul.mubr.f32.gmra.mxu0 %v4389
      %v4478 = vpop.f32.mrf.mxu0
      %v4479 = vadd.f32 0.0, %v4478
      %v4480 = vpop.f32.mrf.mxu0
      %4481 = vmatprep.mubr.f32.mxu0 0.0
      %4482 = vmatmul.mubr.f32.gmra.mxu0 %v4392
      %v4483 = vpop.f32.mrf.mxu0
      %v4484 = vadd.f32 0.0, %v4483
      %v4485 = vpop.f32.mrf.mxu0
      %4486 = vmatprep.mubr.f32.mxu0 0.0
      %4487 = vmatmul.mubr.f32.gmra.mxu0 %v4395
      %v4488 = vpop.f32.mrf.mxu0
      %v4489 = vadd.f32 0.0, %v4488
      %v4490 = vpop.f32.mrf.mxu0
      %4491 = vmatprep.mubr.f32.mxu0 0.0
      %4492 = vmatmul.mubr.f32.gmra.mxu0 %v4398
      %v4493 = vpop.f32.mrf.mxu0
      %v4494 = vadd.f32 0.0, %v4493
      %v4495 = vpop.f32.mrf.mxu0
      %4496 = vmatprep.mubr.f32.mxu0 0.0
      %4497 = vmatmul.mubr.f32.gmra.mxu0 %v4401
      %v4498 = vpop.f32.mrf.mxu0
      %v4499 = vadd.f32 0.0, %v4498
      %v4500 = vpop.f32.mrf.mxu0
      %4501 = vmatprep.mubr.f32.mxu0 0.0
      %4502 = vmatmul.mubr.f32.gmra.mxu0 %v4404
      %v4503 = vpop.f32.mrf.mxu0
      %v4504 = vadd.f32 0.0, %v4503
      %v4505 = vpop.f32.mrf.mxu0
      %4506 = vmatprep.mubr.f32.mxu0 0.0
      %4507 = vmatmul.mubr.f32.gmra.mxu0 %v4407
      %v4508 = vpop.f32.mrf.mxu0
      %v4509 = vadd.f32 0.0, %v4508
      %v4510 = vpop.f32.mrf.mxu0
      %4511 = vmatprep.mubr.f32.mxu0 0.0
      %4512 = vmatmul.mubr.f32.gmra.mxu0 %v4410
      %v4513 = vpop.f32.mrf.mxu0
      %v4514 = vadd.f32 0.0, %v4513
      %v4515 = vpop.f32.mrf.mxu0
      %4516 = vdwg.mxu0
      %v4517 = vrcp.pop %v3295
      %v4518 = vrcp.pop %v3298
      %v4519 = vrcp.pop %v3301
      %v4520 = vrcp.pop %v3304
      %v4521 = vrcp.pop %v3307
      %v4522 = vrcp.pop %v3310
      %v4523 = vrcp.pop %v3313
      %v4524 = vrcp.pop %v3316
      %v4525 = vrcp.pop %v3319
      %v4526 = vrcp.pop %v3322
      %v4527 = vrcp.pop %v3325
      %v4528 = vrcp.pop %v3328
      %v4529 = vrcp.pop %v3331
      %v4530 = vrcp.pop %v3334
      %v4531 = vrcp.pop %v3337
      %v4532 = vrcp.pop %v3340
      %v4533 = vrcp.pop %v3343
      %v4534 = vrcp.pop %v3346
      %v4535 = vrcp.pop %v3349
      %v4536 = vrcp.pop %v3352
      %v4537 = vrcp.pop %v3355
      %v4538 = vrcp.pop %v3358
      %v4539 = vrcp.pop %v3361
      %v4540 = vrcp.pop %v3364
      %v4541 = vrcp.pop %v3367
      %v4542 = vrcp.pop %v3370
      %v4543 = vrcp.pop %v3373
      %v4544 = vrcp.pop %v3376
      %v4545 = vrcp.pop %v3379
      %v4546 = vrcp.pop %v3382
      %v4547 = vrcp.pop %v3385
      %v4548 = vrcp.pop %v3388
      %v4549 = vrcp.pop %v3391
      %v4550 = vrcp.pop %v3394
      %v4551 = vrcp.pop %v3397
      %v4552 = vrcp.pop %v3400
      %v4553 = vrcp.pop %v3403
      %v4554 = vrcp.pop %v3406
      %v4555 = vrcp.pop %v3409
      %v4556 = vrcp.pop %v3412
      %v4557 = vrcp.pop %v3415
      %v4558 = vrcp.pop %v3418
      %v4559 = vrcp.pop %v3421
      %v4560 = vrcp.pop %v3424
      %v4561 = vrcp.pop %v3427
      %v4562 = vrcp.pop %v3430
      %v4563 = vrcp.pop %v3433
      %v4564 = vrcp.pop %v3436
      %v4565 = vrcp.pop %v3439
      %v4566 = vrcp.pop %v3442
      %v4567 = vrcp.pop %v3445
      %v4568 = vrcp.pop %v3448
      %v4569 = vrcp.pop %v3451
      %v4570 = vrcp.pop %v3454
      %v4571 = vrcp.pop %v3457
      %v4572 = vrcp.pop %v3460
      %v4573 = vrcp.pop %v3463
      %v4574 = vrcp.pop %v3466
      %v4575 = vrcp.pop %v3469
      %v4576 = vrcp.pop %v3472
      %v4577 = vrcp.pop %v3475
      %v4578 = vrcp.pop %v3478
      %v4579 = vrcp.pop %v3481
      %v4580 = vrcp.pop %v3484
      %v4581 = vmul.f32 %v3295, %v4517
      %v4582 = vmul.f32 %v3298, %v4518
      %v4583 = vmul.f32 %v3301, %v4519
      %v4584 = vmul.f32 %v3304, %v4520
      %v4585 = vmul.f32 %v3307, %v4521
      %v4586 = vmul.f32 %v3310, %v4522
      %v4587 = vmul.f32 %v3313, %v4523
      %v4588 = vmul.f32 %v3316, %v4524
      %v4589 = vmul.f32 %v3319, %v4525
      %v4590 = vmul.f32 %v3322, %v4526
      %v4591 = vmul.f32 %v3325, %v4527
      %v4592 = vmul.f32 %v3328, %v4528
      %v4593 = vmul.f32 %v3331, %v4529
      %v4594 = vmul.f32 %v3334, %v4530
      %v4595 = vmul.f32 %v3337, %v4531
      %v4596 = vmul.f32 %v3340, %v4532
      %v4597 = vmul.f32 %v3343, %v4533
      %v4598 = vmul.f32 %v3346, %v4534
      %v4599 = vmul.f32 %v3349, %v4535
      %v4600 = vmul.f32 %v3352, %v4536
      %v4601 = vmul.f32 %v3355, %v4537
      %v4602 = vmul.f32 %v3358, %v4538
      %v4603 = vmul.f32 %v3361, %v4539
      %v4604 = vmul.f32 %v3364, %v4540
      %v4605 = vmul.f32 %v3367, %v4541
      %v4606 = vmul.f32 %v3370, %v4542
      %v4607 = vmul.f32 %v3373, %v4543
      %v4608 = vmul.f32 %v3376, %v4544
      %v4609 = vmul.f32 %v3379, %v4545
      %v4610 = vmul.f32 %v3382, %v4546
      %v4611 = vmul.f32 %v3385, %v4547
      %v4612 = vmul.f32 %v3388, %v4548
      %v4613 = vmul.f32 %v3391, %v4549
      %v4614 = vmul.f32 %v3394, %v4550
      %v4615 = vmul.f32 %v3397, %v4551
      %v4616 = vmul.f32 %v3400, %v4552
      %v4617 = vmul.f32 %v3403, %v4553
      %v4618 = vmul.f32 %v3406, %v4554
      %v4619 = vmul.f32 %v3409, %v4555
      %v4620 = vmul.f32 %v3412, %v4556
      %v4621 = vmul.f32 %v3415, %v4557
      %v4622 = vmul.f32 %v3418, %v4558
      %v4623 = vmul.f32 %v3421, %v4559
      %v4624 = vmul.f32 %v3424, %v4560
      %v4625 = vmul.f32 %v3427, %v4561
      %v4626 = vmul.f32 %v3430, %v4562
      %v4627 = vmul.f32 %v3433, %v4563
      %v4628 = vmul.f32 %v3436, %v4564
      %v4629 = vmul.f32 %v3439, %v4565
      %v4630 = vmul.f32 %v3442, %v4566
      %v4631 = vmul.f32 %v3445, %v4567
      %v4632 = vmul.f32 %v3448, %v4568
      %v4633 = vmul.f32 %v3451, %v4569
      %v4634 = vmul.f32 %v3454, %v4570
      %v4635 = vmul.f32 %v3457, %v4571
      %v4636 = vmul.f32 %v3460, %v4572
      %v4637 = vmul.f32 %v3463, %v4573
      %v4638 = vmul.f32 %v3466, %v4574
      %v4639 = vmul.f32 %v3469, %v4575
      %v4640 = vmul.f32 %v3472, %v4576
      %v4641 = vmul.f32 %v3475, %v4577
      %v4642 = vmul.f32 %v3478, %v4578
      %v4643 = vmul.f32 %v3481, %v4579
      %v4644 = vmul.f32 %v3484, %v4580
      %v4645 = vsub.f32 2.0, %v4581
      %v4646 = vsub.f32 2.0, %v4582
      %v4647 = vsub.f32 2.0, %v4583
      %v4648 = vsub.f32 2.0, %v4584
      %v4649 = vsub.f32 2.0, %v4585
      %v4650 = vsub.f32 2.0, %v4586
      %v4651 = vsub.f32 2.0, %v4587
      %v4652 = vsub.f32 2.0, %v4588
      %v4653 = vsub.f32 2.0, %v4589
      %v4654 = vsub.f32 2.0, %v4590
      %v4655 = vsub.f32 2.0, %v4591
      %v4656 = vsub.f32 2.0, %v4592
      %v4657 = vsub.f32 2.0, %v4593
      %v4658 = vsub.f32 2.0, %v4594
      %v4659 = vsub.f32 2.0, %v4595
      %v4660 = vsub.f32 2.0, %v4596
      %v4661 = vsub.f32 2.0, %v4597
      %v4662 = vsub.f32 2.0, %v4598
      %v4663 = vsub.f32 2.0, %v4599
      %v4664 = vsub.f32 2.0, %v4600
      %v4665 = vsub.f32 2.0, %v4601
      %v4666 = vsub.f32 2.0, %v4602
      %v4667 = vsub.f32 2.0, %v4603
      %v4668 = vsub.f32 2.0, %v4604
      %v4669 = vsub.f32 2.0, %v4605
      %v4670 = vsub.f32 2.0, %v4606
      %v4671 = vsub.f32 2.0, %v4607
      %v4672 = vsub.f32 2.0, %v4608
      %v4673 = vsub.f32 2.0, %v4609
      %v4674 = vsub.f32 2.0, %v4610
      %v4675 = vsub.f32 2.0, %v4611
      %v4676 = vsub.f32 2.0, %v4612
      %v4677 = vsub.f32 2.0, %v4613
      %v4678 = vsub.f32 2.0, %v4614
      %v4679 = vsub.f32 2.0, %v4615
      %v4680 = vsub.f32 2.0, %v4616
      %v4681 = vsub.f32 2.0, %v4617
      %v4682 = vsub.f32 2.0, %v4618
      %v4683 = vsub.f32 2.0, %v4619
      %v4684 = vsub.f32 2.0, %v4620
      %v4685 = vsub.f32 2.0, %v4621
      %v4686 = vsub.f32 2.0, %v4622
      %v4687 = vsub.f32 2.0, %v4623
      %v4688 = vsub.f32 2.0, %v4624
      %v4689 = vsub.f32 2.0, %v4625
      %v4690 = vsub.f32 2.0, %v4626
      %v4691 = vsub.f32 2.0, %v4627
      %v4692 = vsub.f32 2.0, %v4628
      %v4693 = vsub.f32 2.0, %v4629
      %v4694 = vsub.f32 2.0, %v4630
      %v4695 = vsub.f32 2.0, %v4631
      %v4696 = vsub.f32 2.0, %v4632
      %v4697 = vsub.f32 2.0, %v4633
      %v4698 = vsub.f32 2.0, %v4634
      %v4699 = vsub.f32 2.0, %v4635
      %v4700 = vsub.f32 2.0, %v4636
      %v4701 = vsub.f32 2.0, %v4637
      %v4702 = vsub.f32 2.0, %v4638
      %v4703 = vsub.f32 2.0, %v4639
      %v4704 = vsub.f32 2.0, %v4640
      %v4705 = vsub.f32 2.0, %v4641
      %v4706 = vsub.f32 2.0, %v4642
      %v4707 = vsub.f32 2.0, %v4643
      %v4708 = vsub.f32 2.0, %v4644
      %v4709 = vmul.f32 %v4517, %v4645
      %v4710 = vmul.f32 %v4518, %v4646
      %v4711 = vmul.f32 %v4519, %v4647
      %v4712 = vmul.f32 %v4520, %v4648
      %v4713 = vmul.f32 %v4521, %v4649
      %v4714 = vmul.f32 %v4522, %v4650
      %v4715 = vmul.f32 %v4523, %v4651
      %v4716 = vmul.f32 %v4524, %v4652
      %v4717 = vmul.f32 %v4525, %v4653
      %v4718 = vmul.f32 %v4526, %v4654
      %v4719 = vmul.f32 %v4527, %v4655
      %v4720 = vmul.f32 %v4528, %v4656
      %v4721 = vmul.f32 %v4529, %v4657
      %v4722 = vmul.f32 %v4530, %v4658
      %v4723 = vmul.f32 %v4531, %v4659
      %v4724 = vmul.f32 %v4532, %v4660
      %v4725 = vmul.f32 %v4533, %v4661
      %v4726 = vmul.f32 %v4534, %v4662
      %v4727 = vmul.f32 %v4535, %v4663
      %v4728 = vmul.f32 %v4536, %v4664
      %v4729 = vmul.f32 %v4537, %v4665
      %v4730 = vmul.f32 %v4538, %v4666
      %v4731 = vmul.f32 %v4539, %v4667
      %v4732 = vmul.f32 %v4540, %v4668
      %v4733 = vmul.f32 %v4541, %v4669
      %v4734 = vmul.f32 %v4542, %v4670
      %v4735 = vmul.f32 %v4543, %v4671
      %v4736 = vmul.f32 %v4544, %v4672
      %v4737 = vmul.f32 %v4545, %v4673
      %v4738 = vmul.f32 %v4546, %v4674
      %v4739 = vmul.f32 %v4547, %v4675
      %v4740 = vmul.f32 %v4548, %v4676
      %v4741 = vmul.f32 %v4549, %v4677
      %v4742 = vmul.f32 %v4550, %v4678
      %v4743 = vmul.f32 %v4551, %v4679
      %v4744 = vmul.f32 %v4552, %v4680
      %v4745 = vmul.f32 %v4553, %v4681
      %v4746 = vmul.f32 %v4554, %v4682
      %v4747 = vmul.f32 %v4555, %v4683
      %v4748 = vmul.f32 %v4556, %v4684
      %v4749 = vmul.f32 %v4557, %v4685
      %v4750 = vmul.f32 %v4558, %v4686
      %v4751 = vmul.f32 %v4559, %v4687
      %v4752 = vmul.f32 %v4560, %v4688
      %v4753 = vmul.f32 %v4561, %v4689
      %v4754 = vmul.f32 %v4562, %v4690
      %v4755 = vmul.f32 %v4563, %v4691
      %v4756 = vmul.f32 %v4564, %v4692
      %v4757 = vmul.f32 %v4565, %v4693
      %v4758 = vmul.f32 %v4566, %v4694
      %v4759 = vmul.f32 %v4567, %v4695
      %v4760 = vmul.f32 %v4568, %v4696
      %v4761 = vmul.f32 %v4569, %v4697
      %v4762 = vmul.f32 %v4570, %v4698
      %v4763 = vmul.f32 %v4571, %v4699
      %v4764 = vmul.f32 %v4572, %v4700
      %v4765 = vmul.f32 %v4573, %v4701
      %v4766 = vmul.f32 %v4574, %v4702
      %v4767 = vmul.f32 %v4575, %v4703
      %v4768 = vmul.f32 %v4576, %v4704
      %v4769 = vmul.f32 %v4577, %v4705
      %v4770 = vmul.f32 %v4578, %v4706
      %v4771 = vmul.f32 %v4579, %v4707
      %v4772 = vmul.f32 %v4580, %v4708
      %v4773 = vmul.f32 %v3576, %v4709
      %v4774 = vmul.f32 %v3581, %v4710
      %v4775 = vmul.f32 %v3586, %v4711
      %v4776 = vmul.f32 %v3591, %v4712
      %v4777 = vmul.f32 %v3596, %v4713
      %v4778 = vmul.f32 %v3601, %v4714
      %v4779 = vmul.f32 %v3606, %v4715
      %v4780 = vmul.f32 %v3611, %v4716
      %v4781 = vmul.f32 %v3705, %v4717
      %v4782 = vmul.f32 %v3710, %v4718
      %v4783 = vmul.f32 %v3715, %v4719
      %v4784 = vmul.f32 %v3720, %v4720
      %v4785 = vmul.f32 %v3725, %v4721
      %v4786 = vmul.f32 %v3730, %v4722
      %v4787 = vmul.f32 %v3735, %v4723
      %v4788 = vmul.f32 %v3740, %v4724
      %v4789 = vmul.f32 %v3834, %v4725
      %v4790 = vmul.f32 %v3839, %v4726
      %v4791 = vmul.f32 %v3844, %v4727
      %v4792 = vmul.f32 %v3849, %v4728
      %v4793 = vmul.f32 %v3854, %v4729
      %v4794 = vmul.f32 %v3859, %v4730
      %v4795 = vmul.f32 %v3864, %v4731
      %v4796 = vmul.f32 %v3869, %v4732
      %v4797 = vmul.f32 %v3963, %v4733
      %v4798 = vmul.f32 %v3968, %v4734
      %v4799 = vmul.f32 %v3973, %v4735
      %v4800 = vmul.f32 %v3978, %v4736
      %v4801 = vmul.f32 %v3983, %v4737
      %v4802 = vmul.f32 %v3988, %v4738
      %v4803 = vmul.f32 %v3993, %v4739
      %v4804 = vmul.f32 %v3998, %v4740
      %v4805 = vmul.f32 %v4092, %v4741
      %v4806 = vmul.f32 %v4097, %v4742
      %v4807 = vmul.f32 %v4102, %v4743
      %v4808 = vmul.f32 %v4107, %v4744
      %v4809 = vmul.f32 %v4112, %v4745
      %v4810 = vmul.f32 %v4117, %v4746
      %v4811 = vmul.f32 %v4122, %v4747
      %v4812 = vmul.f32 %v4127, %v4748
      %v4813 = vmul.f32 %v4221, %v4749
      %v4814 = vmul.f32 %v4226, %v4750
      %v4815 = vmul.f32 %v4231, %v4751
      %v4816 = vmul.f32 %v4236, %v4752
      %v4817 = vmul.f32 %v4241, %v4753
      %v4818 = vmul.f32 %v4246, %v4754
      %v4819 = vmul.f32 %v4251, %v4755
      %v4820 = vmul.f32 %v4256, %v4756
      %v4821 = vmul.f32 %v4350, %v4757
      %v4822 = vmul.f32 %v4355, %v4758
      %v4823 = vmul.f32 %v4360, %v4759
      %v4824 = vmul.f32 %v4365, %v4760
      %v4825 = vmul.f32 %v4370, %v4761
      %v4826 = vmul.f32 %v4375, %v4762
      %v4827 = vmul.f32 %v4380, %v4763
      %v4828 = vmul.f32 %v4385, %v4764
      %v4829 = vmul.f32 %v4479, %v4765
      %v4830 = vmul.f32 %v4484, %v4766
      %v4831 = vmul.f32 %v4489, %v4767
      %v4832 = vmul.f32 %v4494, %v4768
      %v4833 = vmul.f32 %v4499, %v4769
      %v4834 = vmul.f32 %v4504, %v4770
      %v4835 = vmul.f32 %v4509, %v4771
      %v4836 = vmul.f32 %v4514, %v4772
      %v4837 = vld [vmem:[%s4] sm:$0xff]
      %v4838 = vld [vmem:[%s4 + $0x8] sm:$0xff]
      %v4839 = vld [vmem:[%s4 + $0x10] sm:$0xff]
      %v4840 = vld [vmem:[%s4 + $0x18] sm:$0xff]
      %v4841 = vld [vmem:[%s5] sm:$0x1]
      %v4843 = vlaneseq
      %v4844 = vshrl.u32 %v4843, 7
      %v4845 = vsub.s32 0, %v4844
      %v4846 = vrot.slane %v4841, %v4845
      %v4849 = vsel %vm328, %v4773, 0
      %v4852 = vsel %vm328, %v4774, 0
      %v4855 = vsel %vm328, %v4775, 0
      %v4858 = vsel %vm328, %v4776, 0
      %v4861 = vsel %vm328, %v4777, 0
      %v4864 = vsel %vm328, %v4778, 0
      %v4867 = vsel %vm328, %v4779, 0
      %v4870 = vsel %vm328, %v4780, 0
      %v4873 = vsel %vm328, %v4781, 0
      %v4876 = vsel %vm328, %v4782, 0
      %v4879 = vsel %vm328, %v4783, 0
      %v4882 = vsel %vm328, %v4784, 0
      %v4885 = vsel %vm328, %v4785, 0
      %v4888 = vsel %vm328, %v4786, 0
      %v4891 = vsel %vm328, %v4787, 0
      %v4894 = vsel %vm328, %v4788, 0
      %v4897 = vsel %vm328, %v4789, 0
      %v4900 = vsel %vm328, %v4790, 0
      %v4903 = vsel %vm328, %v4791, 0
      %v4906 = vsel %vm328, %v4792, 0
      %v4909 = vsel %vm328, %v4793, 0
      %v4912 = vsel %vm328, %v4794, 0
      %v4915 = vsel %vm328, %v4795, 0
      %v4918 = vsel %vm328, %v4796, 0
      %v4921 = vsel %vm328, %v4797, 0
      %v4924 = vsel %vm328, %v4798, 0
      %v4927 = vsel %vm328, %v4799, 0
      %v4930 = vsel %vm328, %v4800, 0
      %v4933 = vsel %vm328, %v4801, 0
      %v4936 = vsel %vm328, %v4802, 0
      %v4939 = vsel %vm328, %v4803, 0
      %v4942 = vsel %vm328, %v4804, 0
      %v4945 = vsel %vm328, %v4805, 0
      %v4948 = vsel %vm328, %v4806, 0
      %v4951 = vsel %vm328, %v4807, 0
      %v4954 = vsel %vm328, %v4808, 0
      %v4957 = vsel %vm328, %v4809, 0
      %v4960 = vsel %vm328, %v4810, 0
      %v4963 = vsel %vm328, %v4811, 0
      %v4966 = vsel %vm328, %v4812, 0
      %v4969 = vsel %vm328, %v4813, 0
      %v4972 = vsel %vm328, %v4814, 0
      %v4975 = vsel %vm328, %v4815, 0
      %v4978 = vsel %vm328, %v4816, 0
      %v4981 = vsel %vm328, %v4817, 0
      %v4984 = vsel %vm328, %v4818, 0
      %v4987 = vsel %vm328, %v4819, 0
      %v4990 = vsel %vm328, %v4820, 0
      %v4993 = vsel %vm328, %v4821, 0
      %v4996 = vsel %vm328, %v4822, 0
      %v4999 = vsel %vm328, %v4823, 0
      %v5002 = vsel %vm328, %v4824, 0
      %v5005 = vsel %vm328, %v4825, 0
      %v5008 = vsel %vm328, %v4826, 0
      %v5011 = vsel %vm328, %v4827, 0
      %v5014 = vsel %vm328, %v4828, 0
      %v5017 = vsel %vm328, %v4829, 0
      %v5020 = vsel %vm328, %v4830, 0
      %v5023 = vsel %vm328, %v4831, 0
      %v5026 = vsel %vm328, %v4832, 0
      %v5029 = vsel %vm328, %v4833, 0
      %v5032 = vsel %vm328, %v4834, 0
      %v5035 = vsel %vm328, %v4835, 0
      %v5038 = vsel %vm328, %v4836, 0
      %5040 = vmatprep.subr.mxu0 0.0
      %5041 = vmatpush1.msra.mxu0 0.0
      %5042 = vmatprep.subr.mxu0 0.0
      %5043 = vmatpush1.msra.mxu0 0.0
      %5044 = vmatprep.subr.mxu0 0.0
      %5045 = vmatpush1.msra.mxu0 0.0
      %5046 = vmatprep.subr.mxu0 0.0
      %5047 = vmatpush1.msra.mxu0 0.0
      %5048 = vmatprep.subr.mxu0 0.0
      %5049 = vmatpush1.msra.mxu0 0.0
      %5050 = vmatprep.subr.mxu0 0.0
      %5051 = vmatpush1.msra.mxu0 0.0
      %5052 = vmatprep.subr.mxu0 0.0
      %5053 = vmatpush1.msra.mxu0 0.0
      %5054 = vmatprep.subr.mxu0 0.0
      %5055 = vmatpush1.msra.mxu0 0.0
      %5056 = vmatprep.subr.mxu0 0.0
      %5057 = vmatpush1.msra.mxu0 0.0
      %5058 = vmatprep.subr.mxu0 0.0
      %5059 = vmatpush1.msra.mxu0 0.0
      %5060 = vmatprep.subr.mxu0 0.0
      %5061 = vmatpush1.msra.mxu0 0.0
      %5062 = vmatprep.subr.mxu0 0.0
      %5063 = vmatpush1.msra.mxu0 0.0
      %5064 = vmatprep.subr.mxu0 0.0
      %5065 = vmatpush1.msra.mxu0 %v4840
      %5066 = vmatprep.subr.mxu0 0.0
      %5067 = vmatpush1.msra.mxu0 %v4839
      %5068 = vmatprep.subr.mxu0 0.0
      %5069 = vmatpush1.msra.mxu0 %v4838
      %5070 = vmatprep.subr.mxu0 0.0
      %5071 = vmatpush1.msra.mxu0 %v4837
      %5072 = vmatprep.subr.mxu0 0.0
      %5073 = vmatpush2.msra.mxu0 0.0
      %5074 = vmatprep.subr.mxu0 0.0
      %5075 = vmatpush2.msra.mxu0 0.0
      %5076 = vmatprep.subr.mxu0 0.0
      %5077 = vmatpush2.msra.mxu0 0.0
      %5078 = vmatprep.subr.mxu0 0.0
      %5079 = vmatpush2.msra.mxu0 0.0
      %5080 = vmatprep.subr.mxu0 0.0
      %5081 = vmatpush2.msra.mxu0 0.0
      %5082 = vmatprep.subr.mxu0 0.0
      %5083 = vmatpush2.msra.mxu0 0.0
      %5084 = vmatprep.subr.mxu0 0.0
      %5085 = vmatpush2.msra.mxu0 0.0
      %5086 = vmatprep.subr.mxu0 0.0
      %5087 = vmatpush2.msra.mxu0 0.0
      %5088 = vmatprep.subr.mxu0 0.0
      %5089 = vmatpush2.msra.mxu0 0.0
      %5090 = vmatprep.subr.mxu0 0.0
      %5091 = vmatpush2.msra.mxu0 0.0
      %5092 = vmatprep.subr.mxu0 0.0
      %5093 = vmatpush2.msra.mxu0 0.0
      %5094 = vmatprep.subr.mxu0 0.0
      %5095 = vmatpush2.msra.mxu0 0.0
      %5096 = vmatprep.subr.mxu0 0.0
      %5097 = vmatpush2.msra.mxu0 0.0
      %5098 = vmatprep.subr.mxu0 0.0
      %5099 = vmatpush2.msra.mxu0 0.0
      %5100 = vmatprep.subr.mxu0 0.0
      %5101 = vmatpush2.msra.mxu0 0.0
      %5102 = vmatprep.subr.mxu0 0.0
      %5103 = vmatpush2.msra.mxu0 0.0
      %5104 = vmatprep.mubr.f32.mxu0 0.0
      %5105 = vmatmul.mubr.f32.gmra.mxu0 %v4849
      %v5106 = vpop.f32.mrf.mxu0
      %v5107 = vadd.f32 %v4846, %v5106
      %v5108 = vpop.f32.mrf.mxu0
      %5109 = vmatprep.mubr.f32.mxu0 0.0
      %5110 = vmatmul.mubr.f32.gmra.mxu0 %v4852
      %v5111 = vpop.f32.mrf.mxu0
      %v5112 = vadd.f32 %v4846, %v5111
      %v5113 = vpop.f32.mrf.mxu0
      %5114 = vmatprep.mubr.f32.mxu0 0.0
      %5115 = vmatmul.mubr.f32.gmra.mxu0 %v4855
      %v5116 = vpop.f32.mrf.mxu0
      %v5117 = vadd.f32 %v4846, %v5116
      %v5118 = vpop.f32.mrf.mxu0
      %5119 = vmatprep.mubr.f32.mxu0 0.0
      %5120 = vmatmul.mubr.f32.gmra.mxu0 %v4858
      %v5121 = vpop.f32.mrf.mxu0
      %v5122 = vadd.f32 %v4846, %v5121
      %v5123 = vpop.f32.mrf.mxu0
      %5124 = vmatprep.mubr.f32.mxu0 0.0
      %5125 = vmatmul.mubr.f32.gmra.mxu0 %v4861
      %v5126 = vpop.f32.mrf.mxu0
      %v5127 = vadd.f32 %v4846, %v5126
      %v5128 = vpop.f32.mrf.mxu0
      %5129 = vmatprep.mubr.f32.mxu0 0.0
      %5130 = vmatmul.mubr.f32.gmra.mxu0 %v4864
      %v5131 = vpop.f32.mrf.mxu0
      %v5132 = vadd.f32 %v4846, %v5131
      %v5133 = vpop.f32.mrf.mxu0
      %5134 = vmatprep.mubr.f32.mxu0 0.0
      %5135 = vmatmul.mubr.f32.gmra.mxu0 %v4867
      %v5136 = vpop.f32.mrf.mxu0
      %v5137 = vadd.f32 %v4846, %v5136
      %v5138 = vpop.f32.mrf.mxu0
      %5139 = vmatprep.mubr.f32.mxu0 0.0
      %5140 = vmatmul.mubr.f32.gmra.mxu0 %v4870
      %v5141 = vpop.f32.mrf.mxu0
      %v5142 = vadd.f32 %v4846, %v5141
      %v5143 = vpop.f32.mrf.mxu0
      %5144 = vmatprep.mubr.f32.mxu0 0.0
      %5145 = vmatmul.mubr.f32.gmra.mxu0 %v4873
      %v5146 = vpop.f32.mrf.mxu0
      %v5147 = vadd.f32 %v4846, %v5146
      %v5148 = vpop.f32.mrf.mxu0
      %5149 = vmatprep.mubr.f32.mxu0 0.0
      %5150 = vmatmul.mubr.f32.gmra.mxu0 %v4876
      %v5151 = vpop.f32.mrf.mxu0
      %v5152 = vadd.f32 %v4846, %v5151
      %v5153 = vpop.f32.mrf.mxu0
      %5154 = vmatprep.mubr.f32.mxu0 0.0
      %5155 = vmatmul.mubr.f32.gmra.mxu0 %v4879
      %v5156 = vpop.f32.mrf.mxu0
      %v5157 = vadd.f32 %v4846, %v5156
      %v5158 = vpop.f32.mrf.mxu0
      %5159 = vmatprep.mubr.f32.mxu0 0.0
      %5160 = vmatmul.mubr.f32.gmra.mxu0 %v4882
      %v5161 = vpop.f32.mrf.mxu0
      %v5162 = vadd.f32 %v4846, %v5161
      %v5163 = vpop.f32.mrf.mxu0
      %5164 = vmatprep.mubr.f32.mxu0 0.0
      %5165 = vmatmul.mubr.f32.gmra.mxu0 %v4885
      %v5166 = vpop.f32.mrf.mxu0
      %v5167 = vadd.f32 %v4846, %v5166
      %v5168 = vpop.f32.mrf.mxu0
      %5169 = vmatprep.mubr.f32.mxu0 0.0
      %5170 = vmatmul.mubr.f32.gmra.mxu0 %v4888
      %v5171 = vpop.f32.mrf.mxu0
      %v5172 = vadd.f32 %v4846, %v5171
      %v5173 = vpop.f32.mrf.mxu0
      %5174 = vmatprep.mubr.f32.mxu0 0.0
      %5175 = vmatmul.mubr.f32.gmra.mxu0 %v4891
      %v5176 = vpop.f32.mrf.mxu0
      %v5177 = vadd.f32 %v4846, %v5176
      %v5178 = vpop.f32.mrf.mxu0
      %5179 = vmatprep.mubr.f32.mxu0 0.0
      %5180 = vmatmul.mubr.f32.gmra.mxu0 %v4894
      %v5181 = vpop.f32.mrf.mxu0
      %v5182 = vadd.f32 %v4846, %v5181
      %v5183 = vpop.f32.mrf.mxu0
      %5184 = vmatprep.mubr.f32.mxu0 0.0
      %5185 = vmatmul.mubr.f32.gmra.mxu0 %v4897
      %v5186 = vpop.f32.mrf.mxu0
      %v5187 = vadd.f32 %v4846, %v5186
      %v5188 = vpop.f32.mrf.mxu0
      %5189 = vmatprep.mubr.f32.mxu0 0.0
      %5190 = vmatmul.mubr.f32.gmra.mxu0 %v4900
      %v5191 = vpop.f32.mrf.mxu0
      %v5192 = vadd.f32 %v4846, %v5191
      %v5193 = vpop.f32.mrf.mxu0
      %5194 = vmatprep.mubr.f32.mxu0 0.0
      %5195 = vmatmul.mubr.f32.gmra.mxu0 %v4903
      %v5196 = vpop.f32.mrf.mxu0
      %v5197 = vadd.f32 %v4846, %v5196
      %v5198 = vpop.f32.mrf.mxu0
      %5199 = vmatprep.mubr.f32.mxu0 0.0
      %5200 = vmatmul.mubr.f32.gmra.mxu0 %v4906
      %v5201 = vpop.f32.mrf.mxu0
      %v5202 = vadd.f32 %v4846, %v5201
      %v5203 = vpop.f32.mrf.mxu0
      %5204 = vmatprep.mubr.f32.mxu0 0.0
      %5205 = vmatmul.mubr.f32.gmra.mxu0 %v4909
      %v5206 = vpop.f32.mrf.mxu0
      %v5207 = vadd.f32 %v4846, %v5206
      %v5208 = vpop.f32.mrf.mxu0
      %5209 = vmatprep.mubr.f32.mxu0 0.0
      %5210 = vmatmul.mubr.f32.gmra.mxu0 %v4912
      %v5211 = vpop.f32.mrf.mxu0
      %v5212 = vadd.f32 %v4846, %v5211
      %v5213 = vpop.f32.mrf.mxu0
      %5214 = vmatprep.mubr.f32.mxu0 0.0
      %5215 = vmatmul.mubr.f32.gmra.mxu0 %v4915
      %v5216 = vpop.f32.mrf.mxu0
      %v5217 = vadd.f32 %v4846, %v5216
      %v5218 = vpop.f32.mrf.mxu0
      %5219 = vmatprep.mubr.f32.mxu0 0.0
      %5220 = vmatmul.mubr.f32.gmra.mxu0 %v4918
      %v5221 = vpop.f32.mrf.mxu0
      %v5222 = vadd.f32 %v4846, %v5221
      %v5223 = vpop.f32.mrf.mxu0
      %5224 = vmatprep.mubr.f32.mxu0 0.0
      %5225 = vmatmul.mubr.f32.gmra.mxu0 %v4921
      %v5226 = vpop.f32.mrf.mxu0
      %v5227 = vadd.f32 %v4846, %v5226
      %v5228 = vpop.f32.mrf.mxu0
      %5229 = vmatprep.mubr.f32.mxu0 0.0
      %5230 = vmatmul.mubr.f32.gmra.mxu0 %v4924
      %v5231 = vpop.f32.mrf.mxu0
      %v5232 = vadd.f32 %v4846, %v5231
      %v5233 = vpop.f32.mrf.mxu0
      %5234 = vmatprep.mubr.f32.mxu0 0.0
      %5235 = vmatmul.mubr.f32.gmra.mxu0 %v4927
      %v5236 = vpop.f32.mrf.mxu0
      %v5237 = vadd.f32 %v4846, %v5236
      %v5238 = vpop.f32.mrf.mxu0
      %5239 = vmatprep.mubr.f32.mxu0 0.0
      %5240 = vmatmul.mubr.f32.gmra.mxu0 %v4930
      %v5241 = vpop.f32.mrf.mxu0
      %v5242 = vadd.f32 %v4846, %v5241
      %v5243 = vpop.f32.mrf.mxu0
      %5244 = vmatprep.mubr.f32.mxu0 0.0
      %5245 = vmatmul.mubr.f32.gmra.mxu0 %v4933
      %v5246 = vpop.f32.mrf.mxu0
      %v5247 = vadd.f32 %v4846, %v5246
      %v5248 = vpop.f32.mrf.mxu0
      %5249 = vmatprep.mubr.f32.mxu0 0.0
      %5250 = vmatmul.mubr.f32.gmra.mxu0 %v4936
      %v5251 = vpop.f32.mrf.mxu0
      %v5252 = vadd.f32 %v4846, %v5251
      %v5253 = vpop.f32.mrf.mxu0
      %5254 = vmatprep.mubr.f32.mxu0 0.0
      %5255 = vmatmul.mubr.f32.gmra.mxu0 %v4939
      %v5256 = vpop.f32.mrf.mxu0
      %v5257 = vadd.f32 %v4846, %v5256
      %v5258 = vpop.f32.mrf.mxu0
      %5259 = vmatprep.mubr.f32.mxu0 0.0
      %5260 = vmatmul.mubr.f32.gmra.mxu0 %v4942
      %v5261 = vpop.f32.mrf.mxu0
      %v5262 = vadd.f32 %v4846, %v5261
      %v5263 = vpop.f32.mrf.mxu0
      %5264 = vmatprep.mubr.f32.mxu0 0.0
      %5265 = vmatmul.mubr.f32.gmra.mxu0 %v4945
      %v5266 = vpop.f32.mrf.mxu0
      %v5267 = vadd.f32 %v4846, %v5266
      %v5268 = vpop.f32.mrf.mxu0
      %5269 = vmatprep.mubr.f32.mxu0 0.0
      %5270 = vmatmul.mubr.f32.gmra.mxu0 %v4948
      %v5271 = vpop.f32.mrf.mxu0
      %v5272 = vadd.f32 %v4846, %v5271
      %v5273 = vpop.f32.mrf.mxu0
      %5274 = vmatprep.mubr.f32.mxu0 0.0
      %5275 = vmatmul.mubr.f32.gmra.mxu0 %v4951
      %v5276 = vpop.f32.mrf.mxu0
      %v5277 = vadd.f32 %v4846, %v5276
      %v5278 = vpop.f32.mrf.mxu0
      %5279 = vmatprep.mubr.f32.mxu0 0.0
      %5280 = vmatmul.mubr.f32.gmra.mxu0 %v4954
      %v5281 = vpop.f32.mrf.mxu0
      %v5282 = vadd.f32 %v4846, %v5281
      %v5283 = vpop.f32.mrf.mxu0
      %5284 = vmatprep.mubr.f32.mxu0 0.0
      %5285 = vmatmul.mubr.f32.gmra.mxu0 %v4957
      %v5286 = vpop.f32.mrf.mxu0
      %v5287 = vadd.f32 %v4846, %v5286
      %v5288 = vpop.f32.mrf.mxu0
      %5289 = vmatprep.mubr.f32.mxu0 0.0
      %5290 = vmatmul.mubr.f32.gmra.mxu0 %v4960
      %v5291 = vpop.f32.mrf.mxu0
      %v5292 = vadd.f32 %v4846, %v5291
      %v5293 = vpop.f32.mrf.mxu0
      %5294 = vmatprep.mubr.f32.mxu0 0.0
      %5295 = vmatmul.mubr.f32.gmra.mxu0 %v4963
      %v5296 = vpop.f32.mrf.mxu0
      %v5297 = vadd.f32 %v4846, %v5296
      %v5298 = vpop.f32.mrf.mxu0
      %5299 = vmatprep.mubr.f32.mxu0 0.0
      %5300 = vmatmul.mubr.f32.gmra.mxu0 %v4966
      %v5301 = vpop.f32.mrf.mxu0
      %v5302 = vadd.f32 %v4846, %v5301
      %v5303 = vpop.f32.mrf.mxu0
      %5304 = vmatprep.mubr.f32.mxu0 0.0
      %5305 = vmatmul.mubr.f32.gmra.mxu0 %v4969
      %v5306 = vpop.f32.mrf.mxu0
      %v5307 = vadd.f32 %v4846, %v5306
      %v5308 = vpop.f32.mrf.mxu0
      %5309 = vmatprep.mubr.f32.mxu0 0.0
      %5310 = vmatmul.mubr.f32.gmra.mxu0 %v4972
      %v5311 = vpop.f32.mrf.mxu0
      %v5312 = vadd.f32 %v4846, %v5311
      %v5313 = vpop.f32.mrf.mxu0
      %5314 = vmatprep.mubr.f32.mxu0 0.0
      %5315 = vmatmul.mubr.f32.gmra.mxu0 %v4975
      %v5316 = vpop.f32.mrf.mxu0
      %v5317 = vadd.f32 %v4846, %v5316
      %v5318 = vpop.f32.mrf.mxu0
      %5319 = vmatprep.mubr.f32.mxu0 0.0
      %5320 = vmatmul.mubr.f32.gmra.mxu0 %v4978
      %v5321 = vpop.f32.mrf.mxu0
      %v5322 = vadd.f32 %v4846, %v5321
      %v5323 = vpop.f32.mrf.mxu0
      %5324 = vmatprep.mubr.f32.mxu0 0.0
      %5325 = vmatmul.mubr.f32.gmra.mxu0 %v4981
      %v5326 = vpop.f32.mrf.mxu0
      %v5327 = vadd.f32 %v4846, %v5326
      %v5328 = vpop.f32.mrf.mxu0
      %5329 = vmatprep.mubr.f32.mxu0 0.0
      %5330 = vmatmul.mubr.f32.gmra.mxu0 %v4984
      %v5331 = vpop.f32.mrf.mxu0
      %v5332 = vadd.f32 %v4846, %v5331
      %v5333 = vpop.f32.mrf.mxu0
      %5334 = vmatprep.mubr.f32.mxu0 0.0
      %5335 = vmatmul.mubr.f32.gmra.mxu0 %v4987
      %v5336 = vpop.f32.mrf.mxu0
      %v5337 = vadd.f32 %v4846, %v5336
      %v5338 = vpop.f32.mrf.mxu0
      %5339 = vmatprep.mubr.f32.mxu0 0.0
      %5340 = vmatmul.mubr.f32.gmra.mxu0 %v4990
      %v5341 = vpop.f32.mrf.mxu0
      %v5342 = vadd.f32 %v4846, %v5341
      %v5343 = vpop.f32.mrf.mxu0
      %5344 = vmatprep.mubr.f32.mxu0 0.0
      %5345 = vmatmul.mubr.f32.gmra.mxu0 %v4993
      %v5346 = vpop.f32.mrf.mxu0
      %v5347 = vadd.f32 %v4846, %v5346
      %v5348 = vpop.f32.mrf.mxu0
      %5349 = vmatprep.mubr.f32.mxu0 0.0
      %5350 = vmatmul.mubr.f32.gmra.mxu0 %v4996
      %v5351 = vpop.f32.mrf.mxu0
      %v5352 = vadd.f32 %v4846, %v5351
      %v5353 = vpop.f32.mrf.mxu0
      %5354 = vmatprep.mubr.f32.mxu0 0.0
      %5355 = vmatmul.mubr.f32.gmra.mxu0 %v4999
      %v5356 = vpop.f32.mrf.mxu0
      %v5357 = vadd.f32 %v4846, %v5356
      %v5358 = vpop.f32.mrf.mxu0
      %5359 = vmatprep.mubr.f32.mxu0 0.0
      %5360 = vmatmul.mubr.f32.gmra.mxu0 %v5002
      %v5361 = vpop.f32.mrf.mxu0
      %v5362 = vadd.f32 %v4846, %v5361
      %v5363 = vpop.f32.mrf.mxu0
      %5364 = vmatprep.mubr.f32.mxu0 0.0
      %5365 = vmatmul.mubr.f32.gmra.mxu0 %v5005
      %v5366 = vpop.f32.mrf.mxu0
      %v5367 = vadd.f32 %v4846, %v5366
      %v5368 = vpop.f32.mrf.mxu0
      %5369 = vmatprep.mubr.f32.mxu0 0.0
      %5370 = vmatmul.mubr.f32.gmra.mxu0 %v5008
      %v5371 = vpop.f32.mrf.mxu0
      %v5372 = vadd.f32 %v4846, %v5371
      %v5373 = vpop.f32.mrf.mxu0
      %5374 = vmatprep.mubr.f32.mxu0 0.0
      %5375 = vmatmul.mubr.f32.gmra.mxu0 %v5011
      %v5376 = vpop.f32.mrf.mxu0
      %v5377 = vadd.f32 %v4846, %v5376
      %v5378 = vpop.f32.mrf.mxu0
      %5379 = vmatprep.mubr.f32.mxu0 0.0
      %5380 = vmatmul.mubr.f32.gmra.mxu0 %v5014
      %v5381 = vpop.f32.mrf.mxu0
      %v5382 = vadd.f32 %v4846, %v5381
      %v5383 = vpop.f32.mrf.mxu0
      %5384 = vmatprep.mubr.f32.mxu0 0.0
      %5385 = vmatmul.mubr.f32.gmra.mxu0 %v5017
      %v5386 = vpop.f32.mrf.mxu0
      %v5387 = vadd.f32 %v4846, %v5386
      %v5388 = vpop.f32.mrf.mxu0
      %5389 = vmatprep.mubr.f32.mxu0 0.0
      %5390 = vmatmul.mubr.f32.gmra.mxu0 %v5020
      %v5391 = vpop.f32.mrf.mxu0
      %v5392 = vadd.f32 %v4846, %v5391
      %v5393 = vpop.f32.mrf.mxu0
      %5394 = vmatprep.mubr.f32.mxu0 0.0
      %5395 = vmatmul.mubr.f32.gmra.mxu0 %v5023
      %v5396 = vpop.f32.mrf.mxu0
      %v5397 = vadd.f32 %v4846, %v5396
      %v5398 = vpop.f32.mrf.mxu0
      %5399 = vmatprep.mubr.f32.mxu0 0.0
      %5400 = vmatmul.mubr.f32.gmra.mxu0 %v5026
      %v5401 = vpop.f32.mrf.mxu0
      %v5402 = vadd.f32 %v4846, %v5401
      %v5403 = vpop.f32.mrf.mxu0
      %5404 = vmatprep.mubr.f32.mxu0 0.0
      %5405 = vmatmul.mubr.f32.gmra.mxu0 %v5029
      %v5406 = vpop.f32.mrf.mxu0
      %v5407 = vadd.f32 %v4846, %v5406
      %v5408 = vpop.f32.mrf.mxu0
      %5409 = vmatprep.mubr.f32.mxu0 0.0
      %5410 = vmatmul.mubr.f32.gmra.mxu0 %v5032
      %v5411 = vpop.f32.mrf.mxu0
      %v5412 = vadd.f32 %v4846, %v5411
      %v5413 = vpop.f32.mrf.mxu0
      %5414 = vmatprep.mubr.f32.mxu0 0.0
      %5415 = vmatmul.mubr.f32.gmra.mxu0 %v5035
      %v5416 = vpop.f32.mrf.mxu0
      %v5417 = vadd.f32 %v4846, %v5416
      %v5418 = vpop.f32.mrf.mxu0
      %5419 = vmatprep.mubr.f32.mxu0 0.0
      %5420 = vmatmul.mubr.f32.gmra.mxu0 %v5038
      %v5421 = vpop.f32.mrf.mxu0
      %v5422 = vadd.f32 %v4846, %v5421
      %v5423 = vpop.f32.mrf.mxu0
      %5424 = vdwg.mxu0
      %5425 = vst.msk [vmem:[%s258] sm:$0xff] %vm328, %v5107
      %5426 = vst.msk [vmem:[%s258 + $0x8] sm:$0xff] %vm328, %v5112
      %5427 = vst.msk [vmem:[%s258 + $0x10] sm:$0xff] %vm328, %v5117
      %5428 = vst.msk [vmem:[%s258 + $0x18] sm:$0xff] %vm328, %v5122
      %5429 = vst.msk [vmem:[%s258 + $0x20] sm:$0xff] %vm328, %v5127
      %5430 = vst.msk [vmem:[%s258 + $0x28] sm:$0xff] %vm328, %v5132
      %5431 = vst.msk [vmem:[%s258 + $0x30] sm:$0xff] %vm328, %v5137
      %5432 = vst.msk [vmem:[%s258 + $0x38] sm:$0xff] %vm328, %v5142
      %5433 = vst.msk [vmem:[%s258 + $0x40] sm:$0xff] %vm328, %v5147
      %5434 = vst.msk [vmem:[%s258 + $0x48] sm:$0xff] %vm328, %v5152
      %5435 = vst.msk [vmem:[%s258 + $0x50] sm:$0xff] %vm328, %v5157
      %5436 = vst.msk [vmem:[%s258 + $0x58] sm:$0xff] %vm328, %v5162
      %5437 = vst.msk [vmem:[%s258 + $0x60] sm:$0xff] %vm328, %v5167
      %5438 = vst.msk [vmem:[%s258 + $0x68] sm:$0xff] %vm328, %v5172
      %5439 = vst.msk [vmem:[%s258 + $0x70] sm:$0xff] %vm328, %v5177
      %5440 = vst.msk [vmem:[%s258 + $0x78] sm:$0xff] %vm328, %v5182
      %5441 = vst.msk [vmem:[%s258 + $0x80] sm:$0xff] %vm328, %v5187
      %5442 = vst.msk [vmem:[%s258 + $0x88] sm:$0xff] %vm328, %v5192
      %5443 = vst.msk [vmem:[%s258 + $0x90] sm:$0xff] %vm328, %v5197
      %5444 = vst.msk [vmem:[%s258 + $0x98] sm:$0xff] %vm328, %v5202
      %5445 = vst.msk [vmem:[%s258 + $0xa0] sm:$0xff] %vm328, %v5207
      %5446 = vst.msk [vmem:[%s258 + $0xa8] sm:$0xff] %vm328, %v5212
      %5447 = vst.msk [vmem:[%s258 + $0xb0] sm:$0xff] %vm328, %v5217
      %5448 = vst.msk [vmem:[%s258 + $0xb8] sm:$0xff] %vm328, %v5222
      %5449 = vst.msk [vmem:[%s258 + $0xc0] sm:$0xff] %vm328, %v5227
      %5450 = vst.msk [vmem:[%s258 + $0xc8] sm:$0xff] %vm328, %v5232
      %5451 = vst.msk [vmem:[%s258 + $0xd0] sm:$0xff] %vm328, %v5237
      %5452 = vst.msk [vmem:[%s258 + $0xd8] sm:$0xff] %vm328, %v5242
      %5453 = vst.msk [vmem:[%s258 + $0xe0] sm:$0xff] %vm328, %v5247
      %5454 = vst.msk [vmem:[%s258 + $0xe8] sm:$0xff] %vm328, %v5252
      %5455 = vst.msk [vmem:[%s258 + $0xf0] sm:$0xff] %vm328, %v5257
      %5456 = vst.msk [vmem:[%s258 + $0xf8] sm:$0xff] %vm328, %v5262
      %5457 = vst.msk [vmem:[%s258 + $0x100] sm:$0xff] %vm328, %v5267
      %5458 = vst.msk [vmem:[%s258 + $0x108] sm:$0xff] %vm328, %v5272
      %5459 = vst.msk [vmem:[%s258 + $0x110] sm:$0xff] %vm328, %v5277
      %5460 = vst.msk [vmem:[%s258 + $0x118] sm:$0xff] %vm328, %v5282
      %5461 = vst.msk [vmem:[%s258 + $0x120] sm:$0xff] %vm328, %v5287
      %5462 = vst.msk [vmem:[%s258 + $0x128] sm:$0xff] %vm328, %v5292
      %5463 = vst.msk [vmem:[%s258 + $0x130] sm:$0xff] %vm328, %v5297
      %5464 = vst.msk [vmem:[%s258 + $0x138] sm:$0xff] %vm328, %v5302
      %5465 = vst.msk [vmem:[%s258 + $0x140] sm:$0xff] %vm328, %v5307
      %5466 = vst.msk [vmem:[%s258 + $0x148] sm:$0xff] %vm328, %v5312
      %5467 = vst.msk [vmem:[%s258 + $0x150] sm:$0xff] %vm328, %v5317
      %5468 = vst.msk [vmem:[%s258 + $0x158] sm:$0xff] %vm328, %v5322
      %5469 = vst.msk [vmem:[%s258 + $0x160] sm:$0xff] %vm328, %v5327
      %5470 = vst.msk [vmem:[%s258 + $0x168] sm:$0xff] %vm328, %v5332
      %5471 = vst.msk [vmem:[%s258 + $0x170] sm:$0xff] %vm328, %v5337
      %5472 = vst.msk [vmem:[%s258 + $0x178] sm:$0xff] %vm328, %v5342
      %5473 = vst.msk [vmem:[%s258 + $0x180] sm:$0xff] %vm328, %v5347
      %5474 = vst.msk [vmem:[%s258 + $0x188] sm:$0xff] %vm328, %v5352
      %5475 = vst.msk [vmem:[%s258 + $0x190] sm:$0xff] %vm328, %v5357
      %5476 = vst.msk [vmem:[%s258 + $0x198] sm:$0xff] %vm328, %v5362
      %5477 = vst.msk [vmem:[%s258 + $0x1a0] sm:$0xff] %vm328, %v5367
      %5478 = vst.msk [vmem:[%s258 + $0x1a8] sm:$0xff] %vm328, %v5372
      %5479 = vst.msk [vmem:[%s258 + $0x1b0] sm:$0xff] %vm328, %v5377
      %5480 = vst.msk [vmem:[%s258 + $0x1b8] sm:$0xff] %vm328, %v5382
      %5481 = vst.msk [vmem:[%s258 + $0x1c0] sm:$0xff] %vm328, %v5387
      %5482 = vst.msk [vmem:[%s258 + $0x1c8] sm:$0xff] %vm328, %v5392
      %5483 = vst.msk [vmem:[%s258 + $0x1d0] sm:$0xff] %vm328, %v5397
      %5484 = vst.msk [vmem:[%s258 + $0x1d8] sm:$0xff] %vm328, %v5402
      %5485 = vst.msk [vmem:[%s258 + $0x1e0] sm:$0xff] %vm328, %v5407
      %5486 = vst.msk [vmem:[%s258 + $0x1e8] sm:$0xff] %vm328, %v5412
      %5487 = vst.msk [vmem:[%s258 + $0x1f0] sm:$0xff] %vm328, %v5417
      %5488 = vst.msk [vmem:[%s258 + $0x1f8] sm:$0xff] %vm328, %v5422
      %s5489 = smul.u32 8, %s17
      %p5490 = scmp.lt.s32.totalorder %s5489, 15
      %s5491 = scalar_select %p5490, %s5489, 15
      %s5492 = smul.addr %s5491, 8
      %s5493 = smul.addr %s5492, 8
      %s5494 = scalar_lea.vmem %s6, %s5493
      // Predicated region
      $region45: #{tpu_custom_call.1} parent=43 // pred_check
        %p5495 = pneg %p166
      $region46: #{tpu_custom_call.1} parent=43 // pred_check_branch
        %5497 = sbr.rel (%p5495) target = $region48
      $region47: #{tpu_custom_call.1} parent=43 // pred_region
        %s5498 = smul.u32 8, %s17
      $region48: #{tpu_custom_call.1} parent=43 // pred_fallthru
        _
    $region44: #{tpu_custom_call.1} parent=5 // pred_fallthru
      _
    %p5499 = scmp.le.s32.totalorder 2, %s12
    // Predicated region
    $region49: #{tpu_custom_call.1} parent=5 // pred_check
      %p5500 = pneg %p5499
    $region50: #{tpu_custom_call.1} parent=5 // pred_check_branch
      %5502 = sbr.rel (%p5500) target = $region52
    $region51: #{tpu_custom_call.1} parent=5 // pred_region
      %s5503 = ssub.s32 %s12, 2
      // Predicated region
      $region53: #{tpu_custom_call.1} parent=51 // pred_check
        %p5504 = pneg %p172
      $region54: #{tpu_custom_call.1} parent=51 // pred_check_branch
        %5506 = sbr.rel (%p5504) target = $region56
      $region55: #{tpu_custom_call.1} parent=51 // pred_region
        %s5507 = smul.u32 8, %s18
        %p5508 = scmp.lt.s32.totalorder %s5507, 15
        %s5509 = scalar_select %p5508, %s5507, 15
        %s5510 = smul.addr %s5509, 8
        %s5511 = smul.addr %s5510, 8
        %s5512 = scalar_lea.vmem %s6, %s5511
      $region56: #{tpu_custom_call.1} parent=51 // pred_fallthru
        _
    $region52: #{tpu_custom_call.1} parent=5 // pred_fallthru
      _
  $region6: #{tpu_custom_call.1} parent=0 // loop_footer
    %s16 = sadd.s32 1, %s12
  $region7: #{tpu_custom_call.1} parent=0 // loop_footer_branch
    %11 = sbr.rel target = $region3
  $region8: #{tpu_custom_call.1} parent=0 // loop_exit
    _

</llo_original>
